<compile_context>
chip_gen: v7x
topology: tpu7x:2x2x1
jax: 0.10.0
libtpu: 0.0.40
codegen_flags: <defaults>
</compile_context>

<pallas_src>
import functools

import jax
import jax.numpy as jnp
from jax.experimental import pallas as pl
from jax.experimental.pallas import tpu as pltpu


def _conv3x3_rows(slab, w_blocks, rows_out, w_out, cin):
    """3x3 'valid' conv over a zero-padded (rows_out+2, w_out+2, cin) bf16 slab.

    Keeps only the (rows_out, w_out+2, 3*cin) dh lane-concat resident and runs three
    accumulating K=3*cin MXU matmuls (one per dw shift) instead of materializing the
    9*cin-wide im2col operand.  w_blocks: (3, 3*cin, cout), per-block row order (dh, cin).
    """
    cout = w_blocks.shape[-1]
    # dh shifts: major-dim slices, then a single whole-vreg lane concat (cin % 128 == 0).
    b = jnp.concatenate([slab[dh:dh + rows_out] for dh in range(3)], axis=-1)
    acc = jnp.dot(b[:, 0:w_out, :].reshape(rows_out * w_out, 3 * cin),
                  w_blocks[0], preferred_element_type=jnp.float32)
    for dw in (1, 2):
        lhs = b[:, dw:dw + w_out, :].reshape(rows_out * w_out, 3 * cin)
        acc = acc + jnp.dot(lhs, w_blocks[dw], preferred_element_type=jnp.float32)
    return acc.reshape(rows_out, w_out, cout)


def _resblock_kernel(xm_ref, xh_ref, w1_ref, w2_ref, sh1_ref, sh2_ref, o_ref, hp_ref,
                     *, th, h_img, w_img, c):
    t = pl.program_id(1)

    # Padded-x slab for this row tile: padded rows [t*th, t*th + th + 4),
    # assembled from the TH-row main block + the 4-row halo block (bf16).
    xs = jnp.concatenate([xm_ref[0], xh_ref[0]], axis=0)            # (th+4, W+2, C)

    # conv1 (BN1 scale pre-folded into weights) over th+2 output rows
    # (one recomputed halo row above/below the tile).
    h = _conv3x3_rows(xs, w1_ref[...], th + 2, w_img, c)            # (th+2, W, C) f32
    h = jnp.maximum(h + sh1_ref[...], 0.0)                          # BN1 shift + ReLU

    # h rows that fall outside the image are conv2's zero padding.
    row = t * th - 1 + jax.lax.broadcasted_iota(jnp.int32, (th + 2, 1, 1), 0)
    h = jnp.where((row >= 0) & (row < h_img), h, 0.0)

    # Re-pad along W in the persistent bf16 VMEM scratch (no zeros-concat copy).
    hp_ref[:, 1:w_img + 1, :] = h.astype(jnp.bfloat16)
    hp_ref[:, 0:1, :] = jnp.zeros((th + 2, 1, c), jnp.bfloat16)
    hp_ref[:, w_img + 1:w_img + 2, :] = jnp.zeros((th + 2, 1, c), jnp.bfloat16)

    # conv2 (BN2 scale pre-folded), shift, residual from the in-VMEM slab, ReLU.
    out = _conv3x3_rows(hp_ref[...], w2_ref[...], th, w_img, c)     # (th, W, C) f32
    out = out + sh2_ref[...]
    out = out + xs[2:2 + th, 1:1 + w_img, :].astype(jnp.float32)    # residual
    o_ref[0] = jnp.maximum(out, 0.0).astype(o_ref.dtype)            # final ReLU


def _vmem_limit_bytes():
    """Generation-aware scoped-VMEM limit (v7x: 64 MiB phys; v5e/v6e: 128 MiB)."""
    try:
        phys = pltpu.get_tpu_info().vmem_capacity_bytes
    except Exception:
        phys = 64 * 1024 * 1024        # conservative: assume v7x per-TC VMEM
    limit = min(int(phys) * 3 // 4, 96 * 1024 * 1024)
    return max(limit, 32 * 1024 * 1024)


def _tile_vmem_bytes(th, w, c):
    """Rough per-tile VMEM working set (bf16 slabs, f32 intermediates, 2x-buffered I/O)."""
    bf2, f4 = 2, 4
    slab = (th + 4) * (w + 2) * c * bf2                 # x slab
    b1 = (th + 2) * (w + 2) * 3 * c * bf2               # conv1 dh-concat
    hf = (th + 2) * w * c * f4                          # conv1 f32 output
    hp = (th + 2) * (w + 2) * c * bf2                   # conv2 scratch
    b2 = th * (w + 2) * 3 * c * bf2                     # conv2 dh-concat
    of = th * w * c * f4                                # conv2 f32 acc
    io = 2 * (th * (w + 2) * c * bf2                    # main in block (x2 buffers)
              + 4 * (w + 2) * c * bf2                   # halo block
              + th * w * c * f4)                        # out block
    wts = 2 * 2 * 9 * c * c * bf2                       # two weight tensors (x2 buffers)
    return slab + b1 + hf + hp + b2 + of + io + wts


def _pick_row_tile(h, w, c, budget):
    """Largest TH (multiple of 4, dividing H) whose working set fits the VMEM budget."""
    cands = [th for th in range(4, h + 1, 4) if h % th == 0]
    if not cands:
        # TODO(synk): support arbitrary H by zero-padding extra rows at the bottom.
        raise NotImplementedError("image height must have a divisor that is a multiple of 4")
    best = cands[0]
    for th in cands:
        if _tile_vmem_bytes(th, w, c) <= budget:
            best = th
    return best


def _fold_bn(gamma, beta, mean, var, eps=1e-5):
    sc = gamma / jnp.sqrt(var + eps)
    return sc, beta - mean * sc


@jax.jit
def resblock_forward(x_nchw, w1_oihw, gamma1, beta1, mean1, var1,
                     w2_oihw, gamma2, beta2, mean2, var2):
    n, c, h, w = x_nchw.shape
    assert w1_oihw.shape == (c, c, 3, 3) and w2_oihw.shape == (c, c, 3, 3), (
        "residual add requires in_ch == out_ch with 3x3 kernels, stride 1")

    cp = ((c + 127) // 128) * 128                    # lane-dense channel padding

    # Fold eval-mode BN into per-channel scale/shift; scale goes into the weights.
    sc1, sh1 = _fold_bn(gamma1, beta1, mean1, var1)
    sc2, sh2 = _fold_bn(gamma2, beta2, mean2, var2)
    sh1p = jnp.pad(sh1.astype(jnp.float32), (0, cp - c)).reshape(1, cp)
    sh2p = jnp.pad(sh2.astype(jnp.float32), (0, cp - c)).reshape(1, cp)

    # Conv weights OIHW -> (dw, dh*cin, cout) blocks, BN scale folded in, bf16, C-padded.
    def _prep_w(w_oihw, sc):
        wb = jnp.transpose(w_oihw, (3, 2, 1, 0)) * sc[None, None, None, :]   # (kw,kh,ci,co)
        wb = jnp.pad(wb, ((0, 0), (0, 0), (0, cp - c), (0, cp - c)))
        return wb.reshape(3, 3 * cp, cp).astype(jnp.bfloat16)

    w1b = _prep_w(w1_oihw, sc1)
    w2b = _prep_w(w2_oihw, sc2)

    # Layout plumbing: NCHW -> NHWC (C on lanes), cast to bf16 FIRST, then a single
    # pad pass: H+2 rows / W+1 col per side of zero halo, channels to cp.
    x_nhwc = jnp.transpose(x_nchw, (0, 2, 3, 1)).astype(jnp.bfloat16)
    x_pad = jnp.pad(x_nhwc, ((0, 0), (2, 2), (1, 1), (0, cp - c)))

    vmem_limit = _vmem_limit_bytes()
    th = _pick_row_tile(h, w, cp, budget=vmem_limit // 2)
    # NOTE(v7x): both grid axes are "parallel"; n * (h // th) should be even so the
    # 2 TensorCores split the work evenly (true for the shapes exercised here).
    grid = (n, h // th)
    kernel = functools.partial(_resblock_kernel, th=th, h_img=h, w_img=w, c=cp)

    flops = 2 * 2 * n * h * w * 9 * cp * cp              # two K=3C x 3 contractions
    bytes_accessed = (x_pad.size * 2 + n * h * w * cp * 4
                      + (w1b.size + w2b.size) * 2 + (sh1p.size + sh2p.size) * 4)

    out_nhwc = pl.pallas_call(
        kernel,
        out_shape=jax.ShapeDtypeStruct((n, h, w, cp), jnp.float32),
        grid_spec=pltpu.PrefetchScalarGridSpec(
            num_scalar_prefetch=0,
            grid=grid,
            in_specs=[
                # main TH-row block of the padded image
                pl.BlockSpec((1, th, w + 2, cp), lambda b, t: (b, t, 0, 0)),
                # 4-row halo block just below the main block (th % 4 == 0)
                pl.BlockSpec((1, 4, w + 2, cp),
                             lambda b, t: (b, (t + 1) * (th // 4), 0, 0)),
                # fused conv weights (BN scale folded) + BN shifts (grid-invariant)
                pl.BlockSpec((3, 3 * cp, cp), lambda b, t: (0, 0, 0)),
                pl.BlockSpec((3, 3 * cp, cp), lambda b, t: (0, 0, 0)),
                pl.BlockSpec((1, cp), lambda b, t: (0, 0)),
                pl.BlockSpec((1, cp), lambda b, t: (0, 0)),
            ],
            out_specs=pl.BlockSpec((1, th, w, cp), lambda b, t: (b, t, 0, 0)),
            scratch_shapes=[pltpu.VMEM((th + 2, w + 2, cp), jnp.bfloat16)],
        ),
        compiler_params=pltpu.CompilerParams(
            dimension_semantics=("parallel", "parallel"),
            vmem_limit_bytes=vmem_limit),
        cost_estimate=pl.CostEstimate(flops=flops, transcendentals=0,
                                      bytes_accessed=bytes_accessed),
    )(x_pad, x_pad, w1b, w2b, sh1p, sh2p)

    # Slice padded channels off and return NCHW f32 for spec parity with the module.
    return jnp.transpose(out_nhwc[..., :c], (0, 3, 1, 2))


def _reference_nchw(x, w1, g1, b1, m1, v1, w2, g2, b2, m2, v2):
    """Plain-JAX reference of the PyTorch forward (eval-mode BN), NCHW.

    Mirrors the kernel's precision policy: BN scale folded into bf16 conv weights,
    bf16 conv operands with f32 accumulation, f32 shift / ReLU, bf16-rounded residual.
    """
    c = x.shape[1]
    sc1, sh1 = _fold_bn(g1, b1, m1, v1)
    sc2, sh2 = _fold_bn(g2, b2, m2, v2)
    w1s = (w1 * sc1[:, None, None, None]).astype(jnp.bfloat16)
    w2s = (w2 * sc2[:, None, None, None]).astype(jnp.bfloat16)

    def conv(a, wgt):
        return jax.lax.conv_general_dilated(
            a, wgt, (1, 1), "SAME",
            dimension_numbers=("NCHW", "OIHW", "NCHW"),
            preferred_element_type=jnp.float32)

    xb = x.astype(jnp.bfloat16)
    y = conv(xb, w1s) + sh1.reshape(1, c, 1, 1)
    y = jnp.maximum(y, 0.0)
    y = conv(y.astype(jnp.bfloat16), w2s) + sh2.reshape(1, c, 1, 1)
    return jnp.maximum(y + xb.astype(jnp.float32), 0.0)


if __name__ == "__main__":
    # Residual add requires in_ch == out_ch (as implied by the PyTorch forward).
    N, C, H, W = 2, 32, 16, 16

    key = jax.random.PRNGKey(0)
    kx, kw1, kw2, kbn = jax.random.split(key, 4)

    x_nchw = jax.random.normal(kx, (N, C, H, W), jnp.float32)
    w1 = 0.1 * jax.random.normal(kw1, (C, C, 3, 3), jnp.float32)
    w2 = 0.1 * jax.random.normal(kw2, (C, C, 3, 3), jnp.float32)

    bks = jax.random.split(kbn, 8)
    g1 = 1.0 + 0.1 * jax.random.normal(bks[0], (C,), jnp.float32)
    b1 = 0.1 * jax.random.normal(bks[1], (C,), jnp.float32)
    m1 = 0.1 * jax.random.normal(bks[2], (C,), jnp.float32)
    v1 = jnp.abs(jax.random.normal(bks[3], (C,), jnp.float32)) + 0.5
    g2 = 1.0 + 0.1 * jax.random.normal(bks[4], (C,), jnp.float32)
    b2 = 0.1 * jax.random.normal(bks[5], (C,), jnp.float32)
    m2 = 0.1 * jax.random.normal(bks[6], (C,), jnp.float32)
    v2 = jnp.abs(jax.random.normal(bks[7], (C,), jnp.float32)) + 0.5

    out = resblock_forward(x_nchw, w1, g1, b1, m1, v1, w2, g2, b2, m2, v2)
    jax.block_until_ready(out)

    ref = _reference_nchw(x_nchw, w1, g1, b1, m1, v1, w2, g2, b2, m2, v2)
    assert out.shape == (N, C, H, W)
    max_err = float(jnp.max(jnp.abs(out - ref)))
    assert jnp.allclose(out, ref, atol=5e-3, rtol=5e-3), (
        f"mismatch vs reference, max|err|={max_err}")

    print("KERNEL_OK")
</pallas_src>

<mosaic_0001>
module attributes {stable_mosaic.version = 11 : i64} {
  func.func @_resblock_kernel(%arg0: i32, %arg1: i32, %arg2: memref<1x16x18x128xbf16, #tpu.memory_space<vmem>>, %arg3: memref<1x4x18x128xbf16, #tpu.memory_space<vmem>>, %arg4: memref<3x384x128xbf16, #tpu.memory_space<vmem>>, %arg5: memref<3x384x128xbf16, #tpu.memory_space<vmem>>, %arg6: memref<1x128xf32, #tpu.memory_space<vmem>>, %arg7: memref<1x128xf32, #tpu.memory_space<vmem>>, %arg8: memref<1x16x16x128xf32, #tpu.memory_space<vmem>>, %arg9: memref<18x18x128xbf16, #tpu.memory_space<vmem>>) attributes {dimension_semantics = [#tpu.dimension_semantics<parallel>, #tpu.dimension_semantics<parallel>], iteration_bounds = array<i64: 2, 1>, scalar_prefetch = 0 : i64, scratch_operands = 1 : i64, tpu.core_type = #tpu.core_type<tc>, window_params = [{transform_indices = @transform_0, window_bounds = array<i64: 1, 16, 18, 128>}, {transform_indices = @transform_1, window_bounds = array<i64: 1, 4, 18, 128>}, {pipeline_mode = #tpu.pipeline_mode<synchronous>, transform_indices = @transform_2, window_bounds = array<i64: 3, 384, 128>}, {pipeline_mode = #tpu.pipeline_mode<synchronous>, transform_indices = @transform_3, window_bounds = array<i64: 3, 384, 128>}, {pipeline_mode = #tpu.pipeline_mode<synchronous>, transform_indices = @transform_4, window_bounds = array<i64: 1, 128>}, {pipeline_mode = #tpu.pipeline_mode<synchronous>, transform_indices = @transform_5, window_bounds = array<i64: 1, 128>}, {transform_indices = @transform_6, window_bounds = array<i64: 1, 16, 16, 128>}]} {
    %c0 = arith.constant 0 : index
    %c0_0 = arith.constant 0 : index
    %c0_1 = arith.constant 0 : index
    %c0_2 = arith.constant 0 : index
    %0 = vector.load %arg2[%c0, %c0_0, %c0_1, %c0_2] : memref<1x16x18x128xbf16, #tpu.memory_space<vmem>>, vector<1x16x18x128xbf16>
    %1 = vector.shape_cast %0 : vector<1x16x18x128xbf16> to vector<16x18x128xbf16>
    %c0_3 = arith.constant 0 : index
    %c0_4 = arith.constant 0 : index
    %c0_5 = arith.constant 0 : index
    %c0_6 = arith.constant 0 : index
    %2 = vector.load %arg3[%c0_3, %c0_4, %c0_5, %c0_6] : memref<1x4x18x128xbf16, #tpu.memory_space<vmem>>, vector<1x4x18x128xbf16>
    %3 = vector.shape_cast %2 : vector<1x4x18x128xbf16> to vector<4x18x128xbf16>
    %4 = tpu.concatenate %1, %3 in 0 : vector<16x18x128xbf16>, vector<4x18x128xbf16> -> vector<20x18x128xbf16>
    %c0_7 = arith.constant 0 : index
    %c0_8 = arith.constant 0 : index
    %c0_9 = arith.constant 0 : index
    %5 = vector.load %arg4[%c0_7, %c0_8, %c0_9] : memref<3x384x128xbf16, #tpu.memory_space<vmem>>, vector<3x384x128xbf16>
    %6 = vector.extract_strided_slice %4 {offsets = [0, 0, 0], sizes = [18, 18, 128], strides = [1, 1, 1]} : vector<20x18x128xbf16> to vector<18x18x128xbf16>
    %7 = vector.extract_strided_slice %4 {offsets = [1, 0, 0], sizes = [18, 18, 128], strides = [1, 1, 1]} : vector<20x18x128xbf16> to vector<18x18x128xbf16>
    %8 = vector.extract_strided_slice %4 {offsets = [2, 0, 0], sizes = [18, 18, 128], strides = [1, 1, 1]} : vector<20x18x128xbf16> to vector<18x18x128xbf16>
    %9 = tpu.concatenate %6, %7, %8 in 2 : vector<18x18x128xbf16>, vector<18x18x128xbf16>, vector<18x18x128xbf16> -> vector<18x18x384xbf16>
    %10 = vector.extract_strided_slice %9 {offsets = [0, 0, 0], sizes = [18, 16, 384], strides = [1, 1, 1]} : vector<18x18x384xbf16> to vector<18x16x384xbf16>
    %11 = vector.shape_cast %10 : vector<18x16x384xbf16> to vector<288x384xbf16>
    %12 = vector.extract_strided_slice %5 {offsets = [0, 0, 0], sizes = [1, 384, 128], strides = [1, 1, 1]} : vector<3x384x128xbf16> to vector<1x384x128xbf16>
    %13 = vector.shape_cast %12 : vector<1x384x128xbf16> to vector<384x128xbf16>
    %cst = arith.constant dense<0.000000e+00> : vector<288x128xf32>
    %14 = tpu.matmul %11, %13, %cst {dimension_numbers = #tpu.dot_dimension_numbers<[1], [0], [0], [1], [0, 0, 1, 1], [], []>} : vector<288x384xbf16>, vector<384x128xbf16>, vector<288x128xf32> -> vector<288x128xf32>
    %15 = vector.extract_strided_slice %9 {offsets = [0, 1, 0], sizes = [18, 16, 384], strides = [1, 1, 1]} : vector<18x18x384xbf16> to vector<18x16x384xbf16>
    %16 = vector.shape_cast %15 : vector<18x16x384xbf16> to vector<288x384xbf16>
    %17 = vector.extract_strided_slice %5 {offsets = [1, 0, 0], sizes = [1, 384, 128], strides = [1, 1, 1]} : vector<3x384x128xbf16> to vector<1x384x128xbf16>
    %18 = vector.shape_cast %17 : vector<1x384x128xbf16> to vector<384x128xbf16>
    %cst_10 = arith.constant dense<0.000000e+00> : vector<288x128xf32>
    %19 = tpu.matmul %16, %18, %cst_10 {dimension_numbers = #tpu.dot_dimension_numbers<[1], [0], [0], [1], [0, 0, 1, 1], [], []>} : vector<288x384xbf16>, vector<384x128xbf16>, vector<288x128xf32> -> vector<288x128xf32>
    %20 = arith.addf %14, %19 : vector<288x128xf32>
    %21 = vector.extract_strided_slice %9 {offsets = [0, 2, 0], sizes = [18, 16, 384], strides = [1, 1, 1]} : vector<18x18x384xbf16> to vector<18x16x384xbf16>
    %22 = vector.shape_cast %21 : vector<18x16x384xbf16> to vector<288x384xbf16>
    %23 = vector.extract_strided_slice %5 {offsets = [2, 0, 0], sizes = [1, 384, 128], strides = [1, 1, 1]} : vector<3x384x128xbf16> to vector<1x384x128xbf16>
    %24 = vector.shape_cast %23 : vector<1x384x128xbf16> to vector<384x128xbf16>
    %cst_11 = arith.constant dense<0.000000e+00> : vector<288x128xf32>
    %25 = tpu.matmul %22, %24, %cst_11 {dimension_numbers = #tpu.dot_dimension_numbers<[1], [0], [0], [1], [0, 0, 1, 1], [], []>} : vector<288x384xbf16>, vector<384x128xbf16>, vector<288x128xf32> -> vector<288x128xf32>
    %26 = arith.addf %20, %25 : vector<288x128xf32>
    %27 = vector.shape_cast %26 : vector<288x128xf32> to vector<18x16x128xf32>
    %c0_12 = arith.constant 0 : index
    %c0_13 = arith.constant 0 : index
    %28 = vector.load %arg6[%c0_12, %c0_13] : memref<1x128xf32, #tpu.memory_space<vmem>>, vector<1x128xf32>
    %29 = vector.shape_cast %28 : vector<1x128xf32> to vector<1x1x128xf32>
    %30 = vector.broadcast %29 : vector<1x1x128xf32> to vector<18x16x128xf32>
    %31 = arith.addf %27, %30 : vector<18x16x128xf32>
    %cst_14 = arith.constant 0.000000e+00 : f32
    %32 = vector.broadcast %cst_14 : f32 to vector<18x16x128xf32>
    %33 = arith.maximumf %31, %32 : vector<18x16x128xf32>
    %c16_i32 = arith.constant 16 : i32
    %34 = arith.muli %arg1, %c16_i32 : i32
    %c1_i32 = arith.constant 1 : i32
    %35 = arith.subi %34, %c1_i32 : i32
    %36 = tpu.iota {dimensions = array<i32: 0>} : vector<18x1x1xi32>
    %37 = vector.broadcast %35 : i32 to vector<18x1x1xi32>
    %38 = arith.addi %37, %36 : vector<18x1x1xi32>
    %c0_i32 = arith.constant 0 : i32
    %39 = vector.broadcast %c0_i32 : i32 to vector<18x1x1xi32>
    %40 = arith.cmpi sge, %38, %39 : vector<18x1x1xi32>
    %c16_i32_15 = arith.constant 16 : i32
    %41 = vector.broadcast %c16_i32_15 : i32 to vector<18x1x1xi32>
    %42 = arith.cmpi slt, %38, %41 : vector<18x1x1xi32>
    %43 = arith.andi %40, %42 : vector<18x1x1xi1>
    %cst_16 = arith.constant 0.000000e+00 : f32
    %44 = vector.shape_cast %43 : vector<18x1x1xi1> to vector<18x1x1xi1>
    %45 = vector.broadcast %44 : vector<18x1x1xi1> to vector<18x16x128xi1>
    %46 = vector.broadcast %cst_16 : f32 to vector<18x16x128xf32>
    %47 = arith.select %45, %33, %46 : vector<18x16x128xi1>, vector<18x16x128xf32>
    %48 = arith.truncf %47 : vector<18x16x128xf32> to vector<18x16x128xbf16>
    %c0_17 = arith.constant 0 : index
    %c1 = arith.constant 1 : index
    %c0_18 = arith.constant 0 : index
    %49 = vector.load %arg9[%c0_17, %c1, %c0_18] : memref<18x18x128xbf16, #tpu.memory_space<vmem>>, vector<18x16x128xbf16>
    tpu.vector_store %arg9[%c0_17, %c1, %c0_18], %48 {strides = array<i32>} : memref<18x18x128xbf16, #tpu.memory_space<vmem>>, vector<18x16x128xbf16>,
    %cst_19 = arith.constant 0.000000e+00 : bf16
    %50 = vector.broadcast %cst_19 : bf16 to vector<18x1x128xbf16>
    %c0_20 = arith.constant 0 : index
    %c0_21 = arith.constant 0 : index
    %c0_22 = arith.constant 0 : index
    %51 = vector.load %arg9[%c0_20, %c0_21, %c0_22] : memref<18x18x128xbf16, #tpu.memory_space<vmem>>, vector<18x1x128xbf16>
    tpu.vector_store %arg9[%c0_20, %c0_21, %c0_22], %50 {strides = array<i32>} : memref<18x18x128xbf16, #tpu.memory_space<vmem>>, vector<18x1x128xbf16>,
    %cst_23 = arith.constant 0.000000e+00 : bf16
    %52 = vector.broadcast %cst_23 : bf16 to vector<18x1x128xbf16>
    %c0_24 = arith.constant 0 : index
    %c17 = arith.constant 17 : index
    %c0_25 = arith.constant 0 : index
    %53 = vector.load %arg9[%c0_24, %c17, %c0_25] : memref<18x18x128xbf16, #tpu.memory_space<vmem>>, vector<18x1x128xbf16>
    tpu.vector_store %arg9[%c0_24, %c17, %c0_25], %52 {strides = array<i32>} : memref<18x18x128xbf16, #tpu.memory_space<vmem>>, vector<18x1x128xbf16>,
    %c0_26 = arith.constant 0 : index
    %c0_27 = arith.constant 0 : index
    %c0_28 = arith.constant 0 : index
    %54 = vector.load %arg9[%c0_26, %c0_27, %c0_28] : memref<18x18x128xbf16, #tpu.memory_space<vmem>>, vector<18x18x128xbf16>
    %c0_29 = arith.constant 0 : index
    %c0_30 = arith.constant 0 : index
    %c0_31 = arith.constant 0 : index
    %55 = vector.load %arg5[%c0_29, %c0_30, %c0_31] : memref<3x384x128xbf16, #tpu.memory_space<vmem>>, vector<3x384x128xbf16>
    %56 = vector.extract_strided_slice %54 {offsets = [0, 0, 0], sizes = [16, 18, 128], strides = [1, 1, 1]} : vector<18x18x128xbf16> to vector<16x18x128xbf16>
    %57 = vector.extract_strided_slice %54 {offsets = [1, 0, 0], sizes = [16, 18, 128], strides = [1, 1, 1]} : vector<18x18x128xbf16> to vector<16x18x128xbf16>
    %58 = vector.extract_strided_slice %54 {offsets = [2, 0, 0], sizes = [16, 18, 128], strides = [1, 1, 1]} : vector<18x18x128xbf16> to vector<16x18x128xbf16>
    %59 = tpu.concatenate %56, %57, %58 in 2 : vector<16x18x128xbf16>, vector<16x18x128xbf16>, vector<16x18x128xbf16> -> vector<16x18x384xbf16>
    %60 = vector.extract_strided_slice %59 {offsets = [0, 0, 0], sizes = [16, 16, 384], strides = [1, 1, 1]} : vector<16x18x384xbf16> to vector<16x16x384xbf16>
    %61 = vector.shape_cast %60 : vector<16x16x384xbf16> to vector<256x384xbf16>
    %62 = vector.extract_strided_slice %55 {offsets = [0, 0, 0], sizes = [1, 384, 128], strides = [1, 1, 1]} : vector<3x384x128xbf16> to vector<1x384x128xbf16>
    %63 = vector.shape_cast %62 : vector<1x384x128xbf16> to vector<384x128xbf16>
    %cst_32 = arith.constant dense<0.000000e+00> : vector<256x128xf32>
    %64 = tpu.matmul %61, %63, %cst_32 {dimension_numbers = #tpu.dot_dimension_numbers<[1], [0], [0], [1], [0, 0, 1, 1], [], []>} : vector<256x384xbf16>, vector<384x128xbf16>, vector<256x128xf32> -> vector<256x128xf32>
    %65 = vector.extract_strided_slice %59 {offsets = [0, 1, 0], sizes = [16, 16, 384], strides = [1, 1, 1]} : vector<16x18x384xbf16> to vector<16x16x384xbf16>
    %66 = vector.shape_cast %65 : vector<16x16x384xbf16> to vector<256x384xbf16>
    %67 = vector.extract_strided_slice %55 {offsets = [1, 0, 0], sizes = [1, 384, 128], strides = [1, 1, 1]} : vector<3x384x128xbf16> to vector<1x384x128xbf16>
    %68 = vector.shape_cast %67 : vector<1x384x128xbf16> to vector<384x128xbf16>
    %cst_33 = arith.constant dense<0.000000e+00> : vector<256x128xf32>
    %69 = tpu.matmul %66, %68, %cst_33 {dimension_numbers = #tpu.dot_dimension_numbers<[1], [0], [0], [1], [0, 0, 1, 1], [], []>} : vector<256x384xbf16>, vector<384x128xbf16>, vector<256x128xf32> -> vector<256x128xf32>
    %70 = arith.addf %64, %69 : vector<256x128xf32>
    %71 = vector.extract_strided_slice %59 {offsets = [0, 2, 0], sizes = [16, 16, 384], strides = [1, 1, 1]} : vector<16x18x384xbf16> to vector<16x16x384xbf16>
    %72 = vector.shape_cast %71 : vector<16x16x384xbf16> to vector<256x384xbf16>
    %73 = vector.extract_strided_slice %55 {offsets = [2, 0, 0], sizes = [1, 384, 128], strides = [1, 1, 1]} : vector<3x384x128xbf16> to vector<1x384x128xbf16>
    %74 = vector.shape_cast %73 : vector<1x384x128xbf16> to vector<384x128xbf16>
    %cst_34 = arith.constant dense<0.000000e+00> : vector<256x128xf32>
    %75 = tpu.matmul %72, %74, %cst_34 {dimension_numbers = #tpu.dot_dimension_numbers<[1], [0], [0], [1], [0, 0, 1, 1], [], []>} : vector<256x384xbf16>, vector<384x128xbf16>, vector<256x128xf32> -> vector<256x128xf32>
    %76 = arith.addf %70, %75 : vector<256x128xf32>
    %77 = vector.shape_cast %76 : vector<256x128xf32> to vector<16x16x128xf32>
    %c0_35 = arith.constant 0 : index
    %c0_36 = arith.constant 0 : index
    %78 = vector.load %arg7[%c0_35, %c0_36] : memref<1x128xf32, #tpu.memory_space<vmem>>, vector<1x128xf32>
    %79 = vector.shape_cast %78 : vector<1x128xf32> to vector<1x1x128xf32>
    %80 = vector.broadcast %79 : vector<1x1x128xf32> to vector<16x16x128xf32>
    %81 = arith.addf %77, %80 : vector<16x16x128xf32>
    %82 = vector.extract_strided_slice %4 {offsets = [2, 1, 0], sizes = [16, 16, 128], strides = [1, 1, 1]} : vector<20x18x128xbf16> to vector<16x16x128xbf16>
    %83 = arith.extf %82 : vector<16x16x128xbf16> to vector<16x16x128xf32>
    %84 = arith.addf %81, %83 : vector<16x16x128xf32>
    %cst_37 = arith.constant 0.000000e+00 : f32
    %85 = vector.broadcast %cst_37 : f32 to vector<16x16x128xf32>
    %86 = arith.maximumf %84, %85 : vector<16x16x128xf32>
    %c0_38 = arith.constant 0 : index
    %c0_39 = arith.constant 0 : index
    %c0_40 = arith.constant 0 : index
    %c0_41 = arith.constant 0 : index
    %87 = vector.load %arg8[%c0_38, %c0_39, %c0_40, %c0_41] : memref<1x16x16x128xf32, #tpu.memory_space<vmem>>, vector<1x16x16x128xf32>
    %88 = vector.shape_cast %87 : vector<1x16x16x128xf32> to vector<16x16x128xf32>
    %89 = vector.shape_cast %86 : vector<16x16x128xf32> to vector<1x16x16x128xf32>
    tpu.vector_store %arg8[%c0_38, %c0_39, %c0_40, %c0_41], %89 {strides = array<i32>} : memref<1x16x16x128xf32, #tpu.memory_space<vmem>>, vector<1x16x16x128xf32>,
    return
  }
  func.func @transform_0(%arg0: i32, %arg1: i32) -> (i32, i32, i32, i32) {
    %c0_i32 = arith.constant 0 : i32
    %c0_i32_0 = arith.constant 0 : i32
    %c0_i32_1 = arith.constant 0 : i32
    return %arg0, %arg1, %c0_i32, %c0_i32_0 : i32, i32, i32, i32
  }
  func.func @transform_1(%arg0: i32, %arg1: i32) -> (i32, i32, i32, i32) {
    %c1_i32 = arith.constant 1 : i32
    %0 = arith.addi %arg1, %c1_i32 : i32
    %c4_i32 = arith.constant 4 : i32
    %1 = arith.muli %0, %c4_i32 : i32
    %c0_i32 = arith.constant 0 : i32
    %c0_i32_0 = arith.constant 0 : i32
    %c0_i32_1 = arith.constant 0 : i32
    return %arg0, %1, %c0_i32, %c0_i32_0 : i32, i32, i32, i32
  }
  func.func @transform_2(%arg0: i32, %arg1: i32) -> (i32, i32, i32) {
    %c0_i32 = arith.constant 0 : i32
    %c0_i32_0 = arith.constant 0 : i32
    %c0_i32_1 = arith.constant 0 : i32
    %c0_i32_2 = arith.constant 0 : i32
    return %c0_i32, %c0_i32_0, %c0_i32_1 : i32, i32, i32
  }
  func.func @transform_3(%arg0: i32, %arg1: i32) -> (i32, i32, i32) {
    %c0_i32 = arith.constant 0 : i32
    %c0_i32_0 = arith.constant 0 : i32
    %c0_i32_1 = arith.constant 0 : i32
    %c0_i32_2 = arith.constant 0 : i32
    return %c0_i32, %c0_i32_0, %c0_i32_1 : i32, i32, i32
  }
  func.func @transform_4(%arg0: i32, %arg1: i32) -> (i32, i32) {
    %c0_i32 = arith.constant 0 : i32
    %c0_i32_0 = arith.constant 0 : i32
    %c0_i32_1 = arith.constant 0 : i32
    return %c0_i32, %c0_i32_0 : i32, i32
  }
  func.func @transform_5(%arg0: i32, %arg1: i32) -> (i32, i32) {
    %c0_i32 = arith.constant 0 : i32
    %c0_i32_0 = arith.constant 0 : i32
    %c0_i32_1 = arith.constant 0 : i32
    return %c0_i32, %c0_i32_0 : i32, i32
  }
  func.func @transform_6(%arg0: i32, %arg1: i32) -> (i32, i32, i32, i32) {
    %c0_i32 = arith.constant 0 : i32
    %c0_i32_0 = arith.constant 0 : i32
    %c0_i32_1 = arith.constant 0 : i32
    return %arg0, %arg1, %c0_i32, %c0_i32_0 : i32, i32, i32, i32
  }
}

</mosaic_0001>

<llo_original>
// kernel: resblock_forward.1
$region0: #{resblock_forward.1}
  #allocation0 [shape = 'u32[]', space=smem, size = 0x4, offset = 0x4, fixed_abs, tag = 'smem constant byte address 0x4 - core index']
  #allocation1 [shape = 'u32[144,128]{1,0:T(1,128)}', space=vmem, size = 0x12000, scoped, tag = 'internal scratch']
  #allocation2 [shape = 'bf16[18,18,128]{2,1,0:T(8,128)(2,1)}', space=vmem, size = 0x1b000, scoped, tag = 'scratch operand']
  %s0 = inlined_call_operand.vmem [shape: bf16[2,20,18,128], index: 0, kind: input, shape index: {}, may-alias: {0,1}]
  %s1 = inlined_call_operand.vmem [shape: bf16[2,20,18,128], index: 1, kind: input, shape index: {}, may-alias: {0,1}]
  %s2 = inlined_call_operand.vmem [shape: bf16[3,384,128], index: 2, kind: input, shape index: {}]
  %s3 = inlined_call_operand.vmem [shape: bf16[3,384,128], index: 3, kind: input, shape index: {}]
  %s4 = inlined_call_operand.vmem [shape: f32[1,128], index: 4, kind: input, shape index: {}]
  %s5 = inlined_call_operand.vmem [shape: f32[1,128], index: 5, kind: input, shape index: {}]
  %s6 = inlined_call_operand.vmem [shape: f32[2,16,16,128], index: 6, kind: output, shape index: {}]
  %s7 = sld [smem:[#allocation0]]
  $region57: #{resblock_forward.1} parent=0
    _
  %s9 = ssub.s32 1, %s7
  %s10 = scalar_select 0, %s9, %s7
  loop: start=0, step=1, limit=4
  $region2: #{resblock_forward.1} parent=0 // loop_pre_header
    _
  $region3: #{resblock_forward.1} parent=0 // loop_header
    %s12 = sphi 0, %s16
    %p13 = scmp.ge.s32.totalorder %s12, 4
    %s19 = sphi 0, %s31
    %s20 = sphi 0, %s27
    %s21 = sphi 0, %s19
    %s22 = sphi 0, %s20
    %s23 = sphi 0, %s21
    %s24 = sphi 0, %s22
    %s36 = sphi 0, %s38
    %s39 = sphi 0, %s36
    %s40 = sphi 0, %s39
    %s56 = sphi 0, %s40
    %s68 = sphi 0, %s70
    %s71 = sphi 0, %s68
    %s72 = sphi 0, %s71
    %s88 = sphi 0, %s72
    %s92 = sphi 0, %s92
    %s94 = sphi 0, %s92
    %s95 = sphi 0, %s94
    %s109 = sphi 0, %s95
    %s113 = sphi 0, %s113
    %s115 = sphi 0, %s113
    %s116 = sphi 0, %s115
    %s130 = sphi 0, %s116
    %s134 = sphi 0, %s134
    %s136 = sphi 0, %s134
    %s137 = sphi 0, %s136
    %s151 = sphi 0, %s137
    %s155 = sphi 0, %s155
    %s157 = sphi 0, %s155
    %s158 = sphi 0, %s157
    %s172 = sphi 0, %s158
    %s180 = sphi 0, %s182
    %s183 = sphi 0, %s180
    %s184 = sphi 0, %s183
    %s200 = sphi 0, %s184
  $region4: #{resblock_forward.1} parent=0 // loop_header_branch
    %15 = sbr.rel (%p13) target = $region8
  $region5: #{resblock_forward.1} parent=0 // loop_body
    %s17 = ssub.s32 %s12, 1
    %s18 = ssub.s32 %s12, 2
    %s25 = sadd.s32 1, %s20
    %p26 = scmp.ge.s32.totalorder %s25, 1
    %s27 = scalar_select %p26, 0, %s25
    %s28 = sadd.s32 1, %s19
    %s29 = scalar_select %p26, %s28, %s19
    %p30 = scmp.ge.s32.totalorder %s29, 2
    %s31 = scalar_select %p30, 0, %s29
    %s32 = ssub.s32 %s19, %s31
    %s33 = ssub.s32 %s20, %s27
    %s34 = sor.u32 %s32, %s33
    %p35 = scmp.eq.s32.totalorder %s34, 0
    %s37 = sadd.s32 %s36, 1
    %s38 = scalar_select %p35, %s36, %s37
    %p41 = pneg %p35
    %p42 = scmp.eq.s32.totalorder %s12, 1
    %p43 = por %p41, %p42
    %p44 = scmp.ne.s32.totalorder %s36, %s39
    %p45 = scmp.eq.s32.totalorder %s12, 0
    %p46 = por %p44, %p45
    %p47 = scmp.ne.s32.totalorder %s36, %s39
    %p48 = scmp.eq.s32.totalorder %s17, 1
    %p49 = por %p47, %p48
    %p50 = scmp.ne.s32.totalorder %s39, %s40
    %p51 = scmp.eq.s32.totalorder %s17, 0
    %p52 = por %p50, %p51
    %p53 = scmp.ne.s32.totalorder %s39, %s40
    %p54 = scmp.eq.s32.totalorder %s18, 1
    %p55 = por %p53, %p54
    %p57 = scmp.ne.s32.totalorder %s40, %s56
    %p58 = scmp.eq.s32.totalorder %s18, 0
    %p59 = por %p57, %p58
    %s60 = sadd.s32 %s20, 1
    %s61 = smul.u32 %s60, 4
    %s62 = sadd.s32 %s27, 1
    %s63 = smul.u32 %s62, 4
    %s64 = ssub.s32 %s19, %s31
    %s65 = ssub.s32 %s61, %s63
    %s66 = sor.u32 %s64, %s65
    %p67 = scmp.eq.s32.totalorder %s66, 0
    %s69 = sadd.s32 %s68, 1
    %s70 = scalar_select %p67, %s68, %s69
    %p73 = pneg %p67
    %p74 = scmp.eq.s32.totalorder %s12, 1
    %p75 = por %p73, %p74
    %p76 = scmp.ne.s32.totalorder %s68, %s71
    %p77 = scmp.eq.s32.totalorder %s12, 0
    %p78 = por %p76, %p77
    %p79 = scmp.ne.s32.totalorder %s68, %s71
    %p80 = scmp.eq.s32.totalorder %s17, 1
    %p81 = por %p79, %p80
    %p82 = scmp.ne.s32.totalorder %s71, %s72
    %p83 = scmp.eq.s32.totalorder %s17, 0
    %p84 = por %p82, %p83
    %p85 = scmp.ne.s32.totalorder %s71, %s72
    %p86 = scmp.eq.s32.totalorder %s18, 1
    %p87 = por %p85, %p86
    %p89 = scmp.ne.s32.totalorder %s72, %s88
    %p90 = scmp.eq.s32.totalorder %s18, 0
    %p91 = por %p89, %p90
    %s93 = sadd.s32 %s92, 1
    %p96 = scmp.eq.s32.totalorder %s12, 1
    %p97 = scmp.ne.s32.totalorder %s92, %s94
    %p98 = scmp.eq.s32.totalorder %s12, 0
    %p99 = por %p97, %p98
    %p100 = scmp.ne.s32.totalorder %s92, %s94
    %p101 = scmp.eq.s32.totalorder %s17, 1
    %p102 = por %p100, %p101
    %p103 = scmp.ne.s32.totalorder %s94, %s95
    %p104 = scmp.eq.s32.totalorder %s17, 0
    %p105 = por %p103, %p104
    %p106 = scmp.ne.s32.totalorder %s94, %s95
    %p107 = scmp.eq.s32.totalorder %s18, 1
    %p108 = por %p106, %p107
    %p110 = scmp.ne.s32.totalorder %s95, %s109
    %p111 = scmp.eq.s32.totalorder %s18, 0
    %p112 = por %p110, %p111
    %s114 = sadd.s32 %s113, 1
    %p117 = scmp.eq.s32.totalorder %s12, 1
    %p118 = scmp.ne.s32.totalorder %s113, %s115
    %p119 = scmp.eq.s32.totalorder %s12, 0
    %p120 = por %p118, %p119
    %p121 = scmp.ne.s32.totalorder %s113, %s115
    %p122 = scmp.eq.s32.totalorder %s17, 1
    %p123 = por %p121, %p122
    %p124 = scmp.ne.s32.totalorder %s115, %s116
    %p125 = scmp.eq.s32.totalorder %s17, 0
    %p126 = por %p124, %p125
    %p127 = scmp.ne.s32.totalorder %s115, %s116
    %p128 = scmp.eq.s32.totalorder %s18, 1
    %p129 = por %p127, %p128
    %p131 = scmp.ne.s32.totalorder %s116, %s130
    %p132 = scmp.eq.s32.totalorder %s18, 0
    %p133 = por %p131, %p132
    %s135 = sadd.s32 %s134, 1
    %p138 = scmp.eq.s32.totalorder %s12, 1
    %p139 = scmp.ne.s32.totalorder %s134, %s136
    %p140 = scmp.eq.s32.totalorder %s12, 0
    %p141 = por %p139, %p140
    %p142 = scmp.ne.s32.totalorder %s134, %s136
    %p143 = scmp.eq.s32.totalorder %s17, 1
    %p144 = por %p142, %p143
    %p145 = scmp.ne.s32.totalorder %s136, %s137
    %p146 = scmp.eq.s32.totalorder %s17, 0
    %p147 = por %p145, %p146
    %p148 = scmp.ne.s32.totalorder %s136, %s137
    %p149 = scmp.eq.s32.totalorder %s18, 1
    %p150 = por %p148, %p149
    %p152 = scmp.ne.s32.totalorder %s137, %s151
    %p153 = scmp.eq.s32.totalorder %s18, 0
    %p154 = por %p152, %p153
    %s156 = sadd.s32 %s155, 1
    %p159 = scmp.eq.s32.totalorder %s12, 1
    %p160 = scmp.ne.s32.totalorder %s155, %s157
    %p161 = scmp.eq.s32.totalorder %s12, 0
    %p162 = por %p160, %p161
    %p163 = scmp.ne.s32.totalorder %s155, %s157
    %p164 = scmp.eq.s32.totalorder %s17, 1
    %p165 = por %p163, %p164
    %p166 = scmp.ne.s32.totalorder %s157, %s158
    %p167 = scmp.eq.s32.totalorder %s17, 0
    %p168 = por %p166, %p167
    %p169 = scmp.ne.s32.totalorder %s157, %s158
    %p170 = scmp.eq.s32.totalorder %s18, 1
    %p171 = por %p169, %p170
    %p173 = scmp.ne.s32.totalorder %s158, %s172
    %p174 = scmp.eq.s32.totalorder %s18, 0
    %p175 = por %p173, %p174
    %s176 = ssub.s32 %s19, %s31
    %s177 = ssub.s32 %s20, %s27
    %s178 = sor.u32 %s176, %s177
    %p179 = scmp.eq.s32.totalorder %s178, 0
    %s181 = sadd.s32 %s180, 1
    %s182 = scalar_select %p179, %s180, %s181
    %p185 = pneg %p179
    %p186 = scmp.eq.s32.totalorder %s12, 1
    %p187 = por %p185, %p186
    %p188 = scmp.ne.s32.totalorder %s180, %s183
    %p189 = scmp.eq.s32.totalorder %s12, 0
    %p190 = por %p188, %p189
    %p191 = scmp.ne.s32.totalorder %s180, %s183
    %p192 = scmp.eq.s32.totalorder %s17, 1
    %p193 = por %p191, %p192
    %p194 = scmp.ne.s32.totalorder %s183, %s184
    %p195 = scmp.eq.s32.totalorder %s17, 0
    %p196 = por %p194, %p195
    %p197 = scmp.ne.s32.totalorder %s183, %s184
    %p198 = scmp.eq.s32.totalorder %s18, 1
    %p199 = por %p197, %p198
    %p201 = scmp.ne.s32.totalorder %s184, %s200
    %p202 = scmp.eq.s32.totalorder %s18, 0
    %p203 = por %p201, %p202
    %p204 = scmp.le.s32.totalorder 1, %s12
    %p205 = scmp.lt.s32.totalorder %s12, 3
    %p206 = pnand %p204, %p205
    %p207 = pneg %p206
    // Predicated region
    $region9: #{resblock_forward.1} parent=5 // pred_check
      _
    $region10: #{resblock_forward.1} parent=5 // pred_check_branch
      %209 = sbr.rel (%p206) target = $region12
    $region11: #{resblock_forward.1} parent=5 // pred_region
      %s210 = ssub.s32 %s12, 1
      // Predicated region
      $region13: #{resblock_forward.1} parent=11 // pred_check
        %p211 = pneg %p105
      $region14: #{resblock_forward.1} parent=11 // pred_check_branch
        %213 = sbr.rel (%p211) target = $region16
      $region15: #{resblock_forward.1} parent=11 // pred_region
        _
      $region16: #{resblock_forward.1} parent=11 // pred_fallthru
        _
      // Predicated region
      $region17: #{resblock_forward.1} parent=11 // pred_check
        %p214 = pneg %p126
      $region18: #{resblock_forward.1} parent=11 // pred_check_branch
        %216 = sbr.rel (%p214) target = $region20
      $region19: #{resblock_forward.1} parent=11 // pred_region
        _
      $region20: #{resblock_forward.1} parent=11 // pred_fallthru
        _
      // Predicated region
      $region21: #{resblock_forward.1} parent=11 // pred_check
        %p217 = pneg %p147
      $region22: #{resblock_forward.1} parent=11 // pred_check_branch
        %219 = sbr.rel (%p217) target = $region24
      $region23: #{resblock_forward.1} parent=11 // pred_region
        _
      $region24: #{resblock_forward.1} parent=11 // pred_fallthru
        _
      // Predicated region
      $region25: #{resblock_forward.1} parent=11 // pred_check
        %p220 = pneg %p168
      $region26: #{resblock_forward.1} parent=11 // pred_check_branch
        %222 = sbr.rel (%p220) target = $region28
      $region27: #{resblock_forward.1} parent=11 // pred_region
        _
      $region28: #{resblock_forward.1} parent=11 // pred_fallthru
        _
    $region12: #{resblock_forward.1} parent=5 // pred_fallthru
      _
    %p223 = scmp.lt.s32.totalorder %s12, 2
    // Predicated region
    $region29: #{resblock_forward.1} parent=5 // pred_check
      %p224 = pneg %p223
    $region30: #{resblock_forward.1} parent=5 // pred_check_branch
      %226 = sbr.rel (%p224) target = $region32
    $region31: #{resblock_forward.1} parent=5 // pred_region
      // Predicated region
      $region33: #{resblock_forward.1} parent=31 // pred_check
        %p227 = pneg %p46
      $region34: #{resblock_forward.1} parent=31 // pred_check_branch
        %229 = sbr.rel (%p227) target = $region36
      $region35: #{resblock_forward.1} parent=31 // pred_region
        %s230 = smul.u32 16, %s20
        %s231 = ssub.s32 20, %s230
        %p232 = scmp.lt.s32.totalorder %s231, 16
        %s233 = scalar_select %p232, %s231, 16
        %s234 = smul.u32 64, %s233
        %s235 = smul.u32 %s234, 3
        %p236 = scmp.lt.s32.totalorder %s19, 1
        %s237 = scalar_select %p236, %s19, 1
        %p238 = scmp.lt.s32.totalorder %s230, 19
        %s239 = scalar_select %p238, %s230, 19
        %s240 = smul.addr %s239, 3
        %s241 = smul.addr %s237, 60
        %s242 = sadd.s32 %s240, %s241
        %s243 = smul.addr %s242, 4
        %s244 = scalar_lea.vmem %s0, %s243
        %s245 = smul.u32 16, %s20
        %s246 = ssub.s32 20, %s245
        %p247 = scmp.lt.s32.totalorder %s246, 16
        %s248 = scalar_select %p247, %s246, 16
        %s249 = smul.u32 64, %s248
        %s250 = smul.u32 %s249, 3
      $region36: #{resblock_forward.1} parent=31 // pred_fallthru
        _
      // Predicated region
      $region37: #{resblock_forward.1} parent=31 // pred_check
        %p251 = pneg %p78
      $region38: #{resblock_forward.1} parent=31 // pred_check_branch
        %253 = sbr.rel (%p251) target = $region40
      $region39: #{resblock_forward.1} parent=31 // pred_region
        %s254 = sadd.s32 %s20, 1
        %s255 = smul.u32 %s254, 4
        %s256 = smul.u32 4, %s255
        %p257 = scmp.lt.s32.totalorder %s19, 1
        %s258 = scalar_select %p257, %s19, 1
        %p259 = scmp.lt.s32.totalorder %s256, 19
        %s260 = scalar_select %p259, %s256, 19
        %s261 = smul.addr %s260, 3
        %s262 = smul.addr %s258, 60
        %s263 = sadd.s32 %s261, %s262
        %s264 = smul.addr %s263, 4
        %s265 = scalar_lea.vmem %s1, %s264
        %s266 = sadd.s32 %s20, 1
        %s267 = smul.u32 %s266, 4
        %s268 = smul.u32 4, %s267
      $region40: #{resblock_forward.1} parent=31 // pred_fallthru
        _
    $region32: #{resblock_forward.1} parent=5 // pred_fallthru
      _
    %p269 = scmp.le.s32.totalorder 1, %s12
    %p270 = scmp.lt.s32.totalorder %s12, 3
    %p271 = pnand %p269, %p270
    %p272 = pneg %p271
    // Predicated region
    $region41: #{resblock_forward.1} parent=5 // pred_check
      _
    $region42: #{resblock_forward.1} parent=5 // pred_check_branch
      %274 = sbr.rel (%p271) target = $region44
    $region43: #{resblock_forward.1} parent=5 // pred_region
      %s275 = ssub.s32 %s12, 1
      %s276 = smul.u32 16, %s22
      %s277 = ssub.s32 20, %s276
      %p278 = scmp.lt.s32.totalorder %s277, 16
      %s279 = scalar_select %p278, %s277, 16
      %s280 = smul.u32 64, %s279
      %s281 = smul.u32 %s280, 3
      %p282 = scmp.lt.s32.totalorder %s21, 1
      %s283 = scalar_select %p282, %s21, 1
      %p284 = scmp.lt.s32.totalorder %s276, 19
      %s285 = scalar_select %p284, %s276, 19
      %s286 = smul.addr %s285, 3
      %s287 = smul.addr %s283, 60
      %s288 = sadd.s32 %s286, %s287
      %s289 = smul.addr %s288, 4
      %s290 = scalar_lea.vmem %s0, %s289
      %p291 = pneg %p52
      %p292 = pneg %p49
      %s293 = sadd.s32 %s22, 1
      %s294 = smul.u32 %s293, 4
      %s295 = smul.u32 4, %s294
      %p296 = scmp.lt.s32.totalorder %s21, 1
      %s297 = scalar_select %p296, %s21, 1
      %p298 = scmp.lt.s32.totalorder %s295, 19
      %s299 = scalar_select %p298, %s295, 19
      %s300 = smul.addr %s299, 3
      %s301 = smul.addr %s297, 60
      %s302 = sadd.s32 %s300, %s301
      %s303 = smul.addr %s302, 4
      %s304 = scalar_lea.vmem %s1, %s303
      %p305 = pneg %p84
      %p306 = pneg %p81
      %p307 = pneg %p105
      %p308 = pneg %p102
      %p309 = pneg %p126
      %p310 = pneg %p123
      %p311 = pneg %p147
      %p312 = pneg %p144
      %p313 = pneg %p168
      %p314 = pneg %p165
      %p315 = pneg %p196
      %p316 = pneg %p193
      %s317 = smul.u32 16, %s22
      %p318 = scmp.lt.s32.totalorder %s21, 1
      %s319 = scalar_select %p318, %s21, 1
      %p320 = scmp.lt.s32.totalorder %s317, 15
      %s321 = scalar_select %p320, %s317, 15
      %s322 = smul.addr %s321, 2
      %s323 = smul.addr %s319, 32
      %s324 = sadd.s32 %s322, %s323
      %s325 = smul.addr %s324, 8
      %s326 = scalar_lea.vmem %s6, %s325
      %s327 = smul.u32 16, %s22
      %s328 = ssub.s32 20, %s327
      %p329 = scmp.lt.s32.totalorder %s328, 16
      %s330 = scalar_select %p329, %s328, 16
      %s331 = smul.u32 64, %s330
      %s332 = smul.u32 %s331, 3
      %p333 = scmp.lt.s32.totalorder %s21, 1
      %s334 = scalar_select %p333, %s21, 1
      %p335 = scmp.lt.s32.totalorder %s327, 19
      %s336 = scalar_select %p335, %s327, 19
      %s337 = smul.addr %s336, 3
      %s338 = smul.addr %s334, 60
      %s339 = sadd.s32 %s337, %s338
      %s340 = smul.addr %s339, 4
      %s341 = scalar_lea.vmem %s0, %s340
      %s342 = smul.u32 16, %s22
      %s343 = ssub.s32 20, %s342
      %p344 = scmp.lt.s32.totalorder %s343, 16
      %s345 = scalar_select %p344, %s343, 16
      %s346 = smul.u32 64, %s345
      %s347 = smul.u32 %s346, 3
      %s348 = sadd.s32 %s22, 1
      %s349 = smul.u32 %s348, 4
      %s350 = smul.u32 4, %s349
      %p351 = scmp.lt.s32.totalorder %s21, 1
      %s352 = scalar_select %p351, %s21, 1
      %p353 = scmp.lt.s32.totalorder %s350, 19
      %s354 = scalar_select %p353, %s350, 19
      %s355 = smul.addr %s354, 3
      %s356 = smul.addr %s352, 60
      %s357 = sadd.s32 %s355, %s356
      %s358 = smul.addr %s357, 4
      %s359 = scalar_lea.vmem %s1, %s358
      %s360 = sadd.s32 %s22, 1
      %s361 = smul.u32 %s360, 4
      %s362 = smul.u32 4, %s361
      %s363 = smul.u32 16, %s22
      %p364 = scmp.lt.s32.totalorder %s21, 1
      %s365 = scalar_select %p364, %s21, 1
      %p366 = scmp.lt.s32.totalorder %s363, 15
      %s367 = scalar_select %p366, %s363, 15
      %s368 = smul.addr %s367, 2
      %s369 = smul.addr %s365, 32
      %s370 = sadd.s32 %s368, %s369
      %s371 = smul.addr %s370, 8
      %s372 = scalar_lea.vmem %s6, %s371
      %s373 = smul.u32 16, %s22
      %v375 = vld [vmem:[%s341] sm:$0xf]
      %v376 = vld [vmem:[%s341 + $0x4] sm:$0xf]
      %v377 = vld [vmem:[%s341 + $0x8] sm:$0x1]
      %v378 = vld [vmem:[%s341 + $0xc] sm:$0xf]
      %v379 = vld [vmem:[%s341 + $0x10] sm:$0xf]
      %v380 = vld [vmem:[%s341 + $0x14] sm:$0x1]
      %v381 = vld [vmem:[%s341 + $0x18] sm:$0xf]
      %v382 = vld [vmem:[%s341 + $0x1c] sm:$0xf]
      %v383 = vld [vmem:[%s341 + $0x20] sm:$0x1]
      %v384 = vld [vmem:[%s341 + $0x24] sm:$0xf]
      %v385 = vld [vmem:[%s341 + $0x28] sm:$0xf]
      %v386 = vld [vmem:[%s341 + $0x2c] sm:$0x1]
      %v387 = vld [vmem:[%s341 + $0x30] sm:$0xf]
      %v388 = vld [vmem:[%s341 + $0x34] sm:$0xf]
      %v389 = vld [vmem:[%s341 + $0x38] sm:$0x1]
      %v390 = vld [vmem:[%s341 + $0x3c] sm:$0xf]
      %v391 = vld [vmem:[%s341 + $0x40] sm:$0xf]
      %v392 = vld [vmem:[%s341 + $0x44] sm:$0x1]
      %v393 = vld [vmem:[%s341 + $0x48] sm:$0xf]
      %v394 = vld [vmem:[%s341 + $0x4c] sm:$0xf]
      %v395 = vld [vmem:[%s341 + $0x50] sm:$0x1]
      %v396 = vld [vmem:[%s341 + $0x54] sm:$0xf]
      %v397 = vld [vmem:[%s341 + $0x58] sm:$0xf]
      %v398 = vld [vmem:[%s341 + $0x5c] sm:$0x1]
      %v399 = vld [vmem:[%s341 + $0x60] sm:$0xf]
      %v400 = vld [vmem:[%s341 + $0x64] sm:$0xf]
      %v401 = vld [vmem:[%s341 + $0x68] sm:$0x1]
      %v402 = vld [vmem:[%s341 + $0x6c] sm:$0xf]
      %v403 = vld [vmem:[%s341 + $0x70] sm:$0xf]
      %v404 = vld [vmem:[%s341 + $0x74] sm:$0x1]
      %v405 = vld [vmem:[%s341 + $0x78] sm:$0xf]
      %v406 = vld [vmem:[%s341 + $0x7c] sm:$0xf]
      %v407 = vld [vmem:[%s341 + $0x80] sm:$0x1]
      %v408 = vld [vmem:[%s341 + $0x84] sm:$0xf]
      %v409 = vld [vmem:[%s341 + $0x88] sm:$0xf]
      %v410 = vld [vmem:[%s341 + $0x8c] sm:$0x1]
      %v411 = vld [vmem:[%s341 + $0x90] sm:$0xf]
      %v412 = vld [vmem:[%s341 + $0x94] sm:$0xf]
      %v413 = vld [vmem:[%s341 + $0x98] sm:$0x1]
      %v414 = vld [vmem:[%s341 + $0x9c] sm:$0xf]
      %v415 = vld [vmem:[%s341 + $0xa0] sm:$0xf]
      %v416 = vld [vmem:[%s341 + $0xa4] sm:$0x1]
      %v417 = vld [vmem:[%s341 + $0xa8] sm:$0xf]
      %v418 = vld [vmem:[%s341 + $0xac] sm:$0xf]
      %v419 = vld [vmem:[%s341 + $0xb0] sm:$0x1]
      %v420 = vld [vmem:[%s341 + $0xb4] sm:$0xf]
      %v421 = vld [vmem:[%s341 + $0xb8] sm:$0xf]
      %v422 = vld [vmem:[%s341 + $0xbc] sm:$0x1]
      %v423 = vld [vmem:[%s359] sm:$0xf]
      %v424 = vld [vmem:[%s359 + $0x4] sm:$0xf]
      %v425 = vld [vmem:[%s359 + $0x8] sm:$0x1]
      %v426 = vld [vmem:[%s359 + $0xc] sm:$0xf]
      %v427 = vld [vmem:[%s359 + $0x10] sm:$0xf]
      %v428 = vld [vmem:[%s359 + $0x14] sm:$0x1]
      %v429 = vld [vmem:[%s359 + $0x18] sm:$0xf]
      %v430 = vld [vmem:[%s359 + $0x1c] sm:$0xf]
      %v431 = vld [vmem:[%s359 + $0x20] sm:$0x1]
      %v432 = vld [vmem:[%s359 + $0x24] sm:$0xf]
      %v433 = vld [vmem:[%s359 + $0x28] sm:$0xf]
      %v434 = vld [vmem:[%s359 + $0x2c] sm:$0x1]
      %v435 = vld [vmem:[%s2] sm:$0xf]
      %v436 = vld [vmem:[%s2 + $0x4] sm:$0xf]
      %v437 = vld [vmem:[%s2 + $0x8] sm:$0xf]
      %v438 = vld [vmem:[%s2 + $0xc] sm:$0xf]
      %v439 = vld [vmem:[%s2 + $0x10] sm:$0xf]
      %v440 = vld [vmem:[%s2 + $0x14] sm:$0xf]
      %v441 = vld [vmem:[%s2 + $0x18] sm:$0xf]
      %v442 = vld [vmem:[%s2 + $0x1c] sm:$0xf]
      %v443 = vld [vmem:[%s2 + $0x20] sm:$0xf]
      %v444 = vld [vmem:[%s2 + $0x24] sm:$0xf]
      %v445 = vld [vmem:[%s2 + $0x28] sm:$0xf]
      %v446 = vld [vmem:[%s2 + $0x2c] sm:$0xf]
      %v447 = vld [vmem:[%s2 + $0x30] sm:$0xf]
      %v448 = vld [vmem:[%s2 + $0x34] sm:$0xf]
      %v449 = vld [vmem:[%s2 + $0x38] sm:$0xf]
      %v450 = vld [vmem:[%s2 + $0x3c] sm:$0xf]
      %v451 = vld [vmem:[%s2 + $0x40] sm:$0xf]
      %v452 = vld [vmem:[%s2 + $0x44] sm:$0xf]
      %v453 = vld [vmem:[%s2 + $0x48] sm:$0xf]
      %v454 = vld [vmem:[%s2 + $0x4c] sm:$0xf]
      %v455 = vld [vmem:[%s2 + $0x50] sm:$0xf]
      %v456 = vld [vmem:[%s2 + $0x54] sm:$0xf]
      %v457 = vld [vmem:[%s2 + $0x58] sm:$0xf]
      %v458 = vld [vmem:[%s2 + $0x5c] sm:$0xf]
      %v459 = vld [vmem:[%s2 + $0x60] sm:$0xf]
      %v460 = vld [vmem:[%s2 + $0x64] sm:$0xf]
      %v461 = vld [vmem:[%s2 + $0x68] sm:$0xf]
      %v462 = vld [vmem:[%s2 + $0x6c] sm:$0xf]
      %v463 = vld [vmem:[%s2 + $0x70] sm:$0xf]
      %v464 = vld [vmem:[%s2 + $0x74] sm:$0xf]
      %v465 = vld [vmem:[%s2 + $0x78] sm:$0xf]
      %v466 = vld [vmem:[%s2 + $0x7c] sm:$0xf]
      %v467 = vld [vmem:[%s2 + $0x80] sm:$0xf]
      %v468 = vld [vmem:[%s2 + $0x84] sm:$0xf]
      %v469 = vld [vmem:[%s2 + $0x88] sm:$0xf]
      %v470 = vld [vmem:[%s2 + $0x8c] sm:$0xf]
      %v471 = vld [vmem:[%s2 + $0x90] sm:$0xf]
      %v472 = vld [vmem:[%s2 + $0x94] sm:$0xf]
      %v473 = vld [vmem:[%s2 + $0x98] sm:$0xf]
      %v474 = vld [vmem:[%s2 + $0x9c] sm:$0xf]
      %v475 = vld [vmem:[%s2 + $0xa0] sm:$0xf]
      %v476 = vld [vmem:[%s2 + $0xa4] sm:$0xf]
      %v477 = vld [vmem:[%s2 + $0xa8] sm:$0xf]
      %v478 = vld [vmem:[%s2 + $0xac] sm:$0xf]
      %v479 = vld [vmem:[%s2 + $0xb0] sm:$0xf]
      %v480 = vld [vmem:[%s2 + $0xb4] sm:$0xf]
      %v481 = vld [vmem:[%s2 + $0xb8] sm:$0xf]
      %v482 = vld [vmem:[%s2 + $0xbc] sm:$0xf]
      %v483 = vld [vmem:[%s2 + $0xc0] sm:$0xf]
      %v484 = vld [vmem:[%s2 + $0xc4] sm:$0xf]
      %v485 = vld [vmem:[%s2 + $0xc8] sm:$0xf]
      %v486 = vld [vmem:[%s2 + $0xcc] sm:$0xf]
      %v487 = vld [vmem:[%s2 + $0xd0] sm:$0xf]
      %v488 = vld [vmem:[%s2 + $0xd4] sm:$0xf]
      %v489 = vld [vmem:[%s2 + $0xd8] sm:$0xf]
      %v490 = vld [vmem:[%s2 + $0xdc] sm:$0xf]
      %v491 = vld [vmem:[%s2 + $0xe0] sm:$0xf]
      %v492 = vld [vmem:[%s2 + $0xe4] sm:$0xf]
      %v493 = vld [vmem:[%s2 + $0xe8] sm:$0xf]
      %v494 = vld [vmem:[%s2 + $0xec] sm:$0xf]
      %v495 = vld [vmem:[%s2 + $0xf0] sm:$0xf]
      %v496 = vld [vmem:[%s2 + $0xf4] sm:$0xf]
      %v497 = vld [vmem:[%s2 + $0xf8] sm:$0xf]
      %v498 = vld [vmem:[%s2 + $0xfc] sm:$0xf]
      %v499 = vld [vmem:[%s2 + $0x100] sm:$0xf]
      %v500 = vld [vmem:[%s2 + $0x104] sm:$0xf]
      %v501 = vld [vmem:[%s2 + $0x108] sm:$0xf]
      %v502 = vld [vmem:[%s2 + $0x10c] sm:$0xf]
      %v503 = vld [vmem:[%s2 + $0x110] sm:$0xf]
      %v504 = vld [vmem:[%s2 + $0x114] sm:$0xf]
      %v505 = vld [vmem:[%s2 + $0x118] sm:$0xf]
      %v506 = vld [vmem:[%s2 + $0x11c] sm:$0xf]
      %v507 = vld [vmem:[%s2 + $0x120] sm:$0xf]
      %v508 = vld [vmem:[%s2 + $0x124] sm:$0xf]
      %v509 = vld [vmem:[%s2 + $0x128] sm:$0xf]
      %v510 = vld [vmem:[%s2 + $0x12c] sm:$0xf]
      %v511 = vld [vmem:[%s2 + $0x130] sm:$0xf]
      %v512 = vld [vmem:[%s2 + $0x134] sm:$0xf]
      %v513 = vld [vmem:[%s2 + $0x138] sm:$0xf]
      %v514 = vld [vmem:[%s2 + $0x13c] sm:$0xf]
      %v515 = vld [vmem:[%s2 + $0x140] sm:$0xf]
      %v516 = vld [vmem:[%s2 + $0x144] sm:$0xf]
      %v517 = vld [vmem:[%s2 + $0x148] sm:$0xf]
      %v518 = vld [vmem:[%s2 + $0x14c] sm:$0xf]
      %v519 = vld [vmem:[%s2 + $0x150] sm:$0xf]
      %v520 = vld [vmem:[%s2 + $0x154] sm:$0xf]
      %v521 = vld [vmem:[%s2 + $0x158] sm:$0xf]
      %v522 = vld [vmem:[%s2 + $0x15c] sm:$0xf]
      %v523 = vld [vmem:[%s2 + $0x160] sm:$0xf]
      %v524 = vld [vmem:[%s2 + $0x164] sm:$0xf]
      %v525 = vld [vmem:[%s2 + $0x168] sm:$0xf]
      %v526 = vld [vmem:[%s2 + $0x16c] sm:$0xf]
      %v527 = vld [vmem:[%s2 + $0x170] sm:$0xf]
      %v528 = vld [vmem:[%s2 + $0x174] sm:$0xf]
      %v529 = vld [vmem:[%s2 + $0x178] sm:$0xf]
      %v530 = vld [vmem:[%s2 + $0x17c] sm:$0xf]
      %v531 = vld [vmem:[%s2 + $0x180] sm:$0xf]
      %v532 = vld [vmem:[%s2 + $0x184] sm:$0xf]
      %v533 = vld [vmem:[%s2 + $0x188] sm:$0xf]
      %v534 = vld [vmem:[%s2 + $0x18c] sm:$0xf]
      %v535 = vld [vmem:[%s2 + $0x190] sm:$0xf]
      %v536 = vld [vmem:[%s2 + $0x194] sm:$0xf]
      %v537 = vld [vmem:[%s2 + $0x198] sm:$0xf]
      %v538 = vld [vmem:[%s2 + $0x19c] sm:$0xf]
      %v539 = vld [vmem:[%s2 + $0x1a0] sm:$0xf]
      %v540 = vld [vmem:[%s2 + $0x1a4] sm:$0xf]
      %v541 = vld [vmem:[%s2 + $0x1a8] sm:$0xf]
      %v542 = vld [vmem:[%s2 + $0x1ac] sm:$0xf]
      %v543 = vld [vmem:[%s2 + $0x1b0] sm:$0xf]
      %v544 = vld [vmem:[%s2 + $0x1b4] sm:$0xf]
      %v545 = vld [vmem:[%s2 + $0x1b8] sm:$0xf]
      %v546 = vld [vmem:[%s2 + $0x1bc] sm:$0xf]
      %v547 = vld [vmem:[%s2 + $0x1c0] sm:$0xf]
      %v548 = vld [vmem:[%s2 + $0x1c4] sm:$0xf]
      %v549 = vld [vmem:[%s2 + $0x1c8] sm:$0xf]
      %v550 = vld [vmem:[%s2 + $0x1cc] sm:$0xf]
      %v551 = vld [vmem:[%s2 + $0x1d0] sm:$0xf]
      %v552 = vld [vmem:[%s2 + $0x1d4] sm:$0xf]
      %v553 = vld [vmem:[%s2 + $0x1d8] sm:$0xf]
      %v554 = vld [vmem:[%s2 + $0x1dc] sm:$0xf]
      %v555 = vld [vmem:[%s2 + $0x1e0] sm:$0xf]
      %v556 = vld [vmem:[%s2 + $0x1e4] sm:$0xf]
      %v557 = vld [vmem:[%s2 + $0x1e8] sm:$0xf]
      %v558 = vld [vmem:[%s2 + $0x1ec] sm:$0xf]
      %v559 = vld [vmem:[%s2 + $0x1f0] sm:$0xf]
      %v560 = vld [vmem:[%s2 + $0x1f4] sm:$0xf]
      %v561 = vld [vmem:[%s2 + $0x1f8] sm:$0xf]
      %v562 = vld [vmem:[%s2 + $0x1fc] sm:$0xf]
      %v563 = vld [vmem:[%s2 + $0x200] sm:$0xf]
      %v564 = vld [vmem:[%s2 + $0x204] sm:$0xf]
      %v565 = vld [vmem:[%s2 + $0x208] sm:$0xf]
      %v566 = vld [vmem:[%s2 + $0x20c] sm:$0xf]
      %v567 = vld [vmem:[%s2 + $0x210] sm:$0xf]
      %v568 = vld [vmem:[%s2 + $0x214] sm:$0xf]
      %v569 = vld [vmem:[%s2 + $0x218] sm:$0xf]
      %v570 = vld [vmem:[%s2 + $0x21c] sm:$0xf]
      %v571 = vld [vmem:[%s2 + $0x220] sm:$0xf]
      %v572 = vld [vmem:[%s2 + $0x224] sm:$0xf]
      %v573 = vld [vmem:[%s2 + $0x228] sm:$0xf]
      %v574 = vld [vmem:[%s2 + $0x22c] sm:$0xf]
      %v575 = vld [vmem:[%s2 + $0x230] sm:$0xf]
      %v576 = vld [vmem:[%s2 + $0x234] sm:$0xf]
      %v577 = vld [vmem:[%s2 + $0x238] sm:$0xf]
      %v578 = vld [vmem:[%s2 + $0x23c] sm:$0xf]
      %v633 = vunpack.c.l.b16 %v375
      %v634 = vunpack.c.l.b16 %v376
      %v635 = vunpack.c.l.b16 %v377
      %v636 = vunpack.c.l.b16 %v378
      %v637 = vunpack.c.l.b16 %v379
      %v638 = vunpack.c.l.b16 %v380
      %v639 = vunpack.c.l.b16 %v381
      %v640 = vunpack.c.l.b16 %v382
      %v641 = vunpack.c.l.b16 %v383
      %v642 = vunpack.c.l.b16 %v384
      %v643 = vunpack.c.l.b16 %v385
      %v644 = vunpack.c.l.b16 %v386
      %v645 = vunpack.c.l.b16 %v387
      %v646 = vunpack.c.l.b16 %v388
      %v647 = vunpack.c.l.b16 %v389
      %v648 = vunpack.c.l.b16 %v390
      %v649 = vunpack.c.l.b16 %v391
      %v650 = vunpack.c.l.b16 %v392
      %v651 = vunpack.c.l.b16 %v393
      %v652 = vunpack.c.l.b16 %v394
      %v653 = vunpack.c.l.b16 %v395
      %v654 = vunpack.c.l.b16 %v396
      %v655 = vunpack.c.l.b16 %v397
      %v656 = vunpack.c.l.b16 %v398
      %v657 = vunpack.c.l.b16 %v399
      %v658 = vunpack.c.l.b16 %v400
      %v659 = vunpack.c.l.b16 %v401
      %v660 = vunpack.c.l.b16 %v402
      %v661 = vunpack.c.l.b16 %v403
      %v662 = vunpack.c.l.b16 %v404
      %v663 = vunpack.c.l.b16 %v405
      %v664 = vunpack.c.l.b16 %v406
      %v665 = vunpack.c.l.b16 %v407
      %v666 = vunpack.c.l.b16 %v408
      %v667 = vunpack.c.l.b16 %v409
      %v668 = vunpack.c.l.b16 %v410
      %v669 = vunpack.c.l.b16 %v411
      %v670 = vunpack.c.l.b16 %v412
      %v671 = vunpack.c.l.b16 %v413
      %v672 = vunpack.c.l.b16 %v414
      %v673 = vunpack.c.l.b16 %v415
      %v674 = vunpack.c.l.b16 %v416
      %v675 = vunpack.c.l.b16 %v417
      %v676 = vunpack.c.l.b16 %v418
      %v677 = vunpack.c.l.b16 %v419
      %v678 = vunpack.c.l.b16 %v420
      %v679 = vunpack.c.l.b16 %v421
      %v680 = vunpack.c.l.b16 %v422
      %v681 = vunpack.c.l.b16 %v423
      %v682 = vunpack.c.l.b16 %v424
      %v683 = vunpack.c.l.b16 %v425
      %v684 = vunpack.c.l.b16 %v426
      %v685 = vunpack.c.l.b16 %v427
      %v686 = vunpack.c.l.b16 %v428
      %v687 = vpack.c.b16 %v634, %v633
      %v688 = vpack.c.b16 %v635, %v635
      %v689 = vpack.c.b16 %v637, %v636
      %v690 = vpack.c.b16 %v638, %v638
      %v691 = vpack.c.b16 %v640, %v639
      %v692 = vpack.c.b16 %v641, %v641
      %v693 = vpack.c.b16 %v643, %v642
      %v694 = vpack.c.b16 %v644, %v644
      %v695 = vpack.c.b16 %v646, %v645
      %v696 = vpack.c.b16 %v647, %v647
      %v697 = vpack.c.b16 %v649, %v648
      %v698 = vpack.c.b16 %v650, %v650
      %v699 = vpack.c.b16 %v652, %v651
      %v700 = vpack.c.b16 %v653, %v653
      %v701 = vpack.c.b16 %v655, %v654
      %v702 = vpack.c.b16 %v656, %v656
      %v703 = vpack.c.b16 %v658, %v657
      %v704 = vpack.c.b16 %v659, %v659
      %v705 = vpack.c.b16 %v661, %v660
      %v706 = vpack.c.b16 %v662, %v662
      %v707 = vpack.c.b16 %v664, %v663
      %v708 = vpack.c.b16 %v665, %v665
      %v709 = vpack.c.b16 %v667, %v666
      %v710 = vpack.c.b16 %v668, %v668
      %v711 = vpack.c.b16 %v670, %v669
      %v712 = vpack.c.b16 %v671, %v671
      %v713 = vpack.c.b16 %v673, %v672
      %v714 = vpack.c.b16 %v674, %v674
      %v715 = vpack.c.b16 %v676, %v675
      %v716 = vpack.c.b16 %v677, %v677
      %v717 = vpack.c.b16 %v679, %v678
      %v718 = vpack.c.b16 %v680, %v680
      %v719 = vpack.c.b16 %v682, %v681
      %v720 = vpack.c.b16 %v683, %v683
      %v721 = vpack.c.b16 %v685, %v684
      %v722 = vpack.c.b16 %v686, %v686
      %v744 = vunpack.c.l.b16 %v429
      %v745 = vunpack.c.l.b16 %v430
      %v746 = vunpack.c.l.b16 %v431
      %v747 = vpack.c.b16 %v745, %v744
      %v748 = vpack.c.b16 %v746, %v746
      %v753 = vunpack.c.l.b16 %v432
      %v754 = vunpack.c.l.b16 %v433
      %v755 = vunpack.c.l.b16 %v434
      %v756 = vpack.c.b16 %v754, %v753
      %v757 = vpack.c.b16 %v755, %v755
      %vm759 = vsmask.f32 7424
      %v761 = vshrl.u32 %v687, 16
      %v763 = vshll.u32 %v687, 16
      %v765 = vrot.slane %v763, 1
      %v766 = vor.u32 %v761, %v765
      %v768 = vshll.u32 %v688, 16
      %v770 = vrot.slane %v768, 1
      %v771 = vsel %vm759, %v766, %v770
      %v773 = vshrl.u32 %v689, 16
      %v775 = vshll.u32 %v689, 16
      %v777 = vrot.slane %v775, 1
      %v778 = vor.u32 %v773, %v777
      %v780 = vshll.u32 %v690, 16
      %v782 = vrot.slane %v780, 1
      %v783 = vsel %vm759, %v778, %v782
      %v785 = vshrl.u32 %v691, 16
      %v787 = vshll.u32 %v691, 16
      %v789 = vrot.slane %v787, 1
      %v790 = vor.u32 %v785, %v789
      %v792 = vshll.u32 %v692, 16
      %v794 = vrot.slane %v792, 1
      %v795 = vsel %vm759, %v790, %v794
      %v797 = vshrl.u32 %v693, 16
      %v799 = vshll.u32 %v693, 16
      %v801 = vrot.slane %v799, 1
      %v802 = vor.u32 %v797, %v801
      %v804 = vshll.u32 %v694, 16
      %v806 = vrot.slane %v804, 1
      %v807 = vsel %vm759, %v802, %v806
      %v809 = vshrl.u32 %v695, 16
      %v811 = vshll.u32 %v695, 16
      %v813 = vrot.slane %v811, 1
      %v814 = vor.u32 %v809, %v813
      %v816 = vshll.u32 %v696, 16
      %v818 = vrot.slane %v816, 1
      %v819 = vsel %vm759, %v814, %v818
      %v821 = vshrl.u32 %v697, 16
      %v823 = vshll.u32 %v697, 16
      %v825 = vrot.slane %v823, 1
      %v826 = vor.u32 %v821, %v825
      %v828 = vshll.u32 %v698, 16
      %v830 = vrot.slane %v828, 1
      %v831 = vsel %vm759, %v826, %v830
      %v833 = vshrl.u32 %v699, 16
      %v835 = vshll.u32 %v699, 16
      %v837 = vrot.slane %v835, 1
      %v838 = vor.u32 %v833, %v837
      %v840 = vshll.u32 %v700, 16
      %v842 = vrot.slane %v840, 1
      %v843 = vsel %vm759, %v838, %v842
      %v845 = vshrl.u32 %v701, 16
      %v847 = vshll.u32 %v701, 16
      %v849 = vrot.slane %v847, 1
      %v850 = vor.u32 %v845, %v849
      %v852 = vshll.u32 %v702, 16
      %v854 = vrot.slane %v852, 1
      %v855 = vsel %vm759, %v850, %v854
      %v857 = vshrl.u32 %v703, 16
      %v859 = vshll.u32 %v703, 16
      %v861 = vrot.slane %v859, 1
      %v862 = vor.u32 %v857, %v861
      %v864 = vshll.u32 %v704, 16
      %v866 = vrot.slane %v864, 1
      %v867 = vsel %vm759, %v862, %v866
      %v869 = vshrl.u32 %v705, 16
      %v871 = vshll.u32 %v705, 16
      %v873 = vrot.slane %v871, 1
      %v874 = vor.u32 %v869, %v873
      %v876 = vshll.u32 %v706, 16
      %v878 = vrot.slane %v876, 1
      %v879 = vsel %vm759, %v874, %v878
      %v881 = vshrl.u32 %v707, 16
      %v883 = vshll.u32 %v707, 16
      %v885 = vrot.slane %v883, 1
      %v886 = vor.u32 %v881, %v885
      %v888 = vshll.u32 %v708, 16
      %v890 = vrot.slane %v888, 1
      %v891 = vsel %vm759, %v886, %v890
      %v893 = vshrl.u32 %v709, 16
      %v895 = vshll.u32 %v709, 16
      %v897 = vrot.slane %v895, 1
      %v898 = vor.u32 %v893, %v897
      %v900 = vshll.u32 %v710, 16
      %v902 = vrot.slane %v900, 1
      %v903 = vsel %vm759, %v898, %v902
      %v905 = vshrl.u32 %v711, 16
      %v907 = vshll.u32 %v711, 16
      %v909 = vrot.slane %v907, 1
      %v910 = vor.u32 %v905, %v909
      %v912 = vshll.u32 %v712, 16
      %v914 = vrot.slane %v912, 1
      %v915 = vsel %vm759, %v910, %v914
      %v917 = vshrl.u32 %v713, 16
      %v919 = vshll.u32 %v713, 16
      %v921 = vrot.slane %v919, 1
      %v922 = vor.u32 %v917, %v921
      %v924 = vshll.u32 %v714, 16
      %v926 = vrot.slane %v924, 1
      %v927 = vsel %vm759, %v922, %v926
      %v929 = vshrl.u32 %v715, 16
      %v931 = vshll.u32 %v715, 16
      %v933 = vrot.slane %v931, 1
      %v934 = vor.u32 %v929, %v933
      %v936 = vshll.u32 %v716, 16
      %v938 = vrot.slane %v936, 1
      %v939 = vsel %vm759, %v934, %v938
      %v941 = vshrl.u32 %v717, 16
      %v943 = vshll.u32 %v717, 16
      %v945 = vrot.slane %v943, 1
      %v946 = vor.u32 %v941, %v945
      %v948 = vshll.u32 %v718, 16
      %v950 = vrot.slane %v948, 1
      %v951 = vsel %vm759, %v946, %v950
      %v953 = vshrl.u32 %v719, 16
      %v955 = vshll.u32 %v719, 16
      %v957 = vrot.slane %v955, 1
      %v958 = vor.u32 %v953, %v957
      %v960 = vshll.u32 %v720, 16
      %v962 = vrot.slane %v960, 1
      %v963 = vsel %vm759, %v958, %v962
      %v965 = vshrl.u32 %v721, 16
      %v967 = vshll.u32 %v721, 16
      %v969 = vrot.slane %v967, 1
      %v970 = vor.u32 %v965, %v969
      %v972 = vshll.u32 %v722, 16
      %v974 = vrot.slane %v972, 1
      %v975 = vsel %vm759, %v970, %v974
      %v977 = vshrl.u32 %v747, 16
      %v979 = vshll.u32 %v747, 16
      %v981 = vrot.slane %v979, 1
      %v982 = vor.u32 %v977, %v981
      %v984 = vshll.u32 %v748, 16
      %v986 = vrot.slane %v984, 1
      %v987 = vsel %vm759, %v982, %v986
      %v989 = vshrl.u32 %v756, 16
      %v991 = vshll.u32 %v756, 16
      %v993 = vrot.slane %v991, 1
      %v994 = vor.u32 %v989, %v993
      %v996 = vshll.u32 %v757, 16
      %v998 = vrot.slane %v996, 1
      %v999 = vsel %vm759, %v994, %v998
      %v1068 = vunpack.c.l.b16 %v483
      %v1069 = vunpack.c.l.b16 %v484
      %v1070 = vunpack.c.l.b16 %v485
      %v1071 = vunpack.c.l.b16 %v486
      %v1072 = vunpack.c.l.b16 %v487
      %v1073 = vunpack.c.l.b16 %v488
      %v1074 = vunpack.c.l.b16 %v489
      %v1075 = vunpack.c.l.b16 %v490
      %v1076 = vunpack.c.l.b16 %v491
      %v1077 = vunpack.c.l.b16 %v492
      %v1078 = vunpack.c.l.b16 %v493
      %v1079 = vunpack.c.l.b16 %v494
      %v1080 = vunpack.c.l.b16 %v495
      %v1081 = vunpack.c.l.b16 %v496
      %v1082 = vunpack.c.l.b16 %v497
      %v1083 = vunpack.c.l.b16 %v498
      %v1084 = vunpack.c.l.b16 %v499
      %v1085 = vunpack.c.l.b16 %v500
      %v1086 = vunpack.c.l.b16 %v501
      %v1087 = vunpack.c.l.b16 %v502
      %v1088 = vunpack.c.l.b16 %v503
      %v1089 = vunpack.c.l.b16 %v504
      %v1090 = vunpack.c.l.b16 %v505
      %v1091 = vunpack.c.l.b16 %v506
      %v1092 = vunpack.c.l.b16 %v507
      %v1093 = vunpack.c.l.b16 %v508
      %v1094 = vunpack.c.l.b16 %v509
      %v1095 = vunpack.c.l.b16 %v510
      %v1096 = vunpack.c.l.b16 %v511
      %v1097 = vunpack.c.l.b16 %v512
      %v1098 = vunpack.c.l.b16 %v513
      %v1099 = vunpack.c.l.b16 %v514
      %v1100 = vunpack.c.l.b16 %v515
      %v1101 = vunpack.c.l.b16 %v516
      %v1102 = vunpack.c.l.b16 %v517
      %v1103 = vunpack.c.l.b16 %v518
      %v1104 = vunpack.c.l.b16 %v519
      %v1105 = vunpack.c.l.b16 %v520
      %v1106 = vunpack.c.l.b16 %v521
      %v1107 = vunpack.c.l.b16 %v522
      %v1108 = vunpack.c.l.b16 %v523
      %v1109 = vunpack.c.l.b16 %v524
      %v1110 = vunpack.c.l.b16 %v525
      %v1111 = vunpack.c.l.b16 %v526
      %v1112 = vunpack.c.l.b16 %v527
      %v1113 = vunpack.c.l.b16 %v528
      %v1114 = vunpack.c.l.b16 %v529
      %v1115 = vunpack.c.l.b16 %v530
      %v1116 = vpack.c.b16 %v1069, %v1068
      %v1117 = vpack.c.b16 %v1071, %v1070
      %v1118 = vpack.c.b16 %v1073, %v1072
      %v1119 = vpack.c.b16 %v1075, %v1074
      %v1120 = vpack.c.b16 %v1077, %v1076
      %v1121 = vpack.c.b16 %v1079, %v1078
      %v1122 = vpack.c.b16 %v1081, %v1080
      %v1123 = vpack.c.b16 %v1083, %v1082
      %v1124 = vpack.c.b16 %v1085, %v1084
      %v1125 = vpack.c.b16 %v1087, %v1086
      %v1126 = vpack.c.b16 %v1089, %v1088
      %v1127 = vpack.c.b16 %v1091, %v1090
      %v1128 = vpack.c.b16 %v1093, %v1092
      %v1129 = vpack.c.b16 %v1095, %v1094
      %v1130 = vpack.c.b16 %v1097, %v1096
      %v1131 = vpack.c.b16 %v1099, %v1098
      %v1132 = vpack.c.b16 %v1101, %v1100
      %v1133 = vpack.c.b16 %v1103, %v1102
      %v1134 = vpack.c.b16 %v1105, %v1104
      %v1135 = vpack.c.b16 %v1107, %v1106
      %v1136 = vpack.c.b16 %v1109, %v1108
      %v1137 = vpack.c.b16 %v1111, %v1110
      %v1138 = vpack.c.b16 %v1113, %v1112
      %v1139 = vpack.c.b16 %v1115, %v1114
      %1164 = vmatprep.subr.bf16.mxu0 0
      %1165 = vmatpush1.bf16.msra.mxu0 %v1116
      %1166 = vmatprep.subr.bf16.mxu0 0
      %1167 = vmatpush1.bf16.msra.mxu0 %v1117
      %1168 = vmatprep.subr.bf16.mxu0 0
      %1169 = vmatpush1.bf16.msra.mxu0 %v1118
      %1170 = vmatprep.subr.bf16.mxu0 0
      %1171 = vmatpush1.bf16.msra.mxu0 %v1119
      %1172 = vmatprep.subr.bf16.mxu0 0
      %1173 = vmatpush1.bf16.msra.mxu0 %v1120
      %1174 = vmatprep.subr.bf16.mxu0 0
      %1175 = vmatpush1.bf16.msra.mxu0 %v1121
      %1176 = vmatprep.subr.bf16.mxu0 0
      %1177 = vmatpush1.bf16.msra.mxu0 %v1122
      %1178 = vmatprep.subr.bf16.mxu0 0
      %1179 = vmatpush1.bf16.msra.mxu0 %v1123
      %1180 = vmatprep.subr.bf16.mxu0 0
      %1181 = vmatpush1.bf16.msra.mxu0 %v1124
      %1182 = vmatprep.subr.bf16.mxu0 0
      %1183 = vmatpush1.bf16.msra.mxu0 %v1125
      %1184 = vmatprep.subr.bf16.mxu0 0
      %1185 = vmatpush1.bf16.msra.mxu0 %v1126
      %1186 = vmatprep.subr.bf16.mxu0 0
      %1187 = vmatpush1.bf16.msra.mxu0 %v1127
      %1188 = vmatprep.subr.bf16.mxu0 0
      %1189 = vmatpush1.bf16.msra.mxu0 %v1128
      %1190 = vmatprep.subr.bf16.mxu0 0
      %1191 = vmatpush1.bf16.msra.mxu0 %v1129
      %1192 = vmatprep.subr.bf16.mxu0 0
      %1193 = vmatpush1.bf16.msra.mxu0 %v1130
      %1194 = vmatprep.subr.bf16.mxu0 0
      %1195 = vmatpush1.bf16.msra.mxu0 %v1131
      %1196 = vmatprep.mubr.bf16.mxu0 %v783
      %1197 = vmatmul.mubr.bf16.gmra.mrb[0].mxu0 %v771
      %v1198 = vpop.f32.mrb[0].mxu0
      %v1199 = vadd.f32 0.0, %v1198
      %v1200 = vpop.f32.mrb[0].mxu0
      %v1201 = vpop.f32.mrb[0].mxu0
      %v1202 = vadd.f32 0.0, %v1201
      %v1203 = vpop.f32.mrb[0].mxu0
      %1204 = vmatprep.mubr.bf16.mxu0 %v795
      %1205 = vmatmul.mubr.bf16.gmra.mrb[0].mxu0 %v783
      %v1206 = vpop.f32.mrb[0].mxu0
      %v1207 = vadd.f32 0.0, %v1206
      %v1208 = vpop.f32.mrb[0].mxu0
      %v1209 = vpop.f32.mrb[0].mxu0
      %v1210 = vadd.f32 0.0, %v1209
      %v1211 = vpop.f32.mrb[0].mxu0
      %1212 = vmatprep.mubr.bf16.mxu0 %v807
      %1213 = vmatmul.mubr.bf16.gmra.mrb[0].mxu0 %v795
      %v1214 = vpop.f32.mrb[0].mxu0
      %v1215 = vadd.f32 0.0, %v1214
      %v1216 = vpop.f32.mrb[0].mxu0
      %v1217 = vpop.f32.mrb[0].mxu0
      %v1218 = vadd.f32 0.0, %v1217
      %v1219 = vpop.f32.mrb[0].mxu0
      %1220 = vmatprep.mubr.bf16.mxu0 %v819
      %1221 = vmatmul.mubr.bf16.gmra.mrb[0].mxu0 %v807
      %v1222 = vpop.f32.mrb[0].mxu0
      %v1223 = vadd.f32 0.0, %v1222
      %v1224 = vpop.f32.mrb[0].mxu0
      %v1225 = vpop.f32.mrb[0].mxu0
      %v1226 = vadd.f32 0.0, %v1225
      %v1227 = vpop.f32.mrb[0].mxu0
      %1228 = vmatprep.mubr.bf16.mxu0 %v831
      %1229 = vmatmul.mubr.bf16.gmra.mrb[0].mxu0 %v819
      %v1230 = vpop.f32.mrb[0].mxu0
      %v1231 = vadd.f32 0.0, %v1230
      %v1232 = vpop.f32.mrb[0].mxu0
      %v1233 = vpop.f32.mrb[0].mxu0
      %v1234 = vadd.f32 0.0, %v1233
      %v1235 = vpop.f32.mrb[0].mxu0
      %1236 = vmatprep.mubr.bf16.mxu0 %v843
      %1237 = vmatmul.mubr.bf16.gmra.mrb[0].mxu0 %v831
      %v1238 = vpop.f32.mrb[0].mxu0
      %v1239 = vadd.f32 0.0, %v1238
      %v1240 = vpop.f32.mrb[0].mxu0
      %v1241 = vpop.f32.mrb[0].mxu0
      %v1242 = vadd.f32 0.0, %v1241
      %v1243 = vpop.f32.mrb[0].mxu0
      %1244 = vmatprep.mubr.bf16.mxu0 %v855
      %1245 = vmatmul.mubr.bf16.gmra.mrb[0].mxu0 %v843
      %v1246 = vpop.f32.mrb[0].mxu0
      %v1247 = vadd.f32 0.0, %v1246
      %v1248 = vpop.f32.mrb[0].mxu0
      %v1249 = vpop.f32.mrb[0].mxu0
      %v1250 = vadd.f32 0.0, %v1249
      %v1251 = vpop.f32.mrb[0].mxu0
      %1252 = vmatprep.mubr.bf16.mxu0 %v867
      %1253 = vmatmul.mubr.bf16.gmra.mrb[0].mxu0 %v855
      %v1254 = vpop.f32.mrb[0].mxu0
      %v1255 = vadd.f32 0.0, %v1254
      %v1256 = vpop.f32.mrb[0].mxu0
      %v1257 = vpop.f32.mrb[0].mxu0
      %v1258 = vadd.f32 0.0, %v1257
      %v1259 = vpop.f32.mrb[0].mxu0
      %1260 = vmatprep.mubr.bf16.mxu0 %v879
      %1261 = vmatmul.mubr.bf16.gmra.mrb[0].mxu0 %v867
      %v1262 = vpop.f32.mrb[0].mxu0
      %v1263 = vadd.f32 0.0, %v1262
      %v1264 = vpop.f32.mrb[0].mxu0
      %v1265 = vpop.f32.mrb[0].mxu0
      %v1266 = vadd.f32 0.0, %v1265
      %v1267 = vpop.f32.mrb[0].mxu0
      %1268 = vmatprep.mubr.bf16.mxu0 %v891
      %1269 = vmatmul.mubr.bf16.gmra.mrb[0].mxu0 %v879
      %v1270 = vpop.f32.mrb[0].mxu0
      %v1271 = vadd.f32 0.0, %v1270
      %v1272 = vpop.f32.mrb[0].mxu0
      %v1273 = vpop.f32.mrb[0].mxu0
      %v1274 = vadd.f32 0.0, %v1273
      %v1275 = vpop.f32.mrb[0].mxu0
      %1276 = vmatprep.mubr.bf16.mxu0 %v903
      %1277 = vmatmul.mubr.bf16.gmra.mrb[0].mxu0 %v891
      %v1278 = vpop.f32.mrb[0].mxu0
      %v1279 = vadd.f32 0.0, %v1278
      %v1280 = vpop.f32.mrb[0].mxu0
      %v1281 = vpop.f32.mrb[0].mxu0
      %v1282 = vadd.f32 0.0, %v1281
      %v1283 = vpop.f32.mrb[0].mxu0
      %1284 = vmatprep.mubr.bf16.mxu0 %v915
      %1285 = vmatmul.mubr.bf16.gmra.mrb[0].mxu0 %v903
      %v1286 = vpop.f32.mrb[0].mxu0
      %v1287 = vadd.f32 0.0, %v1286
      %v1288 = vpop.f32.mrb[0].mxu0
      %v1289 = vpop.f32.mrb[0].mxu0
      %v1290 = vadd.f32 0.0, %v1289
      %v1291 = vpop.f32.mrb[0].mxu0
      %1292 = vmatprep.mubr.bf16.mxu0 %v927
      %1293 = vmatmul.mubr.bf16.gmra.mrb[0].mxu0 %v915
      %v1294 = vpop.f32.mrb[0].mxu0
      %v1295 = vadd.f32 0.0, %v1294
      %v1296 = vpop.f32.mrb[0].mxu0
      %v1297 = vpop.f32.mrb[0].mxu0
      %v1298 = vadd.f32 0.0, %v1297
      %v1299 = vpop.f32.mrb[0].mxu0
      %1300 = vmatprep.mubr.bf16.mxu0 %v939
      %1301 = vmatmul.mubr.bf16.gmra.mrb[0].mxu0 %v927
      %v1302 = vpop.f32.mrb[0].mxu0
      %v1303 = vadd.f32 0.0, %v1302
      %v1304 = vpop.f32.mrb[0].mxu0
      %v1305 = vpop.f32.mrb[0].mxu0
      %v1306 = vadd.f32 0.0, %v1305
      %v1307 = vpop.f32.mrb[0].mxu0
      %1308 = vmatprep.mubr.bf16.mxu0 %v951
      %1309 = vmatmul.mubr.bf16.gmra.mrb[0].mxu0 %v939
      %v1310 = vpop.f32.mrb[0].mxu0
      %v1311 = vadd.f32 0.0, %v1310
      %v1312 = vpop.f32.mrb[0].mxu0
      %v1313 = vpop.f32.mrb[0].mxu0
      %v1314 = vadd.f32 0.0, %v1313
      %v1315 = vpop.f32.mrb[0].mxu0
      %1316 = vmatprep.mubr.bf16.mxu0 %v963
      %1317 = vmatmul.mubr.bf16.gmra.mrb[0].mxu0 %v951
      %v1318 = vpop.f32.mrb[0].mxu0
      %v1319 = vadd.f32 0.0, %v1318
      %v1320 = vpop.f32.mrb[0].mxu0
      %v1321 = vpop.f32.mrb[0].mxu0
      %v1322 = vadd.f32 0.0, %v1321
      %v1323 = vpop.f32.mrb[0].mxu0
      %1324 = vmatprep.mubr.bf16.mxu0 %v975
      %1325 = vmatmul.mubr.bf16.gmra.mrb[0].mxu0 %v963
      %v1326 = vpop.f32.mrb[0].mxu0
      %v1327 = vadd.f32 0.0, %v1326
      %v1328 = vpop.f32.mrb[0].mxu0
      %v1329 = vpop.f32.mrb[0].mxu0
      %v1330 = vadd.f32 0.0, %v1329
      %v1331 = vpop.f32.mrb[0].mxu0
      %1332 = vmatprep.mubr.bf16.mxu0 %v987
      %1333 = vmatmul.mubr.bf16.gmra.mrb[0].mxu0 %v975
      %v1334 = vpop.f32.mrb[0].mxu0
      %v1335 = vadd.f32 0.0, %v1334
      %v1336 = vpop.f32.mrb[0].mxu0
      %v1337 = vpop.f32.mrb[0].mxu0
      %v1338 = vadd.f32 0.0, %v1337
      %v1339 = vpop.f32.mrb[0].mxu0
      %1340 = vdwg.mxu0
      %1341 = vmatprep.subr.bf16.mxu0 0
      %1342 = vmatpush1.bf16.msra.mxu0 %v1132
      %1343 = vmatprep.subr.bf16.mxu0 0
      %1344 = vmatpush1.bf16.msra.mxu0 %v1133
      %1345 = vmatprep.subr.bf16.mxu0 0
      %1346 = vmatpush1.bf16.msra.mxu0 %v1134
      %1347 = vmatprep.subr.bf16.mxu0 0
      %1348 = vmatpush1.bf16.msra.mxu0 %v1135
      %1349 = vmatprep.subr.bf16.mxu0 0
      %1350 = vmatpush1.bf16.msra.mxu0 %v1136
      %1351 = vmatprep.subr.bf16.mxu0 0
      %1352 = vmatpush1.bf16.msra.mxu0 %v1137
      %1353 = vmatprep.subr.bf16.mxu0 0
      %1354 = vmatpush1.bf16.msra.mxu0 %v1138
      %1355 = vmatprep.subr.bf16.mxu0 0
      %1356 = vmatpush1.bf16.msra.mxu0 %v1139
      %1357 = vmatprep.subr.bf16.mxu0 0
      %1358 = vmatpush1.bf16.msra.mxu0 0
      %1359 = vmatprep.subr.bf16.mxu0 0
      %1360 = vmatpush1.bf16.msra.mxu0 0
      %1361 = vmatprep.subr.bf16.mxu0 0
      %1362 = vmatpush1.bf16.msra.mxu0 0
      %1363 = vmatprep.subr.bf16.mxu0 0
      %1364 = vmatpush1.bf16.msra.mxu0 0
      %1365 = vmatprep.subr.bf16.mxu0 0
      %1366 = vmatpush1.bf16.msra.mxu0 0
      %1367 = vmatprep.subr.bf16.mxu0 0
      %1368 = vmatpush1.bf16.msra.mxu0 0
      %1369 = vmatprep.subr.bf16.mxu0 0
      %1370 = vmatpush1.bf16.msra.mxu0 0
      %1371 = vmatprep.subr.bf16.mxu0 0
      %1372 = vmatpush1.bf16.msra.mxu0 0
      %1373 = vmatprep.mubr.bf16.mxu0 0
      %1374 = vmatmul.mubr.bf16.gmra.mrb[0].mxu0 %v795
      %v1375 = vpop.f32.mrb[0].mxu0
      %v1376 = vadd.f32 %v1199, %v1375
      %v1377 = vpop.f32.mrb[0].mxu0
      %v1378 = vpop.f32.mrb[0].mxu0
      %v1379 = vadd.f32 %v1202, %v1378
      %v1380 = vpop.f32.mrb[0].mxu0
      %1381 = vmatprep.mubr.bf16.mxu0 0
      %1382 = vmatmul.mubr.bf16.gmra.mrb[0].mxu0 %v807
      %v1383 = vpop.f32.mrb[0].mxu0
      %v1384 = vadd.f32 %v1207, %v1383
      %v1385 = vpop.f32.mrb[0].mxu0
      %v1386 = vpop.f32.mrb[0].mxu0
      %v1387 = vadd.f32 %v1210, %v1386
      %v1388 = vpop.f32.mrb[0].mxu0
      %1389 = vmatprep.mubr.bf16.mxu0 0
      %1390 = vmatmul.mubr.bf16.gmra.mrb[0].mxu0 %v819
      %v1391 = vpop.f32.mrb[0].mxu0
      %v1392 = vadd.f32 %v1215, %v1391
      %v1393 = vpop.f32.mrb[0].mxu0
      %v1394 = vpop.f32.mrb[0].mxu0
      %v1395 = vadd.f32 %v1218, %v1394
      %v1396 = vpop.f32.mrb[0].mxu0
      %1397 = vmatprep.mubr.bf16.mxu0 0
      %1398 = vmatmul.mubr.bf16.gmra.mrb[0].mxu0 %v831
      %v1399 = vpop.f32.mrb[0].mxu0
      %v1400 = vadd.f32 %v1223, %v1399
      %v1401 = vpop.f32.mrb[0].mxu0
      %v1402 = vpop.f32.mrb[0].mxu0
      %v1403 = vadd.f32 %v1226, %v1402
      %v1404 = vpop.f32.mrb[0].mxu0
      %1405 = vmatprep.mubr.bf16.mxu0 0
      %1406 = vmatmul.mubr.bf16.gmra.mrb[0].mxu0 %v843
      %v1407 = vpop.f32.mrb[0].mxu0
      %v1408 = vadd.f32 %v1231, %v1407
      %v1409 = vpop.f32.mrb[0].mxu0
      %v1410 = vpop.f32.mrb[0].mxu0
      %v1411 = vadd.f32 %v1234, %v1410
      %v1412 = vpop.f32.mrb[0].mxu0
      %1413 = vmatprep.mubr.bf16.mxu0 0
      %1414 = vmatmul.mubr.bf16.gmra.mrb[0].mxu0 %v855
      %v1415 = vpop.f32.mrb[0].mxu0
      %v1416 = vadd.f32 %v1239, %v1415
      %v1417 = vpop.f32.mrb[0].mxu0
      %v1418 = vpop.f32.mrb[0].mxu0
      %v1419 = vadd.f32 %v1242, %v1418
      %v1420 = vpop.f32.mrb[0].mxu0
      %1421 = vmatprep.mubr.bf16.mxu0 0
      %1422 = vmatmul.mubr.bf16.gmra.mrb[0].mxu0 %v867
      %v1423 = vpop.f32.mrb[0].mxu0
      %v1424 = vadd.f32 %v1247, %v1423
      %v1425 = vpop.f32.mrb[0].mxu0
      %v1426 = vpop.f32.mrb[0].mxu0
      %v1427 = vadd.f32 %v1250, %v1426
      %v1428 = vpop.f32.mrb[0].mxu0
      %1429 = vmatprep.mubr.bf16.mxu0 0
      %1430 = vmatmul.mubr.bf16.gmra.mrb[0].mxu0 %v879
      %v1431 = vpop.f32.mrb[0].mxu0
      %v1432 = vadd.f32 %v1255, %v1431
      %v1433 = vpop.f32.mrb[0].mxu0
      %v1434 = vpop.f32.mrb[0].mxu0
      %v1435 = vadd.f32 %v1258, %v1434
      %v1436 = vpop.f32.mrb[0].mxu0
      %1437 = vmatprep.mubr.bf16.mxu0 0
      %1438 = vmatmul.mubr.bf16.gmra.mrb[0].mxu0 %v891
      %v1439 = vpop.f32.mrb[0].mxu0
      %v1440 = vadd.f32 %v1263, %v1439
      %v1441 = vpop.f32.mrb[0].mxu0
      %v1442 = vpop.f32.mrb[0].mxu0
      %v1443 = vadd.f32 %v1266, %v1442
      %v1444 = vpop.f32.mrb[0].mxu0
      %1445 = vmatprep.mubr.bf16.mxu0 0
      %1446 = vmatmul.mubr.bf16.gmra.mrb[0].mxu0 %v903
      %v1447 = vpop.f32.mrb[0].mxu0
      %v1448 = vadd.f32 %v1271, %v1447
      %v1449 = vpop.f32.mrb[0].mxu0
      %v1450 = vpop.f32.mrb[0].mxu0
      %v1451 = vadd.f32 %v1274, %v1450
      %v1452 = vpop.f32.mrb[0].mxu0
      %1453 = vmatprep.mubr.bf16.mxu0 0
      %1454 = vmatmul.mubr.bf16.gmra.mrb[0].mxu0 %v915
      %v1455 = vpop.f32.mrb[0].mxu0
      %v1456 = vadd.f32 %v1279, %v1455
      %v1457 = vpop.f32.mrb[0].mxu0
      %v1458 = vpop.f32.mrb[0].mxu0
      %v1459 = vadd.f32 %v1282, %v1458
      %v1460 = vpop.f32.mrb[0].mxu0
      %1461 = vmatprep.mubr.bf16.mxu0 0
      %1462 = vmatmul.mubr.bf16.gmra.mrb[0].mxu0 %v927
      %v1463 = vpop.f32.mrb[0].mxu0
      %v1464 = vadd.f32 %v1287, %v1463
      %v1465 = vpop.f32.mrb[0].mxu0
      %v1466 = vpop.f32.mrb[0].mxu0
      %v1467 = vadd.f32 %v1290, %v1466
      %v1468 = vpop.f32.mrb[0].mxu0
      %1469 = vmatprep.mubr.bf16.mxu0 0
      %1470 = vmatmul.mubr.bf16.gmra.mrb[0].mxu0 %v939
      %v1471 = vpop.f32.mrb[0].mxu0
      %v1472 = vadd.f32 %v1295, %v1471
      %v1473 = vpop.f32.mrb[0].mxu0
      %v1474 = vpop.f32.mrb[0].mxu0
      %v1475 = vadd.f32 %v1298, %v1474
      %v1476 = vpop.f32.mrb[0].mxu0
      %1477 = vmatprep.mubr.bf16.mxu0 0
      %1478 = vmatmul.mubr.bf16.gmra.mrb[0].mxu0 %v951
      %v1479 = vpop.f32.mrb[0].mxu0
      %v1480 = vadd.f32 %v1303, %v1479
      %v1481 = vpop.f32.mrb[0].mxu0
      %v1482 = vpop.f32.mrb[0].mxu0
      %v1483 = vadd.f32 %v1306, %v1482
      %v1484 = vpop.f32.mrb[0].mxu0
      %1485 = vmatprep.mubr.bf16.mxu0 0
      %1486 = vmatmul.mubr.bf16.gmra.mrb[0].mxu0 %v963
      %v1487 = vpop.f32.mrb[0].mxu0
      %v1488 = vadd.f32 %v1311, %v1487
      %v1489 = vpop.f32.mrb[0].mxu0
      %v1490 = vpop.f32.mrb[0].mxu0
      %v1491 = vadd.f32 %v1314, %v1490
      %v1492 = vpop.f32.mrb[0].mxu0
      %1493 = vmatprep.mubr.bf16.mxu0 0
      %1494 = vmatmul.mubr.bf16.gmra.mrb[0].mxu0 %v975
      %v1495 = vpop.f32.mrb[0].mxu0
      %v1496 = vadd.f32 %v1319, %v1495
      %v1497 = vpop.f32.mrb[0].mxu0
      %v1498 = vpop.f32.mrb[0].mxu0
      %v1499 = vadd.f32 %v1322, %v1498
      %v1500 = vpop.f32.mrb[0].mxu0
      %1501 = vmatprep.mubr.bf16.mxu0 0
      %1502 = vmatmul.mubr.bf16.gmra.mrb[0].mxu0 %v987
      %v1503 = vpop.f32.mrb[0].mxu0
      %v1504 = vadd.f32 %v1327, %v1503
      %v1505 = vpop.f32.mrb[0].mxu0
      %v1506 = vpop.f32.mrb[0].mxu0
      %v1507 = vadd.f32 %v1330, %v1506
      %v1508 = vpop.f32.mrb[0].mxu0
      %1509 = vmatprep.mubr.bf16.mxu0 0
      %1510 = vmatmul.mubr.bf16.gmra.mrb[0].mxu0 %v999
      %v1511 = vpop.f32.mrb[0].mxu0
      %v1512 = vadd.f32 %v1335, %v1511
      %v1513 = vpop.f32.mrb[0].mxu0
      %v1514 = vpop.f32.mrb[0].mxu0
      %v1515 = vadd.f32 %v1338, %v1514
      %v1516 = vpop.f32.mrb[0].mxu0
      %1517 = vdwg.mxu0
      %v1566 = vunpack.c.l.b16 %v435
      %v1567 = vunpack.c.l.b16 %v436
      %v1568 = vunpack.c.l.b16 %v437
      %v1569 = vunpack.c.l.b16 %v438
      %v1570 = vunpack.c.l.b16 %v439
      %v1571 = vunpack.c.l.b16 %v440
      %v1572 = vunpack.c.l.b16 %v441
      %v1573 = vunpack.c.l.b16 %v442
      %v1574 = vunpack.c.l.b16 %v443
      %v1575 = vunpack.c.l.b16 %v444
      %v1576 = vunpack.c.l.b16 %v445
      %v1577 = vunpack.c.l.b16 %v446
      %v1578 = vunpack.c.l.b16 %v447
      %v1579 = vunpack.c.l.b16 %v448
      %v1580 = vunpack.c.l.b16 %v449
      %v1581 = vunpack.c.l.b16 %v450
      %v1582 = vunpack.c.l.b16 %v451
      %v1583 = vunpack.c.l.b16 %v452
      %v1584 = vunpack.c.l.b16 %v453
      %v1585 = vunpack.c.l.b16 %v454
      %v1586 = vunpack.c.l.b16 %v455
      %v1587 = vunpack.c.l.b16 %v456
      %v1588 = vunpack.c.l.b16 %v457
      %v1589 = vunpack.c.l.b16 %v458
      %v1590 = vunpack.c.l.b16 %v459
      %v1591 = vunpack.c.l.b16 %v460
      %v1592 = vunpack.c.l.b16 %v461
      %v1593 = vunpack.c.l.b16 %v462
      %v1594 = vunpack.c.l.b16 %v463
      %v1595 = vunpack.c.l.b16 %v464
      %v1596 = vunpack.c.l.b16 %v465
      %v1597 = vunpack.c.l.b16 %v466
      %v1598 = vunpack.c.l.b16 %v467
      %v1599 = vunpack.c.l.b16 %v468
      %v1600 = vunpack.c.l.b16 %v469
      %v1601 = vunpack.c.l.b16 %v470
      %v1602 = vunpack.c.l.b16 %v471
      %v1603 = vunpack.c.l.b16 %v472
      %v1604 = vunpack.c.l.b16 %v473
      %v1605 = vunpack.c.l.b16 %v474
      %v1606 = vunpack.c.l.b16 %v475
      %v1607 = vunpack.c.l.b16 %v476
      %v1608 = vunpack.c.l.b16 %v477
      %v1609 = vunpack.c.l.b16 %v478
      %v1610 = vunpack.c.l.b16 %v479
      %v1611 = vunpack.c.l.b16 %v480
      %v1612 = vunpack.c.l.b16 %v481
      %v1613 = vunpack.c.l.b16 %v482
      %v1614 = vpack.c.b16 %v1567, %v1566
      %v1615 = vpack.c.b16 %v1569, %v1568
      %v1616 = vpack.c.b16 %v1571, %v1570
      %v1617 = vpack.c.b16 %v1573, %v1572
      %v1618 = vpack.c.b16 %v1575, %v1574
      %v1619 = vpack.c.b16 %v1577, %v1576
      %v1620 = vpack.c.b16 %v1579, %v1578
      %v1621 = vpack.c.b16 %v1581, %v1580
      %v1622 = vpack.c.b16 %v1583, %v1582
      %v1623 = vpack.c.b16 %v1585, %v1584
      %v1624 = vpack.c.b16 %v1587, %v1586
      %v1625 = vpack.c.b16 %v1589, %v1588
      %v1626 = vpack.c.b16 %v1591, %v1590
      %v1627 = vpack.c.b16 %v1593, %v1592
      %v1628 = vpack.c.b16 %v1595, %v1594
      %v1629 = vpack.c.b16 %v1597, %v1596
      %v1630 = vpack.c.b16 %v1599, %v1598
      %v1631 = vpack.c.b16 %v1601, %v1600
      %v1632 = vpack.c.b16 %v1603, %v1602
      %v1633 = vpack.c.b16 %v1605, %v1604
      %v1634 = vpack.c.b16 %v1607, %v1606
      %v1635 = vpack.c.b16 %v1609, %v1608
      %v1636 = vpack.c.b16 %v1611, %v1610
      %v1637 = vpack.c.b16 %v1613, %v1612
      %1662 = vmatprep.subr.bf16.mxu0 0
      %1663 = vmatpush1.bf16.msra.mxu0 %v1614
      %1664 = vmatprep.subr.bf16.mxu0 0
      %1665 = vmatpush1.bf16.msra.mxu0 %v1615
      %1666 = vmatprep.subr.bf16.mxu0 0
      %1667 = vmatpush1.bf16.msra.mxu0 %v1616
      %1668 = vmatprep.subr.bf16.mxu0 0
      %1669 = vmatpush1.bf16.msra.mxu0 %v1617
      %1670 = vmatprep.subr.bf16.mxu0 0
      %1671 = vmatpush1.bf16.msra.mxu0 %v1618
      %1672 = vmatprep.subr.bf16.mxu0 0
      %1673 = vmatpush1.bf16.msra.mxu0 %v1619
      %1674 = vmatprep.subr.bf16.mxu0 0
      %1675 = vmatpush1.bf16.msra.mxu0 %v1620
      %1676 = vmatprep.subr.bf16.mxu0 0
      %1677 = vmatpush1.bf16.msra.mxu0 %v1621
      %1678 = vmatprep.subr.bf16.mxu0 0
      %1679 = vmatpush1.bf16.msra.mxu0 %v1622
      %1680 = vmatprep.subr.bf16.mxu0 0
      %1681 = vmatpush1.bf16.msra.mxu0 %v1623
      %1682 = vmatprep.subr.bf16.mxu0 0
      %1683 = vmatpush1.bf16.msra.mxu0 %v1624
      %1684 = vmatprep.subr.bf16.mxu0 0
      %1685 = vmatpush1.bf16.msra.mxu0 %v1625
      %1686 = vmatprep.subr.bf16.mxu0 0
      %1687 = vmatpush1.bf16.msra.mxu0 %v1626
      %1688 = vmatprep.subr.bf16.mxu0 0
      %1689 = vmatpush1.bf16.msra.mxu0 %v1627
      %1690 = vmatprep.subr.bf16.mxu0 0
      %1691 = vmatpush1.bf16.msra.mxu0 %v1628
      %1692 = vmatprep.subr.bf16.mxu0 0
      %1693 = vmatpush1.bf16.msra.mxu0 %v1629
      %1694 = vmatprep.mubr.bf16.mxu0 %v689
      %1695 = vmatmul.mubr.bf16.gmra.mrb[0].mxu0 %v687
      %v1696 = vpop.f32.mrb[0].mxu0
      %v1697 = vadd.f32 %v1376, %v1696
      %v1698 = vpop.f32.mrb[0].mxu0
      %v1699 = vpop.f32.mrb[0].mxu0
      %v1700 = vadd.f32 %v1379, %v1699
      %v1701 = vpop.f32.mrb[0].mxu0
      %1702 = vmatprep.mubr.bf16.mxu0 %v691
      %1703 = vmatmul.mubr.bf16.gmra.mrb[0].mxu0 %v689
      %v1704 = vpop.f32.mrb[0].mxu0
      %v1705 = vadd.f32 %v1384, %v1704
      %v1706 = vpop.f32.mrb[0].mxu0
      %v1707 = vpop.f32.mrb[0].mxu0
      %v1708 = vadd.f32 %v1387, %v1707
      %v1709 = vpop.f32.mrb[0].mxu0
      %1710 = vmatprep.mubr.bf16.mxu0 %v693
      %1711 = vmatmul.mubr.bf16.gmra.mrb[0].mxu0 %v691
      %v1712 = vpop.f32.mrb[0].mxu0
      %v1713 = vadd.f32 %v1392, %v1712
      %v1714 = vpop.f32.mrb[0].mxu0
      %v1715 = vpop.f32.mrb[0].mxu0
      %v1716 = vadd.f32 %v1395, %v1715
      %v1717 = vpop.f32.mrb[0].mxu0
      %1718 = vmatprep.mubr.bf16.mxu0 %v695
      %1719 = vmatmul.mubr.bf16.gmra.mrb[0].mxu0 %v693
      %v1720 = vpop.f32.mrb[0].mxu0
      %v1721 = vadd.f32 %v1400, %v1720
      %v1722 = vpop.f32.mrb[0].mxu0
      %v1723 = vpop.f32.mrb[0].mxu0
      %v1724 = vadd.f32 %v1403, %v1723
      %v1725 = vpop.f32.mrb[0].mxu0
      %1726 = vmatprep.mubr.bf16.mxu0 %v697
      %1727 = vmatmul.mubr.bf16.gmra.mrb[0].mxu0 %v695
      %v1728 = vpop.f32.mrb[0].mxu0
      %v1729 = vadd.f32 %v1408, %v1728
      %v1730 = vpop.f32.mrb[0].mxu0
      %v1731 = vpop.f32.mrb[0].mxu0
      %v1732 = vadd.f32 %v1411, %v1731
      %v1733 = vpop.f32.mrb[0].mxu0
      %1734 = vmatprep.mubr.bf16.mxu0 %v699
      %1735 = vmatmul.mubr.bf16.gmra.mrb[0].mxu0 %v697
      %v1736 = vpop.f32.mrb[0].mxu0
      %v1737 = vadd.f32 %v1416, %v1736
      %v1738 = vpop.f32.mrb[0].mxu0
      %v1739 = vpop.f32.mrb[0].mxu0
      %v1740 = vadd.f32 %v1419, %v1739
      %v1741 = vpop.f32.mrb[0].mxu0
      %1742 = vmatprep.mubr.bf16.mxu0 %v701
      %1743 = vmatmul.mubr.bf16.gmra.mrb[0].mxu0 %v699
      %v1744 = vpop.f32.mrb[0].mxu0
      %v1745 = vadd.f32 %v1424, %v1744
      %v1746 = vpop.f32.mrb[0].mxu0
      %v1747 = vpop.f32.mrb[0].mxu0
      %v1748 = vadd.f32 %v1427, %v1747
      %v1749 = vpop.f32.mrb[0].mxu0
      %1750 = vmatprep.mubr.bf16.mxu0 %v703
      %1751 = vmatmul.mubr.bf16.gmra.mrb[0].mxu0 %v701
      %v1752 = vpop.f32.mrb[0].mxu0
      %v1753 = vadd.f32 %v1432, %v1752
      %v1754 = vpop.f32.mrb[0].mxu0
      %v1755 = vpop.f32.mrb[0].mxu0
      %v1756 = vadd.f32 %v1435, %v1755
      %v1757 = vpop.f32.mrb[0].mxu0
      %1758 = vmatprep.mubr.bf16.mxu0 %v705
      %1759 = vmatmul.mubr.bf16.gmra.mrb[0].mxu0 %v703
      %v1760 = vpop.f32.mrb[0].mxu0
      %v1761 = vadd.f32 %v1440, %v1760
      %v1762 = vpop.f32.mrb[0].mxu0
      %v1763 = vpop.f32.mrb[0].mxu0
      %v1764 = vadd.f32 %v1443, %v1763
      %v1765 = vpop.f32.mrb[0].mxu0
      %1766 = vmatprep.mubr.bf16.mxu0 %v707
      %1767 = vmatmul.mubr.bf16.gmra.mrb[0].mxu0 %v705
      %v1768 = vpop.f32.mrb[0].mxu0
      %v1769 = vadd.f32 %v1448, %v1768
      %v1770 = vpop.f32.mrb[0].mxu0
      %v1771 = vpop.f32.mrb[0].mxu0
      %v1772 = vadd.f32 %v1451, %v1771
      %v1773 = vpop.f32.mrb[0].mxu0
      %1774 = vmatprep.mubr.bf16.mxu0 %v709
      %1775 = vmatmul.mubr.bf16.gmra.mrb[0].mxu0 %v707
      %v1776 = vpop.f32.mrb[0].mxu0
      %v1777 = vadd.f32 %v1456, %v1776
      %v1778 = vpop.f32.mrb[0].mxu0
      %v1779 = vpop.f32.mrb[0].mxu0
      %v1780 = vadd.f32 %v1459, %v1779
      %v1781 = vpop.f32.mrb[0].mxu0
      %1782 = vmatprep.mubr.bf16.mxu0 %v711
      %1783 = vmatmul.mubr.bf16.gmra.mrb[0].mxu0 %v709
      %v1784 = vpop.f32.mrb[0].mxu0
      %v1785 = vadd.f32 %v1464, %v1784
      %v1786 = vpop.f32.mrb[0].mxu0
      %v1787 = vpop.f32.mrb[0].mxu0
      %v1788 = vadd.f32 %v1467, %v1787
      %v1789 = vpop.f32.mrb[0].mxu0
      %1790 = vmatprep.mubr.bf16.mxu0 %v713
      %1791 = vmatmul.mubr.bf16.gmra.mrb[0].mxu0 %v711
      %v1792 = vpop.f32.mrb[0].mxu0
      %v1793 = vadd.f32 %v1472, %v1792
      %v1794 = vpop.f32.mrb[0].mxu0
      %v1795 = vpop.f32.mrb[0].mxu0
      %v1796 = vadd.f32 %v1475, %v1795
      %v1797 = vpop.f32.mrb[0].mxu0
      %1798 = vmatprep.mubr.bf16.mxu0 %v715
      %1799 = vmatmul.mubr.bf16.gmra.mrb[0].mxu0 %v713
      %v1800 = vpop.f32.mrb[0].mxu0
      %v1801 = vadd.f32 %v1480, %v1800
      %v1802 = vpop.f32.mrb[0].mxu0
      %v1803 = vpop.f32.mrb[0].mxu0
      %v1804 = vadd.f32 %v1483, %v1803
      %v1805 = vpop.f32.mrb[0].mxu0
      %1806 = vmatprep.mubr.bf16.mxu0 %v717
      %1807 = vmatmul.mubr.bf16.gmra.mrb[0].mxu0 %v715
      %v1808 = vpop.f32.mrb[0].mxu0
      %v1809 = vadd.f32 %v1488, %v1808
      %v1810 = vpop.f32.mrb[0].mxu0
      %v1811 = vpop.f32.mrb[0].mxu0
      %v1812 = vadd.f32 %v1491, %v1811
      %v1813 = vpop.f32.mrb[0].mxu0
      %1814 = vmatprep.mubr.bf16.mxu0 %v719
      %1815 = vmatmul.mubr.bf16.gmra.mrb[0].mxu0 %v717
      %v1816 = vpop.f32.mrb[0].mxu0
      %v1817 = vadd.f32 %v1496, %v1816
      %v1818 = vpop.f32.mrb[0].mxu0
      %v1819 = vpop.f32.mrb[0].mxu0
      %v1820 = vadd.f32 %v1499, %v1819
      %v1821 = vpop.f32.mrb[0].mxu0
      %1822 = vmatprep.mubr.bf16.mxu0 %v721
      %1823 = vmatmul.mubr.bf16.gmra.mrb[0].mxu0 %v719
      %v1824 = vpop.f32.mrb[0].mxu0
      %v1825 = vadd.f32 %v1504, %v1824
      %v1826 = vpop.f32.mrb[0].mxu0
      %v1827 = vpop.f32.mrb[0].mxu0
      %v1828 = vadd.f32 %v1507, %v1827
      %v1829 = vpop.f32.mrb[0].mxu0
      %1830 = vmatprep.mubr.bf16.mxu0 %v747
      %1831 = vmatmul.mubr.bf16.gmra.mrb[0].mxu0 %v721
      %v1832 = vpop.f32.mrb[0].mxu0
      %v1833 = vadd.f32 %v1512, %v1832
      %v1834 = vpop.f32.mrb[0].mxu0
      %v1835 = vpop.f32.mrb[0].mxu0
      %v1836 = vadd.f32 %v1515, %v1835
      %v1837 = vpop.f32.mrb[0].mxu0
      %1838 = vdwg.mxu0
      %1839 = vmatprep.subr.bf16.mxu0 0
      %1840 = vmatpush1.bf16.msra.mxu0 %v1630
      %1841 = vmatprep.subr.bf16.mxu0 0
      %1842 = vmatpush1.bf16.msra.mxu0 %v1631
      %1843 = vmatprep.subr.bf16.mxu0 0
      %1844 = vmatpush1.bf16.msra.mxu0 %v1632
      %1845 = vmatprep.subr.bf16.mxu0 0
      %1846 = vmatpush1.bf16.msra.mxu0 %v1633
      %1847 = vmatprep.subr.bf16.mxu0 0
      %1848 = vmatpush1.bf16.msra.mxu0 %v1634
      %1849 = vmatprep.subr.bf16.mxu0 0
      %1850 = vmatpush1.bf16.msra.mxu0 %v1635
      %1851 = vmatprep.subr.bf16.mxu0 0
      %1852 = vmatpush1.bf16.msra.mxu0 %v1636
      %1853 = vmatprep.subr.bf16.mxu0 0
      %1854 = vmatpush1.bf16.msra.mxu0 %v1637
      %1855 = vmatprep.subr.bf16.mxu0 0
      %1856 = vmatpush1.bf16.msra.mxu0 0
      %1857 = vmatprep.subr.bf16.mxu0 0
      %1858 = vmatpush1.bf16.msra.mxu0 0
      %1859 = vmatprep.subr.bf16.mxu0 0
      %1860 = vmatpush1.bf16.msra.mxu0 0
      %1861 = vmatprep.subr.bf16.mxu0 0
      %1862 = vmatpush1.bf16.msra.mxu0 0
      %1863 = vmatprep.subr.bf16.mxu0 0
      %1864 = vmatpush1.bf16.msra.mxu0 0
      %1865 = vmatprep.subr.bf16.mxu0 0
      %1866 = vmatpush1.bf16.msra.mxu0 0
      %1867 = vmatprep.subr.bf16.mxu0 0
      %1868 = vmatpush1.bf16.msra.mxu0 0
      %1869 = vmatprep.subr.bf16.mxu0 0
      %1870 = vmatpush1.bf16.msra.mxu0 0
      %1871 = vmatprep.mubr.bf16.mxu0 0
      %1872 = vmatmul.mubr.bf16.gmra.mrb[0].mxu0 %v691
      %v1873 = vpop.f32.mrb[0].mxu0
      %v1874 = vadd.f32 %v1697, %v1873
      %v1875 = vpop.f32.mrb[0].mxu0
      %v1876 = vpop.f32.mrb[0].mxu0
      %v1877 = vadd.f32 %v1700, %v1876
      %v1878 = vpop.f32.mrb[0].mxu0
      %1879 = vmatprep.mubr.bf16.mxu0 0
      %1880 = vmatmul.mubr.bf16.gmra.mrb[0].mxu0 %v693
      %v1881 = vpop.f32.mrb[0].mxu0
      %v1882 = vadd.f32 %v1705, %v1881
      %v1883 = vpop.f32.mrb[0].mxu0
      %v1884 = vpop.f32.mrb[0].mxu0
      %v1885 = vadd.f32 %v1708, %v1884
      %v1886 = vpop.f32.mrb[0].mxu0
      %1887 = vmatprep.mubr.bf16.mxu0 0
      %1888 = vmatmul.mubr.bf16.gmra.mrb[0].mxu0 %v695
      %v1889 = vpop.f32.mrb[0].mxu0
      %v1890 = vadd.f32 %v1713, %v1889
      %v1891 = vpop.f32.mrb[0].mxu0
      %v1892 = vpop.f32.mrb[0].mxu0
      %v1893 = vadd.f32 %v1716, %v1892
      %v1894 = vpop.f32.mrb[0].mxu0
      %1895 = vmatprep.mubr.bf16.mxu0 0
      %1896 = vmatmul.mubr.bf16.gmra.mrb[0].mxu0 %v697
      %v1897 = vpop.f32.mrb[0].mxu0
      %v1898 = vadd.f32 %v1721, %v1897
      %v1899 = vpop.f32.mrb[0].mxu0
      %v1900 = vpop.f32.mrb[0].mxu0
      %v1901 = vadd.f32 %v1724, %v1900
      %v1902 = vpop.f32.mrb[0].mxu0
      %1903 = vmatprep.mubr.bf16.mxu0 0
      %1904 = vmatmul.mubr.bf16.gmra.mrb[0].mxu0 %v699
      %v1905 = vpop.f32.mrb[0].mxu0
      %v1906 = vadd.f32 %v1729, %v1905
      %v1907 = vpop.f32.mrb[0].mxu0
      %v1908 = vpop.f32.mrb[0].mxu0
      %v1909 = vadd.f32 %v1732, %v1908
      %v1910 = vpop.f32.mrb[0].mxu0
      %1911 = vmatprep.mubr.bf16.mxu0 0
      %1912 = vmatmul.mubr.bf16.gmra.mrb[0].mxu0 %v701
      %v1913 = vpop.f32.mrb[0].mxu0
      %v1914 = vadd.f32 %v1737, %v1913
      %v1915 = vpop.f32.mrb[0].mxu0
      %v1916 = vpop.f32.mrb[0].mxu0
      %v1917 = vadd.f32 %v1740, %v1916
      %v1918 = vpop.f32.mrb[0].mxu0
      %1919 = vmatprep.mubr.bf16.mxu0 0
      %1920 = vmatmul.mubr.bf16.gmra.mrb[0].mxu0 %v703
      %v1921 = vpop.f32.mrb[0].mxu0
      %v1922 = vadd.f32 %v1745, %v1921
      %v1923 = vpop.f32.mrb[0].mxu0
      %v1924 = vpop.f32.mrb[0].mxu0
      %v1925 = vadd.f32 %v1748, %v1924
      %v1926 = vpop.f32.mrb[0].mxu0
      %1927 = vmatprep.mubr.bf16.mxu0 0
      %1928 = vmatmul.mubr.bf16.gmra.mrb[0].mxu0 %v705
      %v1929 = vpop.f32.mrb[0].mxu0
      %v1930 = vadd.f32 %v1753, %v1929
      %v1931 = vpop.f32.mrb[0].mxu0
      %v1932 = vpop.f32.mrb[0].mxu0
      %v1933 = vadd.f32 %v1756, %v1932
      %v1934 = vpop.f32.mrb[0].mxu0
      %1935 = vmatprep.mubr.bf16.mxu0 0
      %1936 = vmatmul.mubr.bf16.gmra.mrb[0].mxu0 %v707
      %v1937 = vpop.f32.mrb[0].mxu0
      %v1938 = vadd.f32 %v1761, %v1937
      %v1939 = vpop.f32.mrb[0].mxu0
      %v1940 = vpop.f32.mrb[0].mxu0
      %v1941 = vadd.f32 %v1764, %v1940
      %v1942 = vpop.f32.mrb[0].mxu0
      %1943 = vmatprep.mubr.bf16.mxu0 0
      %1944 = vmatmul.mubr.bf16.gmra.mrb[0].mxu0 %v709
      %v1945 = vpop.f32.mrb[0].mxu0
      %v1946 = vadd.f32 %v1769, %v1945
      %v1947 = vpop.f32.mrb[0].mxu0
      %v1948 = vpop.f32.mrb[0].mxu0
      %v1949 = vadd.f32 %v1772, %v1948
      %v1950 = vpop.f32.mrb[0].mxu0
      %1951 = vmatprep.mubr.bf16.mxu0 0
      %1952 = vmatmul.mubr.bf16.gmra.mrb[0].mxu0 %v711
      %v1953 = vpop.f32.mrb[0].mxu0
      %v1954 = vadd.f32 %v1777, %v1953
      %v1955 = vpop.f32.mrb[0].mxu0
      %v1956 = vpop.f32.mrb[0].mxu0
      %v1957 = vadd.f32 %v1780, %v1956
      %v1958 = vpop.f32.mrb[0].mxu0
      %1959 = vmatprep.mubr.bf16.mxu0 0
      %1960 = vmatmul.mubr.bf16.gmra.mrb[0].mxu0 %v713
      %v1961 = vpop.f32.mrb[0].mxu0
      %v1962 = vadd.f32 %v1785, %v1961
      %v1963 = vpop.f32.mrb[0].mxu0
      %v1964 = vpop.f32.mrb[0].mxu0
      %v1965 = vadd.f32 %v1788, %v1964
      %v1966 = vpop.f32.mrb[0].mxu0
      %1967 = vmatprep.mubr.bf16.mxu0 0
      %1968 = vmatmul.mubr.bf16.gmra.mrb[0].mxu0 %v715
      %v1969 = vpop.f32.mrb[0].mxu0
      %v1970 = vadd.f32 %v1793, %v1969
      %v1971 = vpop.f32.mrb[0].mxu0
      %v1972 = vpop.f32.mrb[0].mxu0
      %v1973 = vadd.f32 %v1796, %v1972
      %v1974 = vpop.f32.mrb[0].mxu0
      %1975 = vmatprep.mubr.bf16.mxu0 0
      %1976 = vmatmul.mubr.bf16.gmra.mrb[0].mxu0 %v717
      %v1977 = vpop.f32.mrb[0].mxu0
      %v1978 = vadd.f32 %v1801, %v1977
      %v1979 = vpop.f32.mrb[0].mxu0
      %v1980 = vpop.f32.mrb[0].mxu0
      %v1981 = vadd.f32 %v1804, %v1980
      %v1982 = vpop.f32.mrb[0].mxu0
      %1983 = vmatprep.mubr.bf16.mxu0 0
      %1984 = vmatmul.mubr.bf16.gmra.mrb[0].mxu0 %v719
      %v1985 = vpop.f32.mrb[0].mxu0
      %v1986 = vadd.f32 %v1809, %v1985
      %v1987 = vpop.f32.mrb[0].mxu0
      %v1988 = vpop.f32.mrb[0].mxu0
      %v1989 = vadd.f32 %v1812, %v1988
      %v1990 = vpop.f32.mrb[0].mxu0
      %1991 = vmatprep.mubr.bf16.mxu0 0
      %1992 = vmatmul.mubr.bf16.gmra.mrb[0].mxu0 %v721
      %v1993 = vpop.f32.mrb[0].mxu0
      %v1994 = vadd.f32 %v1817, %v1993
      %v1995 = vpop.f32.mrb[0].mxu0
      %v1996 = vpop.f32.mrb[0].mxu0
      %v1997 = vadd.f32 %v1820, %v1996
      %v1998 = vpop.f32.mrb[0].mxu0
      %1999 = vmatprep.mubr.bf16.mxu0 0
      %2000 = vmatmul.mubr.bf16.gmra.mrb[0].mxu0 %v747
      %v2001 = vpop.f32.mrb[0].mxu0
      %v2002 = vadd.f32 %v1825, %v2001
      %v2003 = vpop.f32.mrb[0].mxu0
      %v2004 = vpop.f32.mrb[0].mxu0
      %v2005 = vadd.f32 %v1828, %v2004
      %v2006 = vpop.f32.mrb[0].mxu0
      %2007 = vmatprep.mubr.bf16.mxu0 0
      %2008 = vmatmul.mubr.bf16.gmra.mrb[0].mxu0 %v756
      %v2009 = vpop.f32.mrb[0].mxu0
      %v2010 = vadd.f32 %v1833, %v2009
      %v2011 = vpop.f32.mrb[0].mxu0
      %v2012 = vpop.f32.mrb[0].mxu0
      %v2013 = vadd.f32 %v1836, %v2012
      %v2014 = vpop.f32.mrb[0].mxu0
      %2015 = vdwg.mxu0
      %vm2016 = vcmask 1046528
      %v2017 = vrot.slane %v687, 1
      %v2018 = vrot.slane %v688, 1
      %v2019 = vsel %vm2016, %v2017, %v2018
      %v2020 = vrot.slane %v689, 1
      %v2021 = vrot.slane %v690, 1
      %v2022 = vsel %vm2016, %v2020, %v2021
      %v2023 = vrot.slane %v691, 1
      %v2024 = vrot.slane %v692, 1
      %v2025 = vsel %vm2016, %v2023, %v2024
      %v2026 = vrot.slane %v693, 1
      %v2027 = vrot.slane %v694, 1
      %v2028 = vsel %vm2016, %v2026, %v2027
      %v2029 = vrot.slane %v695, 1
      %v2030 = vrot.slane %v696, 1
      %v2031 = vsel %vm2016, %v2029, %v2030
      %v2032 = vrot.slane %v697, 1
      %v2033 = vrot.slane %v698, 1
      %v2034 = vsel %vm2016, %v2032, %v2033
      %v2035 = vrot.slane %v699, 1
      %v2036 = vrot.slane %v700, 1
      %v2037 = vsel %vm2016, %v2035, %v2036
      %v2038 = vrot.slane %v701, 1
      %v2039 = vrot.slane %v702, 1
      %v2040 = vsel %vm2016, %v2038, %v2039
      %v2041 = vrot.slane %v703, 1
      %v2042 = vrot.slane %v704, 1
      %v2043 = vsel %vm2016, %v2041, %v2042
      %v2044 = vrot.slane %v705, 1
      %v2045 = vrot.slane %v706, 1
      %v2046 = vsel %vm2016, %v2044, %v2045
      %v2047 = vrot.slane %v707, 1
      %v2048 = vrot.slane %v708, 1
      %v2049 = vsel %vm2016, %v2047, %v2048
      %v2050 = vrot.slane %v709, 1
      %v2051 = vrot.slane %v710, 1
      %v2052 = vsel %vm2016, %v2050, %v2051
      %v2053 = vrot.slane %v711, 1
      %v2054 = vrot.slane %v712, 1
      %v2055 = vsel %vm2016, %v2053, %v2054
      %v2056 = vrot.slane %v713, 1
      %v2057 = vrot.slane %v714, 1
      %v2058 = vsel %vm2016, %v2056, %v2057
      %v2059 = vrot.slane %v715, 1
      %v2060 = vrot.slane %v716, 1
      %v2061 = vsel %vm2016, %v2059, %v2060
      %v2062 = vrot.slane %v717, 1
      %v2063 = vrot.slane %v718, 1
      %v2064 = vsel %vm2016, %v2062, %v2063
      %v2065 = vrot.slane %v719, 1
      %v2066 = vrot.slane %v720, 1
      %v2067 = vsel %vm2016, %v2065, %v2066
      %v2068 = vrot.slane %v721, 1
      %v2069 = vrot.slane %v722, 1
      %v2070 = vsel %vm2016, %v2068, %v2069
      %v2071 = vrot.slane %v747, 1
      %v2072 = vrot.slane %v748, 1
      %v2073 = vsel %vm2016, %v2071, %v2072
      %v2074 = vrot.slane %v756, 1
      %v2075 = vrot.slane %v757, 1
      %v2076 = vsel %vm2016, %v2074, %v2075
      %v2145 = vunpack.c.l.b16 %v531
      %v2146 = vunpack.c.l.b16 %v532
      %v2147 = vunpack.c.l.b16 %v533
      %v2148 = vunpack.c.l.b16 %v534
      %v2149 = vunpack.c.l.b16 %v535
      %v2150 = vunpack.c.l.b16 %v536
      %v2151 = vunpack.c.l.b16 %v537
      %v2152 = vunpack.c.l.b16 %v538
      %v2153 = vunpack.c.l.b16 %v539
      %v2154 = vunpack.c.l.b16 %v540
      %v2155 = vunpack.c.l.b16 %v541
      %v2156 = vunpack.c.l.b16 %v542
      %v2157 = vunpack.c.l.b16 %v543
      %v2158 = vunpack.c.l.b16 %v544
      %v2159 = vunpack.c.l.b16 %v545
      %v2160 = vunpack.c.l.b16 %v546
      %v2161 = vunpack.c.l.b16 %v547
      %v2162 = vunpack.c.l.b16 %v548
      %v2163 = vunpack.c.l.b16 %v549
      %v2164 = vunpack.c.l.b16 %v550
      %v2165 = vunpack.c.l.b16 %v551
      %v2166 = vunpack.c.l.b16 %v552
      %v2167 = vunpack.c.l.b16 %v553
      %v2168 = vunpack.c.l.b16 %v554
      %v2169 = vunpack.c.l.b16 %v555
      %v2170 = vunpack.c.l.b16 %v556
      %v2171 = vunpack.c.l.b16 %v557
      %v2172 = vunpack.c.l.b16 %v558
      %v2173 = vunpack.c.l.b16 %v559
      %v2174 = vunpack.c.l.b16 %v560
      %v2175 = vunpack.c.l.b16 %v561
      %v2176 = vunpack.c.l.b16 %v562
      %v2177 = vunpack.c.l.b16 %v563
      %v2178 = vunpack.c.l.b16 %v564
      %v2179 = vunpack.c.l.b16 %v565
      %v2180 = vunpack.c.l.b16 %v566
      %v2181 = vunpack.c.l.b16 %v567
      %v2182 = vunpack.c.l.b16 %v568
      %v2183 = vunpack.c.l.b16 %v569
      %v2184 = vunpack.c.l.b16 %v570
      %v2185 = vunpack.c.l.b16 %v571
      %v2186 = vunpack.c.l.b16 %v572
      %v2187 = vunpack.c.l.b16 %v573
      %v2188 = vunpack.c.l.b16 %v574
      %v2189 = vunpack.c.l.b16 %v575
      %v2190 = vunpack.c.l.b16 %v576
      %v2191 = vunpack.c.l.b16 %v577
      %v2192 = vunpack.c.l.b16 %v578
      %v2193 = vpack.c.b16 %v2146, %v2145
      %v2194 = vpack.c.b16 %v2148, %v2147
      %v2195 = vpack.c.b16 %v2150, %v2149
      %v2196 = vpack.c.b16 %v2152, %v2151
      %v2197 = vpack.c.b16 %v2154, %v2153
      %v2198 = vpack.c.b16 %v2156, %v2155
      %v2199 = vpack.c.b16 %v2158, %v2157
      %v2200 = vpack.c.b16 %v2160, %v2159
      %v2201 = vpack.c.b16 %v2162, %v2161
      %v2202 = vpack.c.b16 %v2164, %v2163
      %v2203 = vpack.c.b16 %v2166, %v2165
      %v2204 = vpack.c.b16 %v2168, %v2167
      %v2205 = vpack.c.b16 %v2170, %v2169
      %v2206 = vpack.c.b16 %v2172, %v2171
      %v2207 = vpack.c.b16 %v2174, %v2173
      %v2208 = vpack.c.b16 %v2176, %v2175
      %v2209 = vpack.c.b16 %v2178, %v2177
      %v2210 = vpack.c.b16 %v2180, %v2179
      %v2211 = vpack.c.b16 %v2182, %v2181
      %v2212 = vpack.c.b16 %v2184, %v2183
      %v2213 = vpack.c.b16 %v2186, %v2185
      %v2214 = vpack.c.b16 %v2188, %v2187
      %v2215 = vpack.c.b16 %v2190, %v2189
      %v2216 = vpack.c.b16 %v2192, %v2191
      %2241 = vmatprep.subr.bf16.mxu0 0
      %2242 = vmatpush1.bf16.msra.mxu0 %v2193
      %2243 = vmatprep.subr.bf16.mxu0 0
      %2244 = vmatpush1.bf16.msra.mxu0 %v2194
      %2245 = vmatprep.subr.bf16.mxu0 0
      %2246 = vmatpush1.bf16.msra.mxu0 %v2195
      %2247 = vmatprep.subr.bf16.mxu0 0
      %2248 = vmatpush1.bf16.msra.mxu0 %v2196
      %2249 = vmatprep.subr.bf16.mxu0 0
      %2250 = vmatpush1.bf16.msra.mxu0 %v2197
      %2251 = vmatprep.subr.bf16.mxu0 0
      %2252 = vmatpush1.bf16.msra.mxu0 %v2198
      %2253 = vmatprep.subr.bf16.mxu0 0
      %2254 = vmatpush1.bf16.msra.mxu0 %v2199
      %2255 = vmatprep.subr.bf16.mxu0 0
      %2256 = vmatpush1.bf16.msra.mxu0 %v2200
      %2257 = vmatprep.subr.bf16.mxu0 0
      %2258 = vmatpush1.bf16.msra.mxu0 %v2201
      %2259 = vmatprep.subr.bf16.mxu0 0
      %2260 = vmatpush1.bf16.msra.mxu0 %v2202
      %2261 = vmatprep.subr.bf16.mxu0 0
      %2262 = vmatpush1.bf16.msra.mxu0 %v2203
      %2263 = vmatprep.subr.bf16.mxu0 0
      %2264 = vmatpush1.bf16.msra.mxu0 %v2204
      %2265 = vmatprep.subr.bf16.mxu0 0
      %2266 = vmatpush1.bf16.msra.mxu0 %v2205
      %2267 = vmatprep.subr.bf16.mxu0 0
      %2268 = vmatpush1.bf16.msra.mxu0 %v2206
      %2269 = vmatprep.subr.bf16.mxu0 0
      %2270 = vmatpush1.bf16.msra.mxu0 %v2207
      %2271 = vmatprep.subr.bf16.mxu0 0
      %2272 = vmatpush1.bf16.msra.mxu0 %v2208
      %2273 = vmatprep.mubr.bf16.mxu0 %v2022
      %2274 = vmatmul.mubr.bf16.gmra.mrb[0].mxu0 %v2019
      %v2275 = vpop.f32.mrb[0].mxu0
      %v2276 = vadd.f32 0.0, %v2275
      %v2277 = vpop.f32.mrb[0].mxu0
      %v2278 = vpop.f32.mrb[0].mxu0
      %v2279 = vadd.f32 0.0, %v2278
      %v2280 = vpop.f32.mrb[0].mxu0
      %2281 = vmatprep.mubr.bf16.mxu0 %v2025
      %2282 = vmatmul.mubr.bf16.gmra.mrb[0].mxu0 %v2022
      %v2283 = vpop.f32.mrb[0].mxu0
      %v2284 = vadd.f32 0.0, %v2283
      %v2285 = vpop.f32.mrb[0].mxu0
      %v2286 = vpop.f32.mrb[0].mxu0
      %v2287 = vadd.f32 0.0, %v2286
      %v2288 = vpop.f32.mrb[0].mxu0
      %2289 = vmatprep.mubr.bf16.mxu0 %v2028
      %2290 = vmatmul.mubr.bf16.gmra.mrb[0].mxu0 %v2025
      %v2291 = vpop.f32.mrb[0].mxu0
      %v2292 = vadd.f32 0.0, %v2291
      %v2293 = vpop.f32.mrb[0].mxu0
      %v2294 = vpop.f32.mrb[0].mxu0
      %v2295 = vadd.f32 0.0, %v2294
      %v2296 = vpop.f32.mrb[0].mxu0
      %2297 = vmatprep.mubr.bf16.mxu0 %v2031
      %2298 = vmatmul.mubr.bf16.gmra.mrb[0].mxu0 %v2028
      %v2299 = vpop.f32.mrb[0].mxu0
      %v2300 = vadd.f32 0.0, %v2299
      %v2301 = vpop.f32.mrb[0].mxu0
      %v2302 = vpop.f32.mrb[0].mxu0
      %v2303 = vadd.f32 0.0, %v2302
      %v2304 = vpop.f32.mrb[0].mxu0
      %2305 = vmatprep.mubr.bf16.mxu0 %v2034
      %2306 = vmatmul.mubr.bf16.gmra.mrb[0].mxu0 %v2031
      %v2307 = vpop.f32.mrb[0].mxu0
      %v2308 = vadd.f32 0.0, %v2307
      %v2309 = vpop.f32.mrb[0].mxu0
      %v2310 = vpop.f32.mrb[0].mxu0
      %v2311 = vadd.f32 0.0, %v2310
      %v2312 = vpop.f32.mrb[0].mxu0
      %2313 = vmatprep.mubr.bf16.mxu0 %v2037
      %2314 = vmatmul.mubr.bf16.gmra.mrb[0].mxu0 %v2034
      %v2315 = vpop.f32.mrb[0].mxu0
      %v2316 = vadd.f32 0.0, %v2315
      %v2317 = vpop.f32.mrb[0].mxu0
      %v2318 = vpop.f32.mrb[0].mxu0
      %v2319 = vadd.f32 0.0, %v2318
      %v2320 = vpop.f32.mrb[0].mxu0
      %2321 = vmatprep.mubr.bf16.mxu0 %v2040
      %2322 = vmatmul.mubr.bf16.gmra.mrb[0].mxu0 %v2037
      %v2323 = vpop.f32.mrb[0].mxu0
      %v2324 = vadd.f32 0.0, %v2323
      %v2325 = vpop.f32.mrb[0].mxu0
      %v2326 = vpop.f32.mrb[0].mxu0
      %v2327 = vadd.f32 0.0, %v2326
      %v2328 = vpop.f32.mrb[0].mxu0
      %2329 = vmatprep.mubr.bf16.mxu0 %v2043
      %2330 = vmatmul.mubr.bf16.gmra.mrb[0].mxu0 %v2040
      %v2331 = vpop.f32.mrb[0].mxu0
      %v2332 = vadd.f32 0.0, %v2331
      %v2333 = vpop.f32.mrb[0].mxu0
      %v2334 = vpop.f32.mrb[0].mxu0
      %v2335 = vadd.f32 0.0, %v2334
      %v2336 = vpop.f32.mrb[0].mxu0
      %2337 = vmatprep.mubr.bf16.mxu0 %v2046
      %2338 = vmatmul.mubr.bf16.gmra.mrb[0].mxu0 %v2043
      %v2339 = vpop.f32.mrb[0].mxu0
      %v2340 = vadd.f32 0.0, %v2339
      %v2341 = vpop.f32.mrb[0].mxu0
      %v2342 = vpop.f32.mrb[0].mxu0
      %v2343 = vadd.f32 0.0, %v2342
      %v2344 = vpop.f32.mrb[0].mxu0
      %2345 = vmatprep.mubr.bf16.mxu0 %v2049
      %2346 = vmatmul.mubr.bf16.gmra.mrb[0].mxu0 %v2046
      %v2347 = vpop.f32.mrb[0].mxu0
      %v2348 = vadd.f32 0.0, %v2347
      %v2349 = vpop.f32.mrb[0].mxu0
      %v2350 = vpop.f32.mrb[0].mxu0
      %v2351 = vadd.f32 0.0, %v2350
      %v2352 = vpop.f32.mrb[0].mxu0
      %2353 = vmatprep.mubr.bf16.mxu0 %v2052
      %2354 = vmatmul.mubr.bf16.gmra.mrb[0].mxu0 %v2049
      %v2355 = vpop.f32.mrb[0].mxu0
      %v2356 = vadd.f32 0.0, %v2355
      %v2357 = vpop.f32.mrb[0].mxu0
      %v2358 = vpop.f32.mrb[0].mxu0
      %v2359 = vadd.f32 0.0, %v2358
      %v2360 = vpop.f32.mrb[0].mxu0
      %2361 = vmatprep.mubr.bf16.mxu0 %v2055
      %2362 = vmatmul.mubr.bf16.gmra.mrb[0].mxu0 %v2052
      %v2363 = vpop.f32.mrb[0].mxu0
      %v2364 = vadd.f32 0.0, %v2363
      %v2365 = vpop.f32.mrb[0].mxu0
      %v2366 = vpop.f32.mrb[0].mxu0
      %v2367 = vadd.f32 0.0, %v2366
      %v2368 = vpop.f32.mrb[0].mxu0
      %2369 = vmatprep.mubr.bf16.mxu0 %v2058
      %2370 = vmatmul.mubr.bf16.gmra.mrb[0].mxu0 %v2055
      %v2371 = vpop.f32.mrb[0].mxu0
      %v2372 = vadd.f32 0.0, %v2371
      %v2373 = vpop.f32.mrb[0].mxu0
      %v2374 = vpop.f32.mrb[0].mxu0
      %v2375 = vadd.f32 0.0, %v2374
      %v2376 = vpop.f32.mrb[0].mxu0
      %2377 = vmatprep.mubr.bf16.mxu0 %v2061
      %2378 = vmatmul.mubr.bf16.gmra.mrb[0].mxu0 %v2058
      %v2379 = vpop.f32.mrb[0].mxu0
      %v2380 = vadd.f32 0.0, %v2379
      %v2381 = vpop.f32.mrb[0].mxu0
      %v2382 = vpop.f32.mrb[0].mxu0
      %v2383 = vadd.f32 0.0, %v2382
      %v2384 = vpop.f32.mrb[0].mxu0
      %2385 = vmatprep.mubr.bf16.mxu0 %v2064
      %2386 = vmatmul.mubr.bf16.gmra.mrb[0].mxu0 %v2061
      %v2387 = vpop.f32.mrb[0].mxu0
      %v2388 = vadd.f32 0.0, %v2387
      %v2389 = vpop.f32.mrb[0].mxu0
      %v2390 = vpop.f32.mrb[0].mxu0
      %v2391 = vadd.f32 0.0, %v2390
      %v2392 = vpop.f32.mrb[0].mxu0
      %2393 = vmatprep.mubr.bf16.mxu0 %v2067
      %2394 = vmatmul.mubr.bf16.gmra.mrb[0].mxu0 %v2064
      %v2395 = vpop.f32.mrb[0].mxu0
      %v2396 = vadd.f32 0.0, %v2395
      %v2397 = vpop.f32.mrb[0].mxu0
      %v2398 = vpop.f32.mrb[0].mxu0
      %v2399 = vadd.f32 0.0, %v2398
      %v2400 = vpop.f32.mrb[0].mxu0
      %2401 = vmatprep.mubr.bf16.mxu0 %v2070
      %2402 = vmatmul.mubr.bf16.gmra.mrb[0].mxu0 %v2067
      %v2403 = vpop.f32.mrb[0].mxu0
      %v2404 = vadd.f32 0.0, %v2403
      %v2405 = vpop.f32.mrb[0].mxu0
      %v2406 = vpop.f32.mrb[0].mxu0
      %v2407 = vadd.f32 0.0, %v2406
      %v2408 = vpop.f32.mrb[0].mxu0
      %2409 = vmatprep.mubr.bf16.mxu0 %v2073
      %2410 = vmatmul.mubr.bf16.gmra.mrb[0].mxu0 %v2070
      %v2411 = vpop.f32.mrb[0].mxu0
      %v2412 = vadd.f32 0.0, %v2411
      %v2413 = vpop.f32.mrb[0].mxu0
      %v2414 = vpop.f32.mrb[0].mxu0
      %v2415 = vadd.f32 0.0, %v2414
      %v2416 = vpop.f32.mrb[0].mxu0
      %2417 = vdwg.mxu0
      %2418 = vmatprep.subr.bf16.mxu0 0
      %2419 = vmatpush1.bf16.msra.mxu0 %v2209
      %2420 = vmatprep.subr.bf16.mxu0 0
      %2421 = vmatpush1.bf16.msra.mxu0 %v2210
      %2422 = vmatprep.subr.bf16.mxu0 0
      %2423 = vmatpush1.bf16.msra.mxu0 %v2211
      %2424 = vmatprep.subr.bf16.mxu0 0
      %2425 = vmatpush1.bf16.msra.mxu0 %v2212
      %2426 = vmatprep.subr.bf16.mxu0 0
      %2427 = vmatpush1.bf16.msra.mxu0 %v2213
      %2428 = vmatprep.subr.bf16.mxu0 0
      %2429 = vmatpush1.bf16.msra.mxu0 %v2214
      %2430 = vmatprep.subr.bf16.mxu0 0
      %2431 = vmatpush1.bf16.msra.mxu0 %v2215
      %2432 = vmatprep.subr.bf16.mxu0 0
      %2433 = vmatpush1.bf16.msra.mxu0 %v2216
      %2434 = vmatprep.subr.bf16.mxu0 0
      %2435 = vmatpush1.bf16.msra.mxu0 0
      %2436 = vmatprep.subr.bf16.mxu0 0
      %2437 = vmatpush1.bf16.msra.mxu0 0
      %2438 = vmatprep.subr.bf16.mxu0 0
      %2439 = vmatpush1.bf16.msra.mxu0 0
      %2440 = vmatprep.subr.bf16.mxu0 0
      %2441 = vmatpush1.bf16.msra.mxu0 0
      %2442 = vmatprep.subr.bf16.mxu0 0
      %2443 = vmatpush1.bf16.msra.mxu0 0
      %2444 = vmatprep.subr.bf16.mxu0 0
      %2445 = vmatpush1.bf16.msra.mxu0 0
      %2446 = vmatprep.subr.bf16.mxu0 0
      %2447 = vmatpush1.bf16.msra.mxu0 0
      %2448 = vmatprep.subr.bf16.mxu0 0
      %2449 = vmatpush1.bf16.msra.mxu0 0
      %2450 = vmatprep.mubr.bf16.mxu0 0
      %2451 = vmatmul.mubr.bf16.gmra.mrb[0].mxu0 %v2025
      %v2452 = vpop.f32.mrb[0].mxu0
      %v2453 = vadd.f32 %v2276, %v2452
      %v2454 = vpop.f32.mrb[0].mxu0
      %v2455 = vpop.f32.mrb[0].mxu0
      %v2456 = vadd.f32 %v2279, %v2455
      %v2457 = vpop.f32.mrb[0].mxu0
      %2458 = vmatprep.mubr.bf16.mxu0 0
      %2459 = vmatmul.mubr.bf16.gmra.mrb[0].mxu0 %v2028
      %v2460 = vpop.f32.mrb[0].mxu0
      %v2461 = vadd.f32 %v2284, %v2460
      %v2462 = vpop.f32.mrb[0].mxu0
      %v2463 = vpop.f32.mrb[0].mxu0
      %v2464 = vadd.f32 %v2287, %v2463
      %v2465 = vpop.f32.mrb[0].mxu0
      %2466 = vmatprep.mubr.bf16.mxu0 0
      %2467 = vmatmul.mubr.bf16.gmra.mrb[0].mxu0 %v2031
      %v2468 = vpop.f32.mrb[0].mxu0
      %v2469 = vadd.f32 %v2292, %v2468
      %v2470 = vpop.f32.mrb[0].mxu0
      %v2471 = vpop.f32.mrb[0].mxu0
      %v2472 = vadd.f32 %v2295, %v2471
      %v2473 = vpop.f32.mrb[0].mxu0
      %2474 = vmatprep.mubr.bf16.mxu0 0
      %2475 = vmatmul.mubr.bf16.gmra.mrb[0].mxu0 %v2034
      %v2476 = vpop.f32.mrb[0].mxu0
      %v2477 = vadd.f32 %v2300, %v2476
      %v2478 = vpop.f32.mrb[0].mxu0
      %v2479 = vpop.f32.mrb[0].mxu0
      %v2480 = vadd.f32 %v2303, %v2479
      %v2481 = vpop.f32.mrb[0].mxu0
      %2482 = vmatprep.mubr.bf16.mxu0 0
      %2483 = vmatmul.mubr.bf16.gmra.mrb[0].mxu0 %v2037
      %v2484 = vpop.f32.mrb[0].mxu0
      %v2485 = vadd.f32 %v2308, %v2484
      %v2486 = vpop.f32.mrb[0].mxu0
      %v2487 = vpop.f32.mrb[0].mxu0
      %v2488 = vadd.f32 %v2311, %v2487
      %v2489 = vpop.f32.mrb[0].mxu0
      %2490 = vmatprep.mubr.bf16.mxu0 0
      %2491 = vmatmul.mubr.bf16.gmra.mrb[0].mxu0 %v2040
      %v2492 = vpop.f32.mrb[0].mxu0
      %v2493 = vadd.f32 %v2316, %v2492
      %v2494 = vpop.f32.mrb[0].mxu0
      %v2495 = vpop.f32.mrb[0].mxu0
      %v2496 = vadd.f32 %v2319, %v2495
      %v2497 = vpop.f32.mrb[0].mxu0
      %2498 = vmatprep.mubr.bf16.mxu0 0
      %2499 = vmatmul.mubr.bf16.gmra.mrb[0].mxu0 %v2043
      %v2500 = vpop.f32.mrb[0].mxu0
      %v2501 = vadd.f32 %v2324, %v2500
      %v2502 = vpop.f32.mrb[0].mxu0
      %v2503 = vpop.f32.mrb[0].mxu0
      %v2504 = vadd.f32 %v2327, %v2503
      %v2505 = vpop.f32.mrb[0].mxu0
      %2506 = vmatprep.mubr.bf16.mxu0 0
      %2507 = vmatmul.mubr.bf16.gmra.mrb[0].mxu0 %v2046
      %v2508 = vpop.f32.mrb[0].mxu0
      %v2509 = vadd.f32 %v2332, %v2508
      %v2510 = vpop.f32.mrb[0].mxu0
      %v2511 = vpop.f32.mrb[0].mxu0
      %v2512 = vadd.f32 %v2335, %v2511
      %v2513 = vpop.f32.mrb[0].mxu0
      %2514 = vmatprep.mubr.bf16.mxu0 0
      %2515 = vmatmul.mubr.bf16.gmra.mrb[0].mxu0 %v2049
      %v2516 = vpop.f32.mrb[0].mxu0
      %v2517 = vadd.f32 %v2340, %v2516
      %v2518 = vpop.f32.mrb[0].mxu0
      %v2519 = vpop.f32.mrb[0].mxu0
      %v2520 = vadd.f32 %v2343, %v2519
      %v2521 = vpop.f32.mrb[0].mxu0
      %2522 = vmatprep.mubr.bf16.mxu0 0
      %2523 = vmatmul.mubr.bf16.gmra.mrb[0].mxu0 %v2052
      %v2524 = vpop.f32.mrb[0].mxu0
      %v2525 = vadd.f32 %v2348, %v2524
      %v2526 = vpop.f32.mrb[0].mxu0
      %v2527 = vpop.f32.mrb[0].mxu0
      %v2528 = vadd.f32 %v2351, %v2527
      %v2529 = vpop.f32.mrb[0].mxu0
      %2530 = vmatprep.mubr.bf16.mxu0 0
      %2531 = vmatmul.mubr.bf16.gmra.mrb[0].mxu0 %v2055
      %v2532 = vpop.f32.mrb[0].mxu0
      %v2533 = vadd.f32 %v2356, %v2532
      %v2534 = vpop.f32.mrb[0].mxu0
      %v2535 = vpop.f32.mrb[0].mxu0
      %v2536 = vadd.f32 %v2359, %v2535
      %v2537 = vpop.f32.mrb[0].mxu0
      %2538 = vmatprep.mubr.bf16.mxu0 0
      %2539 = vmatmul.mubr.bf16.gmra.mrb[0].mxu0 %v2058
      %v2540 = vpop.f32.mrb[0].mxu0
      %v2541 = vadd.f32 %v2364, %v2540
      %v2542 = vpop.f32.mrb[0].mxu0
      %v2543 = vpop.f32.mrb[0].mxu0
      %v2544 = vadd.f32 %v2367, %v2543
      %v2545 = vpop.f32.mrb[0].mxu0
      %2546 = vmatprep.mubr.bf16.mxu0 0
      %2547 = vmatmul.mubr.bf16.gmra.mrb[0].mxu0 %v2061
      %v2548 = vpop.f32.mrb[0].mxu0
      %v2549 = vadd.f32 %v2372, %v2548
      %v2550 = vpop.f32.mrb[0].mxu0
      %v2551 = vpop.f32.mrb[0].mxu0
      %v2552 = vadd.f32 %v2375, %v2551
      %v2553 = vpop.f32.mrb[0].mxu0
      %2554 = vmatprep.mubr.bf16.mxu0 0
      %2555 = vmatmul.mubr.bf16.gmra.mrb[0].mxu0 %v2064
      %v2556 = vpop.f32.mrb[0].mxu0
      %v2557 = vadd.f32 %v2380, %v2556
      %v2558 = vpop.f32.mrb[0].mxu0
      %v2559 = vpop.f32.mrb[0].mxu0
      %v2560 = vadd.f32 %v2383, %v2559
      %v2561 = vpop.f32.mrb[0].mxu0
      %2562 = vmatprep.mubr.bf16.mxu0 0
      %2563 = vmatmul.mubr.bf16.gmra.mrb[0].mxu0 %v2067
      %v2564 = vpop.f32.mrb[0].mxu0
      %v2565 = vadd.f32 %v2388, %v2564
      %v2566 = vpop.f32.mrb[0].mxu0
      %v2567 = vpop.f32.mrb[0].mxu0
      %v2568 = vadd.f32 %v2391, %v2567
      %v2569 = vpop.f32.mrb[0].mxu0
      %2570 = vmatprep.mubr.bf16.mxu0 0
      %2571 = vmatmul.mubr.bf16.gmra.mrb[0].mxu0 %v2070
      %v2572 = vpop.f32.mrb[0].mxu0
      %v2573 = vadd.f32 %v2396, %v2572
      %v2574 = vpop.f32.mrb[0].mxu0
      %v2575 = vpop.f32.mrb[0].mxu0
      %v2576 = vadd.f32 %v2399, %v2575
      %v2577 = vpop.f32.mrb[0].mxu0
      %2578 = vmatprep.mubr.bf16.mxu0 0
      %2579 = vmatmul.mubr.bf16.gmra.mrb[0].mxu0 %v2073
      %v2580 = vpop.f32.mrb[0].mxu0
      %v2581 = vadd.f32 %v2404, %v2580
      %v2582 = vpop.f32.mrb[0].mxu0
      %v2583 = vpop.f32.mrb[0].mxu0
      %v2584 = vadd.f32 %v2407, %v2583
      %v2585 = vpop.f32.mrb[0].mxu0
      %2586 = vmatprep.mubr.bf16.mxu0 0
      %2587 = vmatmul.mubr.bf16.gmra.mrb[0].mxu0 %v2076
      %v2588 = vpop.f32.mrb[0].mxu0
      %v2589 = vadd.f32 %v2412, %v2588
      %v2590 = vpop.f32.mrb[0].mxu0
      %v2591 = vpop.f32.mrb[0].mxu0
      %v2592 = vadd.f32 %v2415, %v2591
      %v2593 = vpop.f32.mrb[0].mxu0
      %2594 = vdwg.mxu0
      %v2595 = vadd.f32 %v1874, %v2453
      %v2596 = vadd.f32 %v1877, %v2456
      %v2597 = vadd.f32 %v1882, %v2461
      %v2598 = vadd.f32 %v1885, %v2464
      %v2599 = vadd.f32 %v1890, %v2469
      %v2600 = vadd.f32 %v1893, %v2472
      %v2601 = vadd.f32 %v1898, %v2477
      %v2602 = vadd.f32 %v1901, %v2480
      %v2603 = vadd.f32 %v1906, %v2485
      %v2604 = vadd.f32 %v1909, %v2488
      %v2605 = vadd.f32 %v1914, %v2493
      %v2606 = vadd.f32 %v1917, %v2496
      %v2607 = vadd.f32 %v1922, %v2501
      %v2608 = vadd.f32 %v1925, %v2504
      %v2609 = vadd.f32 %v1930, %v2509
      %v2610 = vadd.f32 %v1933, %v2512
      %v2611 = vadd.f32 %v1938, %v2517
      %v2612 = vadd.f32 %v1941, %v2520
      %v2613 = vadd.f32 %v1946, %v2525
      %v2614 = vadd.f32 %v1949, %v2528
      %v2615 = vadd.f32 %v1954, %v2533
      %v2616 = vadd.f32 %v1957, %v2536
      %v2617 = vadd.f32 %v1962, %v2541
      %v2618 = vadd.f32 %v1965, %v2544
      %v2619 = vadd.f32 %v1970, %v2549
      %v2620 = vadd.f32 %v1973, %v2552
      %v2621 = vadd.f32 %v1978, %v2557
      %v2622 = vadd.f32 %v1981, %v2560
      %v2623 = vadd.f32 %v1986, %v2565
      %v2624 = vadd.f32 %v1989, %v2568
      %v2625 = vadd.f32 %v1994, %v2573
      %v2626 = vadd.f32 %v1997, %v2576
      %v2627 = vadd.f32 %v2002, %v2581
      %v2628 = vadd.f32 %v2005, %v2584
      %v2629 = vadd.f32 %v2010, %v2589
      %v2630 = vadd.f32 %v2013, %v2592
      %v2631 = vld [vmem:[%s4] sm:$0x1]
      %v2633 = vlaneseq
      %v2634 = vshrl.u32 %v2633, 7
      %v2635 = vsub.s32 0, %v2634
      %v2636 = vrot.slane %v2631, %v2635
      %v2638 = vadd.f32 %v2595, %v2636
      %v2639 = vadd.f32 %v2596, %v2636
      %v2640 = vadd.f32 %v2597, %v2636
      %v2641 = vadd.f32 %v2598, %v2636
      %v2642 = vadd.f32 %v2599, %v2636
      %v2643 = vadd.f32 %v2600, %v2636
      %v2644 = vadd.f32 %v2601, %v2636
      %v2645 = vadd.f32 %v2602, %v2636
      %v2646 = vadd.f32 %v2603, %v2636
      %v2647 = vadd.f32 %v2604, %v2636
      %v2648 = vadd.f32 %v2605, %v2636
      %v2649 = vadd.f32 %v2606, %v2636
      %v2650 = vadd.f32 %v2607, %v2636
      %v2651 = vadd.f32 %v2608, %v2636
      %v2652 = vadd.f32 %v2609, %v2636
      %v2653 = vadd.f32 %v2610, %v2636
      %v2654 = vadd.f32 %v2611, %v2636
      %v2655 = vadd.f32 %v2612, %v2636
      %v2656 = vadd.f32 %v2613, %v2636
      %v2657 = vadd.f32 %v2614, %v2636
      %v2658 = vadd.f32 %v2615, %v2636
      %v2659 = vadd.f32 %v2616, %v2636
      %v2660 = vadd.f32 %v2617, %v2636
      %v2661 = vadd.f32 %v2618, %v2636
      %v2662 = vadd.f32 %v2619, %v2636
      %v2663 = vadd.f32 %v2620, %v2636
      %v2664 = vadd.f32 %v2621, %v2636
      %v2665 = vadd.f32 %v2622, %v2636
      %v2666 = vadd.f32 %v2623, %v2636
      %v2667 = vadd.f32 %v2624, %v2636
      %v2668 = vadd.f32 %v2625, %v2636
      %v2669 = vadd.f32 %v2626, %v2636
      %v2670 = vadd.f32 %v2627, %v2636
      %v2671 = vadd.f32 %v2628, %v2636
      %v2672 = vadd.f32 %v2629, %v2636
      %v2673 = vadd.f32 %v2630, %v2636
      %v2674 = vmax.f32 %v2638, 0.0
      %v2675 = vmax.f32 %v2639, 0.0
      %v2676 = vmax.f32 %v2640, 0.0
      %v2677 = vmax.f32 %v2641, 0.0
      %v2678 = vmax.f32 %v2642, 0.0
      %v2679 = vmax.f32 %v2643, 0.0
      %v2680 = vmax.f32 %v2644, 0.0
      %v2681 = vmax.f32 %v2645, 0.0
      %v2682 = vmax.f32 %v2646, 0.0
      %v2683 = vmax.f32 %v2647, 0.0
      %v2684 = vmax.f32 %v2648, 0.0
      %v2685 = vmax.f32 %v2649, 0.0
      %v2686 = vmax.f32 %v2650, 0.0
      %v2687 = vmax.f32 %v2651, 0.0
      %v2688 = vmax.f32 %v2652, 0.0
      %v2689 = vmax.f32 %v2653, 0.0
      %v2690 = vmax.f32 %v2654, 0.0
      %v2691 = vmax.f32 %v2655, 0.0
      %v2692 = vmax.f32 %v2656, 0.0
      %v2693 = vmax.f32 %v2657, 0.0
      %v2694 = vmax.f32 %v2658, 0.0
      %v2695 = vmax.f32 %v2659, 0.0
      %v2696 = vmax.f32 %v2660, 0.0
      %v2697 = vmax.f32 %v2661, 0.0
      %v2698 = vmax.f32 %v2662, 0.0
      %v2699 = vmax.f32 %v2663, 0.0
      %v2700 = vmax.f32 %v2664, 0.0
      %v2701 = vmax.f32 %v2665, 0.0
      %v2702 = vmax.f32 %v2666, 0.0
      %v2703 = vmax.f32 %v2667, 0.0
      %v2704 = vmax.f32 %v2668, 0.0
      %v2705 = vmax.f32 %v2669, 0.0
      %v2706 = vmax.f32 %v2670, 0.0
      %v2707 = vmax.f32 %v2671, 0.0
      %v2708 = vmax.f32 %v2672, 0.0
      %v2709 = vmax.f32 %v2673, 0.0
      %s2710 = smul.u32 %s22, 16
      %s2711 = ssub.s32 %s2710, 1
      %v2712 = vstv %s2711
      %v2713 = vadd.s32 %v2712, 1
      %v2714 = vadd.s32 %v2712, 2
      %v2715 = vadd.s32 %v2712, 3
      %v2716 = vadd.s32 %v2712, 4
      %v2717 = vadd.s32 %v2712, 5
      %v2718 = vadd.s32 %v2712, 6
      %v2719 = vadd.s32 %v2712, 7
      %v2720 = vadd.s32 %v2712, 8
      %v2721 = vadd.s32 %v2712, 9
      %v2722 = vadd.s32 %v2712, 10
      %v2723 = vadd.s32 %v2712, 11
      %v2724 = vadd.s32 %v2712, 12
      %v2725 = vadd.s32 %v2712, 13
      %v2726 = vadd.s32 %v2712, 14
      %v2727 = vadd.s32 %v2712, 15
      %v2728 = vadd.s32 %v2712, 16
      %v2729 = vadd.s32 %v2712, 17
      %vm2730 = vcmp.ge.s32.totalorder %v2712, 0
      %vm2731 = vcmp.ge.s32.totalorder %v2713, 0
      %vm2732 = vcmp.ge.s32.totalorder %v2714, 0
      %vm2733 = vcmp.ge.s32.totalorder %v2715, 0
      %vm2734 = vcmp.ge.s32.totalorder %v2716, 0
      %vm2735 = vcmp.ge.s32.totalorder %v2717, 0
      %vm2736 = vcmp.ge.s32.totalorder %v2718, 0
      %vm2737 = vcmp.ge.s32.totalorder %v2719, 0
      %vm2738 = vcmp.ge.s32.totalorder %v2720, 0
      %vm2739 = vcmp.ge.s32.totalorder %v2721, 0
      %vm2740 = vcmp.ge.s32.totalorder %v2722, 0
      %vm2741 = vcmp.ge.s32.totalorder %v2723, 0
      %vm2742 = vcmp.ge.s32.totalorder %v2724, 0
      %vm2743 = vcmp.ge.s32.totalorder %v2725, 0
      %vm2744 = vcmp.ge.s32.totalorder %v2726, 0
      %vm2745 = vcmp.ge.s32.totalorder %v2727, 0
      %vm2746 = vcmp.ge.s32.totalorder %v2728, 0
      %vm2747 = vcmp.ge.s32.totalorder %v2729, 0
      %vm2748 = vcmp.lt.s32.totalorder %v2712, 16
      %vm2749 = vcmp.lt.s32.totalorder %v2713, 16
      %vm2750 = vcmp.lt.s32.totalorder %v2714, 16
      %vm2751 = vcmp.lt.s32.totalorder %v2715, 16
      %vm2752 = vcmp.lt.s32.totalorder %v2716, 16
      %vm2753 = vcmp.lt.s32.totalorder %v2717, 16
      %vm2754 = vcmp.lt.s32.totalorder %v2718, 16
      %vm2755 = vcmp.lt.s32.totalorder %v2719, 16
      %vm2756 = vcmp.lt.s32.totalorder %v2720, 16
      %vm2757 = vcmp.lt.s32.totalorder %v2721, 16
      %vm2758 = vcmp.lt.s32.totalorder %v2722, 16
      %vm2759 = vcmp.lt.s32.totalorder %v2723, 16
      %vm2760 = vcmp.lt.s32.totalorder %v2724, 16
      %vm2761 = vcmp.lt.s32.totalorder %v2725, 16
      %vm2762 = vcmp.lt.s32.totalorder %v2726, 16
      %vm2763 = vcmp.lt.s32.totalorder %v2727, 16
      %vm2764 = vcmp.lt.s32.totalorder %v2728, 16
      %vm2765 = vcmp.lt.s32.totalorder %v2729, 16
      %vm2766 = vmand %vm2730, %vm2748
      %vm2767 = vmand %vm2731, %vm2749
      %vm2768 = vmand %vm2732, %vm2750
      %vm2769 = vmand %vm2733, %vm2751
      %vm2770 = vmand %vm2734, %vm2752
      %vm2771 = vmand %vm2735, %vm2753
      %vm2772 = vmand %vm2736, %vm2754
      %vm2773 = vmand %vm2737, %vm2755
      %vm2774 = vmand %vm2738, %vm2756
      %vm2775 = vmand %vm2739, %vm2757
      %vm2776 = vmand %vm2740, %vm2758
      %vm2777 = vmand %vm2741, %vm2759
      %vm2778 = vmand %vm2742, %vm2760
      %vm2779 = vmand %vm2743, %vm2761
      %vm2780 = vmand %vm2744, %vm2762
      %vm2781 = vmand %vm2745, %vm2763
      %vm2782 = vmand %vm2746, %vm2764
      %vm2783 = vmand %vm2747, %vm2765
      %v2784 = vsel %vm2766, 1, 0
      %v2785 = vsel %vm2767, 1, 0
      %v2786 = vsel %vm2768, 1, 0
      %v2787 = vsel %vm2769, 1, 0
      %v2788 = vsel %vm2770, 1, 0
      %v2789 = vsel %vm2771, 1, 0
      %v2790 = vsel %vm2772, 1, 0
      %v2791 = vsel %vm2773, 1, 0
      %v2792 = vsel %vm2774, 1, 0
      %v2793 = vsel %vm2775, 1, 0
      %v2794 = vsel %vm2776, 1, 0
      %v2795 = vsel %vm2777, 1, 0
      %v2796 = vsel %vm2778, 1, 0
      %v2797 = vsel %vm2779, 1, 0
      %v2798 = vsel %vm2780, 1, 0
      %v2799 = vsel %vm2781, 1, 0
      %v2800 = vsel %vm2782, 1, 0
      %v2801 = vsel %vm2783, 1, 0
      %vm2802 = vcmp.eq.s32.totalorder %v2784, 1
      %vm2803 = vcmp.eq.s32.totalorder %v2785, 1
      %vm2804 = vcmp.eq.s32.totalorder %v2786, 1
      %vm2805 = vcmp.eq.s32.totalorder %v2787, 1
      %vm2806 = vcmp.eq.s32.totalorder %v2788, 1
      %vm2807 = vcmp.eq.s32.totalorder %v2789, 1
      %vm2808 = vcmp.eq.s32.totalorder %v2790, 1
      %vm2809 = vcmp.eq.s32.totalorder %v2791, 1
      %vm2810 = vcmp.eq.s32.totalorder %v2792, 1
      %vm2811 = vcmp.eq.s32.totalorder %v2793, 1
      %vm2812 = vcmp.eq.s32.totalorder %v2794, 1
      %vm2813 = vcmp.eq.s32.totalorder %v2795, 1
      %vm2814 = vcmp.eq.s32.totalorder %v2796, 1
      %vm2815 = vcmp.eq.s32.totalorder %v2797, 1
      %vm2816 = vcmp.eq.s32.totalorder %v2798, 1
      %vm2817 = vcmp.eq.s32.totalorder %v2799, 1
      %vm2818 = vcmp.eq.s32.totalorder %v2800, 1
      %vm2819 = vcmp.eq.s32.totalorder %v2801, 1
      %v2820 = vsel %vm2802, %v2674, 0.0
      %v2821 = vsel %vm2802, %v2675, 0.0
      %v2822 = vsel %vm2803, %v2676, 0.0
      %v2823 = vsel %vm2803, %v2677, 0.0
      %v2824 = vsel %vm2804, %v2678, 0.0
      %v2825 = vsel %vm2804, %v2679, 0.0
      %v2826 = vsel %vm2805, %v2680, 0.0
      %v2827 = vsel %vm2805, %v2681, 0.0
      %v2828 = vsel %vm2806, %v2682, 0.0
      %v2829 = vsel %vm2806, %v2683, 0.0
      %v2830 = vsel %vm2807, %v2684, 0.0
      %v2831 = vsel %vm2807, %v2685, 0.0
      %v2832 = vsel %vm2808, %v2686, 0.0
      %v2833 = vsel %vm2808, %v2687, 0.0
      %v2834 = vsel %vm2809, %v2688, 0.0
      %v2835 = vsel %vm2809, %v2689, 0.0
      %v2836 = vsel %vm2810, %v2690, 0.0
      %v2837 = vsel %vm2810, %v2691, 0.0
      %v2838 = vsel %vm2811, %v2692, 0.0
      %v2839 = vsel %vm2811, %v2693, 0.0
      %v2840 = vsel %vm2812, %v2694, 0.0
      %v2841 = vsel %vm2812, %v2695, 0.0
      %v2842 = vsel %vm2813, %v2696, 0.0
      %v2843 = vsel %vm2813, %v2697, 0.0
      %v2844 = vsel %vm2814, %v2698, 0.0
      %v2845 = vsel %vm2814, %v2699, 0.0
      %v2846 = vsel %vm2815, %v2700, 0.0
      %v2847 = vsel %vm2815, %v2701, 0.0
      %v2848 = vsel %vm2816, %v2702, 0.0
      %v2849 = vsel %vm2816, %v2703, 0.0
      %v2850 = vsel %vm2817, %v2704, 0.0
      %v2851 = vsel %vm2817, %v2705, 0.0
      %v2852 = vsel %vm2818, %v2706, 0.0
      %v2853 = vsel %vm2818, %v2707, 0.0
      %v2854 = vsel %vm2819, %v2708, 0.0
      %v2855 = vsel %vm2819, %v2709, 0.0
      %v2856 = vpack.c.bf16 %v2821, %v2820
      %v2857 = vpack.c.bf16 %v2823, %v2822
      %v2858 = vpack.c.bf16 %v2825, %v2824
      %v2859 = vpack.c.bf16 %v2827, %v2826
      %v2860 = vpack.c.bf16 %v2829, %v2828
      %v2861 = vpack.c.bf16 %v2831, %v2830
      %v2862 = vpack.c.bf16 %v2833, %v2832
      %v2863 = vpack.c.bf16 %v2835, %v2834
      %v2864 = vpack.c.bf16 %v2837, %v2836
      %v2865 = vpack.c.bf16 %v2839, %v2838
      %v2866 = vpack.c.bf16 %v2841, %v2840
      %v2867 = vpack.c.bf16 %v2843, %v2842
      %v2868 = vpack.c.bf16 %v2845, %v2844
      %v2869 = vpack.c.bf16 %v2847, %v2846
      %v2870 = vpack.c.bf16 %v2849, %v2848
      %v2871 = vpack.c.bf16 %v2851, %v2850
      %v2872 = vpack.c.bf16 %v2853, %v2852
      %v2873 = vpack.c.bf16 %v2855, %v2854
      %v2892 = vunpack.c.l.b16 %v2856
      %v2893 = vunpack.c.h.b16 %v2856
      %v2894 = vunpack.c.l.b16 %v2857
      %v2895 = vunpack.c.h.b16 %v2857
      %v2896 = vunpack.c.l.b16 %v2858
      %v2897 = vunpack.c.h.b16 %v2858
      %v2898 = vunpack.c.l.b16 %v2859
      %v2899 = vunpack.c.h.b16 %v2859
      %v2900 = vunpack.c.l.b16 %v2860
      %v2901 = vunpack.c.h.b16 %v2860
      %v2902 = vunpack.c.l.b16 %v2861
      %v2903 = vunpack.c.h.b16 %v2861
      %v2904 = vunpack.c.l.b16 %v2862
      %v2905 = vunpack.c.h.b16 %v2862
      %v2906 = vunpack.c.l.b16 %v2863
      %v2907 = vunpack.c.h.b16 %v2863
      %v2908 = vunpack.c.l.b16 %v2864
      %v2909 = vunpack.c.h.b16 %v2864
      %v2910 = vunpack.c.l.b16 %v2865
      %v2911 = vunpack.c.h.b16 %v2865
      %v2912 = vunpack.c.l.b16 %v2866
      %v2913 = vunpack.c.h.b16 %v2866
      %v2914 = vunpack.c.l.b16 %v2867
      %v2915 = vunpack.c.h.b16 %v2867
      %v2916 = vunpack.c.l.b16 %v2868
      %v2917 = vunpack.c.h.b16 %v2868
      %v2918 = vunpack.c.l.b16 %v2869
      %v2919 = vunpack.c.h.b16 %v2869
      %v2920 = vunpack.c.l.b16 %v2870
      %v2921 = vunpack.c.h.b16 %v2870
      %v2922 = vunpack.c.l.b16 %v2871
      %v2923 = vunpack.c.h.b16 %v2871
      %v2924 = vunpack.c.l.b16 %v2872
      %v2925 = vunpack.c.h.b16 %v2872
      %v2926 = vunpack.c.l.b16 %v2873
      %v2927 = vunpack.c.h.b16 %v2873
      %v2928 = vpack.c.b16 %v2892, %v2892
      %v2929 = vpack.c.b16 %v2893, %v2893
      %v2930 = vpack.c.b16 %v2894, %v2894
      %v2931 = vpack.c.b16 %v2895, %v2895
      %v2932 = vpack.c.b16 %v2896, %v2896
      %v2933 = vpack.c.b16 %v2897, %v2897
      %v2934 = vpack.c.b16 %v2898, %v2898
      %v2935 = vpack.c.b16 %v2899, %v2899
      %v2936 = vpack.c.b16 %v2900, %v2900
      %v2937 = vpack.c.b16 %v2901, %v2901
      %v2938 = vpack.c.b16 %v2902, %v2902
      %v2939 = vpack.c.b16 %v2903, %v2903
      %v2940 = vpack.c.b16 %v2904, %v2904
      %v2941 = vpack.c.b16 %v2905, %v2905
      %v2942 = vpack.c.b16 %v2906, %v2906
      %v2943 = vpack.c.b16 %v2907, %v2907
      %v2944 = vpack.c.b16 %v2908, %v2908
      %v2945 = vpack.c.b16 %v2909, %v2909
      %v2946 = vpack.c.b16 %v2910, %v2910
      %v2947 = vpack.c.b16 %v2911, %v2911
      %v2948 = vpack.c.b16 %v2912, %v2912
      %v2949 = vpack.c.b16 %v2913, %v2913
      %v2950 = vpack.c.b16 %v2914, %v2914
      %v2951 = vpack.c.b16 %v2915, %v2915
      %v2952 = vpack.c.b16 %v2916, %v2916
      %v2953 = vpack.c.b16 %v2917, %v2917
      %v2954 = vpack.c.b16 %v2918, %v2918
      %v2955 = vpack.c.b16 %v2919, %v2919
      %v2956 = vpack.c.b16 %v2920, %v2920
      %v2957 = vpack.c.b16 %v2921, %v2921
      %v2958 = vpack.c.b16 %v2922, %v2922
      %v2959 = vpack.c.b16 %v2923, %v2923
      %v2960 = vpack.c.b16 %v2924, %v2924
      %v2961 = vpack.c.b16 %v2925, %v2925
      %v2962 = vpack.c.b16 %v2926, %v2926
      %v2963 = vpack.c.b16 %v2927, %v2927
      %vm2964 = vsmask.f32 256
      %vm2965 = vsmask.f32 4368
      %vm2966 = vmor %vm2964, %vm2965
      %v2968 = vshrl.u32 %v2928, 16
      %v2970 = vrot.slane %v2968, 7
      %v2971 = vshll.u32 %v2928, 16
      %v2973 = vor.u32 %v2970, %v2971
      %v2974 = vrot.slane %v2970, 4
      %v2976 = vshrl.u32 %v2929, 16
      %v2978 = vrot.slane %v2976, 7
      %v2979 = vshll.u32 %v2929, 16
      %v2981 = vor.u32 %v2978, %v2979
      %v2982 = vsel %vm2966, %v2974, %v2981
      %v2983 = vrot.slane %v2978, 4
      %v2985 = vshrl.u32 %v2930, 16
      %v2987 = vrot.slane %v2985, 7
      %v2988 = vshll.u32 %v2930, 16
      %v2990 = vor.u32 %v2987, %v2988
      %v2991 = vrot.slane %v2987, 4
      %v2993 = vshrl.u32 %v2931, 16
      %v2995 = vrot.slane %v2993, 7
      %v2996 = vshll.u32 %v2931, 16
      %v2998 = vor.u32 %v2995, %v2996
      %v2999 = vsel %vm2966, %v2991, %v2998
      %v3000 = vrot.slane %v2995, 4
      %v3002 = vshrl.u32 %v2932, 16
      %v3004 = vrot.slane %v3002, 7
      %v3005 = vshll.u32 %v2932, 16
      %v3007 = vor.u32 %v3004, %v3005
      %v3008 = vrot.slane %v3004, 4
      %v3010 = vshrl.u32 %v2933, 16
      %v3012 = vrot.slane %v3010, 7
      %v3013 = vshll.u32 %v2933, 16
      %v3015 = vor.u32 %v3012, %v3013
      %v3016 = vsel %vm2966, %v3008, %v3015
      %v3017 = vrot.slane %v3012, 4
      %v3019 = vshrl.u32 %v2934, 16
      %v3021 = vrot.slane %v3019, 7
      %v3022 = vshll.u32 %v2934, 16
      %v3024 = vor.u32 %v3021, %v3022
      %v3025 = vrot.slane %v3021, 4
      %v3027 = vshrl.u32 %v2935, 16
      %v3029 = vrot.slane %v3027, 7
      %v3030 = vshll.u32 %v2935, 16
      %v3032 = vor.u32 %v3029, %v3030
      %v3033 = vsel %vm2966, %v3025, %v3032
      %v3034 = vrot.slane %v3029, 4
      %v3036 = vshrl.u32 %v2936, 16
      %v3038 = vrot.slane %v3036, 7
      %v3039 = vshll.u32 %v2936, 16
      %v3041 = vor.u32 %v3038, %v3039
      %v3042 = vrot.slane %v3038, 4
      %v3044 = vshrl.u32 %v2937, 16
      %v3046 = vrot.slane %v3044, 7
      %v3047 = vshll.u32 %v2937, 16
      %v3049 = vor.u32 %v3046, %v3047
      %v3050 = vsel %vm2966, %v3042, %v3049
      %v3051 = vrot.slane %v3046, 4
      %v3053 = vshrl.u32 %v2938, 16
      %v3055 = vrot.slane %v3053, 7
      %v3056 = vshll.u32 %v2938, 16
      %v3058 = vor.u32 %v3055, %v3056
      %v3059 = vrot.slane %v3055, 4
      %v3061 = vshrl.u32 %v2939, 16
      %v3063 = vrot.slane %v3061, 7
      %v3064 = vshll.u32 %v2939, 16
      %v3066 = vor.u32 %v3063, %v3064
      %v3067 = vsel %vm2966, %v3059, %v3066
      %v3068 = vrot.slane %v3063, 4
      %v3070 = vshrl.u32 %v2940, 16
      %v3072 = vrot.slane %v3070, 7
      %v3073 = vshll.u32 %v2940, 16
      %v3075 = vor.u32 %v3072, %v3073
      %v3076 = vrot.slane %v3072, 4
      %v3078 = vshrl.u32 %v2941, 16
      %v3080 = vrot.slane %v3078, 7
      %v3081 = vshll.u32 %v2941, 16
      %v3083 = vor.u32 %v3080, %v3081
      %v3084 = vsel %vm2966, %v3076, %v3083
      %v3085 = vrot.slane %v3080, 4
      %v3087 = vshrl.u32 %v2942, 16
      %v3089 = vrot.slane %v3087, 7
      %v3090 = vshll.u32 %v2942, 16
      %v3092 = vor.u32 %v3089, %v3090
      %v3093 = vrot.slane %v3089, 4
      %v3095 = vshrl.u32 %v2943, 16
      %v3097 = vrot.slane %v3095, 7
      %v3098 = vshll.u32 %v2943, 16
      %v3100 = vor.u32 %v3097, %v3098
      %v3101 = vsel %vm2966, %v3093, %v3100
      %v3102 = vrot.slane %v3097, 4
      %v3104 = vshrl.u32 %v2944, 16
      %v3106 = vrot.slane %v3104, 7
      %v3107 = vshll.u32 %v2944, 16
      %v3109 = vor.u32 %v3106, %v3107
      %v3110 = vrot.slane %v3106, 4
      %v3112 = vshrl.u32 %v2945, 16
      %v3114 = vrot.slane %v3112, 7
      %v3115 = vshll.u32 %v2945, 16
      %v3117 = vor.u32 %v3114, %v3115
      %v3118 = vsel %vm2966, %v3110, %v3117
      %v3119 = vrot.slane %v3114, 4
      %v3121 = vshrl.u32 %v2946, 16
      %v3123 = vrot.slane %v3121, 7
      %v3124 = vshll.u32 %v2946, 16
      %v3126 = vor.u32 %v3123, %v3124
      %v3127 = vrot.slane %v3123, 4
      %v3129 = vshrl.u32 %v2947, 16
      %v3131 = vrot.slane %v3129, 7
      %v3132 = vshll.u32 %v2947, 16
      %v3134 = vor.u32 %v3131, %v3132
      %v3135 = vsel %vm2966, %v3127, %v3134
      %v3136 = vrot.slane %v3131, 4
      %v3138 = vshrl.u32 %v2948, 16
      %v3140 = vrot.slane %v3138, 7
      %v3141 = vshll.u32 %v2948, 16
      %v3143 = vor.u32 %v3140, %v3141
      %v3144 = vrot.slane %v3140, 4
      %v3146 = vshrl.u32 %v2949, 16
      %v3148 = vrot.slane %v3146, 7
      %v3149 = vshll.u32 %v2949, 16
      %v3151 = vor.u32 %v3148, %v3149
      %v3152 = vsel %vm2966, %v3144, %v3151
      %v3153 = vrot.slane %v3148, 4
      %v3155 = vshrl.u32 %v2950, 16
      %v3157 = vrot.slane %v3155, 7
      %v3158 = vshll.u32 %v2950, 16
      %v3160 = vor.u32 %v3157, %v3158
      %v3161 = vrot.slane %v3157, 4
      %v3163 = vshrl.u32 %v2951, 16
      %v3165 = vrot.slane %v3163, 7
      %v3166 = vshll.u32 %v2951, 16
      %v3168 = vor.u32 %v3165, %v3166
      %v3169 = vsel %vm2966, %v3161, %v3168
      %v3170 = vrot.slane %v3165, 4
      %v3172 = vshrl.u32 %v2952, 16
      %v3174 = vrot.slane %v3172, 7
      %v3175 = vshll.u32 %v2952, 16
      %v3177 = vor.u32 %v3174, %v3175
      %v3178 = vrot.slane %v3174, 4
      %v3180 = vshrl.u32 %v2953, 16
      %v3182 = vrot.slane %v3180, 7
      %v3183 = vshll.u32 %v2953, 16
      %v3185 = vor.u32 %v3182, %v3183
      %v3186 = vsel %vm2966, %v3178, %v3185
      %v3187 = vrot.slane %v3182, 4
      %v3189 = vshrl.u32 %v2954, 16
      %v3191 = vrot.slane %v3189, 7
      %v3192 = vshll.u32 %v2954, 16
      %v3194 = vor.u32 %v3191, %v3192
      %v3195 = vrot.slane %v3191, 4
      %v3197 = vshrl.u32 %v2955, 16
      %v3199 = vrot.slane %v3197, 7
      %v3200 = vshll.u32 %v2955, 16
      %v3202 = vor.u32 %v3199, %v3200
      %v3203 = vsel %vm2966, %v3195, %v3202
      %v3204 = vrot.slane %v3199, 4
      %v3206 = vshrl.u32 %v2956, 16
      %v3208 = vrot.slane %v3206, 7
      %v3209 = vshll.u32 %v2956, 16
      %v3211 = vor.u32 %v3208, %v3209
      %v3212 = vrot.slane %v3208, 4
      %v3214 = vshrl.u32 %v2957, 16
      %v3216 = vrot.slane %v3214, 7
      %v3217 = vshll.u32 %v2957, 16
      %v3219 = vor.u32 %v3216, %v3217
      %v3220 = vsel %vm2966, %v3212, %v3219
      %v3221 = vrot.slane %v3216, 4
      %v3223 = vshrl.u32 %v2958, 16
      %v3225 = vrot.slane %v3223, 7
      %v3226 = vshll.u32 %v2958, 16
      %v3228 = vor.u32 %v3225, %v3226
      %v3229 = vrot.slane %v3225, 4
      %v3231 = vshrl.u32 %v2959, 16
      %v3233 = vrot.slane %v3231, 7
      %v3234 = vshll.u32 %v2959, 16
      %v3236 = vor.u32 %v3233, %v3234
      %v3237 = vsel %vm2966, %v3229, %v3236
      %v3238 = vrot.slane %v3233, 4
      %v3240 = vshrl.u32 %v2960, 16
      %v3242 = vrot.slane %v3240, 7
      %v3243 = vshll.u32 %v2960, 16
      %v3245 = vor.u32 %v3242, %v3243
      %v3246 = vrot.slane %v3242, 4
      %v3248 = vshrl.u32 %v2961, 16
      %v3250 = vrot.slane %v3248, 7
      %v3251 = vshll.u32 %v2961, 16
      %v3253 = vor.u32 %v3250, %v3251
      %v3254 = vsel %vm2966, %v3246, %v3253
      %v3255 = vrot.slane %v3250, 4
      %v3257 = vshrl.u32 %v2962, 16
      %v3259 = vrot.slane %v3257, 7
      %v3260 = vshll.u32 %v2962, 16
      %v3262 = vor.u32 %v3259, %v3260
      %v3263 = vrot.slane %v3259, 4
      %v3265 = vshrl.u32 %v2963, 16
      %v3267 = vrot.slane %v3265, 7
      %v3268 = vshll.u32 %v2963, 16
      %v3270 = vor.u32 %v3267, %v3268
      %v3271 = vsel %vm2966, %v3263, %v3270
      %v3272 = vrot.slane %v3267, 4
      %vm3327 = vcmask 1043456
      %vm3328 = vsmask.f32 7938
      %vm3329 = vmand %vm3327, %vm3328
      %v3330 = vld [vmem:[#allocation2] sm:$0xf]
      %v3331 = vsel %vm3329, %v2973, %v3330
      %3332 = vst [vmem:[#allocation2] sm:$0xf] %v3331
      %3333 = vst [vmem:[#allocation2 + $0x4] sm:$0xf] %v2982
      %vm3334 = vcmask 1040384
      %vm3335 = vmand %vm3334, %vm2964
      %v3336 = vld [vmem:[#allocation2 + $0x8] sm:$0x1]
      %v3337 = vsel %vm3335, %v2983, %v3336
      %3338 = vst [vmem:[#allocation2 + $0x8] sm:$0x1] %v3337
      %v3339 = vld [vmem:[#allocation2 + $0xc] sm:$0xf]
      %v3340 = vsel %vm3329, %v2990, %v3339
      %3341 = vst [vmem:[#allocation2 + $0xc] sm:$0xf] %v3340
      %3342 = vst [vmem:[#allocation2 + $0x10] sm:$0xf] %v2999
      %v3343 = vld [vmem:[#allocation2 + $0x14] sm:$0x1]
      %v3344 = vsel %vm3335, %v3000, %v3343
      %3345 = vst [vmem:[#allocation2 + $0x14] sm:$0x1] %v3344
      %v3346 = vld [vmem:[#allocation2 + $0x18] sm:$0xf]
      %v3347 = vsel %vm3329, %v3007, %v3346
      %3348 = vst [vmem:[#allocation2 + $0x18] sm:$0xf] %v3347
      %3349 = vst [vmem:[#allocation2 + $0x1c] sm:$0xf] %v3016
      %v3350 = vld [vmem:[#allocation2 + $0x20] sm:$0x1]
      %v3351 = vsel %vm3335, %v3017, %v3350
      %3352 = vst [vmem:[#allocation2 + $0x20] sm:$0x1] %v3351
      %v3353 = vld [vmem:[#allocation2 + $0x24] sm:$0xf]
      %v3354 = vsel %vm3329, %v3024, %v3353
      %3355 = vst [vmem:[#allocation2 + $0x24] sm:$0xf] %v3354
      %3356 = vst [vmem:[#allocation2 + $0x28] sm:$0xf] %v3033
      %v3357 = vld [vmem:[#allocation2 + $0x2c] sm:$0x1]
      %v3358 = vsel %vm3335, %v3034, %v3357
      %3359 = vst [vmem:[#allocation2 + $0x2c] sm:$0x1] %v3358
      %v3360 = vld [vmem:[#allocation2 + $0x30] sm:$0xf]
      %v3361 = vsel %vm3329, %v3041, %v3360
      %3362 = vst [vmem:[#allocation2 + $0x30] sm:$0xf] %v3361
      %3363 = vst [vmem:[#allocation2 + $0x34] sm:$0xf] %v3050
      %v3364 = vld [vmem:[#allocation2 + $0x38] sm:$0x1]
      %v3365 = vsel %vm3335, %v3051, %v3364
      %3366 = vst [vmem:[#allocation2 + $0x38] sm:$0x1] %v3365
      %v3367 = vld [vmem:[#allocation2 + $0x3c] sm:$0xf]
      %v3368 = vsel %vm3329, %v3058, %v3367
      %3369 = vst [vmem:[#allocation2 + $0x3c] sm:$0xf] %v3368
      %3370 = vst [vmem:[#allocation2 + $0x40] sm:$0xf] %v3067
      %v3371 = vld [vmem:[#allocation2 + $0x44] sm:$0x1]
      %v3372 = vsel %vm3335, %v3068, %v3371
      %3373 = vst [vmem:[#allocation2 + $0x44] sm:$0x1] %v3372
      %v3374 = vld [vmem:[#allocation2 + $0x48] sm:$0xf]
      %v3375 = vsel %vm3329, %v3075, %v3374
      %3376 = vst [vmem:[#allocation2 + $0x48] sm:$0xf] %v3375
      %3377 = vst [vmem:[#allocation2 + $0x4c] sm:$0xf] %v3084
      %v3378 = vld [vmem:[#allocation2 + $0x50] sm:$0x1]
      %v3379 = vsel %vm3335, %v3085, %v3378
      %3380 = vst [vmem:[#allocation2 + $0x50] sm:$0x1] %v3379
      %v3381 = vld [vmem:[#allocation2 + $0x54] sm:$0xf]
      %v3382 = vsel %vm3329, %v3092, %v3381
      %3383 = vst [vmem:[#allocation2 + $0x54] sm:$0xf] %v3382
      %3384 = vst [vmem:[#allocation2 + $0x58] sm:$0xf] %v3101
      %v3385 = vld [vmem:[#allocation2 + $0x5c] sm:$0x1]
      %v3386 = vsel %vm3335, %v3102, %v3385
      %3387 = vst [vmem:[#allocation2 + $0x5c] sm:$0x1] %v3386
      %v3388 = vld [vmem:[#allocation2 + $0x60] sm:$0xf]
      %v3389 = vsel %vm3329, %v3109, %v3388
      %3390 = vst [vmem:[#allocation2 + $0x60] sm:$0xf] %v3389
      %3391 = vst [vmem:[#allocation2 + $0x64] sm:$0xf] %v3118
      %v3392 = vld [vmem:[#allocation2 + $0x68] sm:$0x1]
      %v3393 = vsel %vm3335, %v3119, %v3392
      %3394 = vst [vmem:[#allocation2 + $0x68] sm:$0x1] %v3393
      %v3395 = vld [vmem:[#allocation2 + $0x6c] sm:$0xf]
      %v3396 = vsel %vm3329, %v3126, %v3395
      %3397 = vst [vmem:[#allocation2 + $0x6c] sm:$0xf] %v3396
      %3398 = vst [vmem:[#allocation2 + $0x70] sm:$0xf] %v3135
      %v3399 = vld [vmem:[#allocation2 + $0x74] sm:$0x1]
      %v3400 = vsel %vm3335, %v3136, %v3399
      %3401 = vst [vmem:[#allocation2 + $0x74] sm:$0x1] %v3400
      %v3402 = vld [vmem:[#allocation2 + $0x78] sm:$0xf]
      %v3403 = vsel %vm3329, %v3143, %v3402
      %3404 = vst [vmem:[#allocation2 + $0x78] sm:$0xf] %v3403
      %3405 = vst [vmem:[#allocation2 + $0x7c] sm:$0xf] %v3152
      %v3406 = vld [vmem:[#allocation2 + $0x80] sm:$0x1]
      %v3407 = vsel %vm3335, %v3153, %v3406
      %3408 = vst [vmem:[#allocation2 + $0x80] sm:$0x1] %v3407
      %v3409 = vld [vmem:[#allocation2 + $0x84] sm:$0xf]
      %v3410 = vsel %vm3329, %v3160, %v3409
      %3411 = vst [vmem:[#allocation2 + $0x84] sm:$0xf] %v3410
      %3412 = vst [vmem:[#allocation2 + $0x88] sm:$0xf] %v3169
      %v3413 = vld [vmem:[#allocation2 + $0x8c] sm:$0x1]
      %v3414 = vsel %vm3335, %v3170, %v3413
      %3415 = vst [vmem:[#allocation2 + $0x8c] sm:$0x1] %v3414
      %v3416 = vld [vmem:[#allocation2 + $0x90] sm:$0xf]
      %v3417 = vsel %vm3329, %v3177, %v3416
      %3418 = vst [vmem:[#allocation2 + $0x90] sm:$0xf] %v3417
      %3419 = vst [vmem:[#allocation2 + $0x94] sm:$0xf] %v3186
      %v3420 = vld [vmem:[#allocation2 + $0x98] sm:$0x1]
      %v3421 = vsel %vm3335, %v3187, %v3420
      %3422 = vst [vmem:[#allocation2 + $0x98] sm:$0x1] %v3421
      %v3423 = vld [vmem:[#allocation2 + $0x9c] sm:$0xf]
      %v3424 = vsel %vm3329, %v3194, %v3423
      %3425 = vst [vmem:[#allocation2 + $0x9c] sm:$0xf] %v3424
      %3426 = vst [vmem:[#allocation2 + $0xa0] sm:$0xf] %v3203
      %v3427 = vld [vmem:[#allocation2 + $0xa4] sm:$0x1]
      %v3428 = vsel %vm3335, %v3204, %v3427
      %3429 = vst [vmem:[#allocation2 + $0xa4] sm:$0x1] %v3428
      %v3430 = vld [vmem:[#allocation2 + $0xa8] sm:$0xf]
      %v3431 = vsel %vm3329, %v3211, %v3430
      %3432 = vst [vmem:[#allocation2 + $0xa8] sm:$0xf] %v3431
      %3433 = vst [vmem:[#allocation2 + $0xac] sm:$0xf] %v3220
      %v3434 = vld [vmem:[#allocation2 + $0xb0] sm:$0x1]
      %v3435 = vsel %vm3335, %v3221, %v3434
      %3436 = vst [vmem:[#allocation2 + $0xb0] sm:$0x1] %v3435
      %v3437 = vld [vmem:[#allocation2 + $0xb4] sm:$0xf]
      %v3438 = vsel %vm3329, %v3228, %v3437
      %3439 = vst [vmem:[#allocation2 + $0xb4] sm:$0xf] %v3438
      %3440 = vst [vmem:[#allocation2 + $0xb8] sm:$0xf] %v3237
      %v3441 = vld [vmem:[#allocation2 + $0xbc] sm:$0x1]
      %v3442 = vsel %vm3335, %v3238, %v3441
      %3443 = vst [vmem:[#allocation2 + $0xbc] sm:$0x1] %v3442
      %v3444 = vld [vmem:[#allocation2 + $0xc0] sm:$0xf]
      %v3445 = vsel %vm3329, %v3245, %v3444
      %3446 = vst [vmem:[#allocation2 + $0xc0] sm:$0xf] %v3445
      %3447 = vst [vmem:[#allocation2 + $0xc4] sm:$0xf] %v3254
      %v3448 = vld [vmem:[#allocation2 + $0xc8] sm:$0x1]
      %v3449 = vsel %vm3335, %v3255, %v3448
      %3450 = vst [vmem:[#allocation2 + $0xc8] sm:$0x1] %v3449
      %v3451 = vld [vmem:[#allocation2 + $0xcc] sm:$0xf]
      %v3452 = vsel %vm3329, %v3262, %v3451
      %3453 = vst [vmem:[#allocation2 + $0xcc] sm:$0xf] %v3452
      %3454 = vst [vmem:[#allocation2 + $0xd0] sm:$0xf] %v3271
      %v3455 = vld [vmem:[#allocation2 + $0xd4] sm:$0x1]
      %v3456 = vsel %vm3335, %v3272, %v3455
      %3457 = vst [vmem:[#allocation2 + $0xd4] sm:$0x1] %v3456
      %v3458 = vld [vmem:[#allocation2] sm:$0x1]
      %v3459 = vsel %vm3335, 0, %v3458
      %3460 = vst [vmem:[#allocation2] sm:$0x1] %v3459
      %v3461 = vld [vmem:[#allocation2 + $0xc] sm:$0x1]
      %v3462 = vsel %vm3335, 0, %v3461
      %3463 = vst [vmem:[#allocation2 + $0xc] sm:$0x1] %v3462
      %v3464 = vld [vmem:[#allocation2 + $0x18] sm:$0x1]
      %v3465 = vsel %vm3335, 0, %v3464
      %3466 = vst [vmem:[#allocation2 + $0x18] sm:$0x1] %v3465
      %v3467 = vld [vmem:[#allocation2 + $0x24] sm:$0x1]
      %v3468 = vsel %vm3335, 0, %v3467
      %3469 = vst [vmem:[#allocation2 + $0x24] sm:$0x1] %v3468
      %v3470 = vld [vmem:[#allocation2 + $0x30] sm:$0x1]
      %v3471 = vsel %vm3335, 0, %v3470
      %3472 = vst [vmem:[#allocation2 + $0x30] sm:$0x1] %v3471
      %v3473 = vld [vmem:[#allocation2 + $0x3c] sm:$0x1]
      %v3474 = vsel %vm3335, 0, %v3473
      %3475 = vst [vmem:[#allocation2 + $0x3c] sm:$0x1] %v3474
      %v3476 = vld [vmem:[#allocation2 + $0x48] sm:$0x1]
      %v3477 = vsel %vm3335, 0, %v3476
      %3478 = vst [vmem:[#allocation2 + $0x48] sm:$0x1] %v3477
      %v3479 = vld [vmem:[#allocation2 + $0x54] sm:$0x1]
      %v3480 = vsel %vm3335, 0, %v3479
      %3481 = vst [vmem:[#allocation2 + $0x54] sm:$0x1] %v3480
      %v3482 = vld [vmem:[#allocation2 + $0x60] sm:$0x1]
      %v3483 = vsel %vm3335, 0, %v3482
      %3484 = vst [vmem:[#allocation2 + $0x60] sm:$0x1] %v3483
      %v3485 = vld [vmem:[#allocation2 + $0x6c] sm:$0x1]
      %v3486 = vsel %vm3335, 0, %v3485
      %3487 = vst [vmem:[#allocation2 + $0x6c] sm:$0x1] %v3486
      %v3488 = vld [vmem:[#allocation2 + $0x78] sm:$0x1]
      %v3489 = vsel %vm3335, 0, %v3488
      %3490 = vst [vmem:[#allocation2 + $0x78] sm:$0x1] %v3489
      %v3491 = vld [vmem:[#allocation2 + $0x84] sm:$0x1]
      %v3492 = vsel %vm3335, 0, %v3491
      %3493 = vst [vmem:[#allocation2 + $0x84] sm:$0x1] %v3492
      %v3494 = vld [vmem:[#allocation2 + $0x90] sm:$0x1]
      %v3495 = vsel %vm3335, 0, %v3494
      %3496 = vst [vmem:[#allocation2 + $0x90] sm:$0x1] %v3495
      %v3497 = vld [vmem:[#allocation2 + $0x9c] sm:$0x1]
      %v3498 = vsel %vm3335, 0, %v3497
      %3499 = vst [vmem:[#allocation2 + $0x9c] sm:$0x1] %v3498
      %v3500 = vld [vmem:[#allocation2 + $0xa8] sm:$0x1]
      %v3501 = vsel %vm3335, 0, %v3500
      %3502 = vst [vmem:[#allocation2 + $0xa8] sm:$0x1] %v3501
      %v3503 = vld [vmem:[#allocation2 + $0xb4] sm:$0x1]
      %v3504 = vsel %vm3335, 0, %v3503
      %3505 = vst [vmem:[#allocation2 + $0xb4] sm:$0x1] %v3504
      %v3506 = vld [vmem:[#allocation2 + $0xc0] sm:$0x1]
      %v3507 = vsel %vm3335, 0, %v3506
      %3508 = vst [vmem:[#allocation2 + $0xc0] sm:$0x1] %v3507
      %v3509 = vld [vmem:[#allocation2 + $0xcc] sm:$0x1]
      %v3510 = vsel %vm3335, 0, %v3509
      %3511 = vst [vmem:[#allocation2 + $0xcc] sm:$0x1] %v3510
      %vm3512 = vmand %vm3334, %vm3328
      %v3513 = vld [vmem:[#allocation2 + $0x8] sm:$0x1]
      %v3514 = vsel %vm3512, 0, %v3513
      %3515 = vst [vmem:[#allocation2 + $0x8] sm:$0x1] %v3514
      %v3516 = vld [vmem:[#allocation2 + $0x14] sm:$0x1]
      %v3517 = vsel %vm3512, 0, %v3516
      %3518 = vst [vmem:[#allocation2 + $0x14] sm:$0x1] %v3517
      %v3519 = vld [vmem:[#allocation2 + $0x20] sm:$0x1]
      %v3520 = vsel %vm3512, 0, %v3519
      %3521 = vst [vmem:[#allocation2 + $0x20] sm:$0x1] %v3520
      %v3522 = vld [vmem:[#allocation2 + $0x2c] sm:$0x1]
      %v3523 = vsel %vm3512, 0, %v3522
      %3524 = vst [vmem:[#allocation2 + $0x2c] sm:$0x1] %v3523
      %v3525 = vld [vmem:[#allocation2 + $0x38] sm:$0x1]
      %v3526 = vsel %vm3512, 0, %v3525
      %3527 = vst [vmem:[#allocation2 + $0x38] sm:$0x1] %v3526
      %v3528 = vld [vmem:[#allocation2 + $0x44] sm:$0x1]
      %v3529 = vsel %vm3512, 0, %v3528
      %3530 = vst [vmem:[#allocation2 + $0x44] sm:$0x1] %v3529
      %v3531 = vld [vmem:[#allocation2 + $0x50] sm:$0x1]
      %v3532 = vsel %vm3512, 0, %v3531
      %3533 = vst [vmem:[#allocation2 + $0x50] sm:$0x1] %v3532
      %v3534 = vld [vmem:[#allocation2 + $0x5c] sm:$0x1]
      %v3535 = vsel %vm3512, 0, %v3534
      %3536 = vst [vmem:[#allocation2 + $0x5c] sm:$0x1] %v3535
      %v3537 = vld [vmem:[#allocation2 + $0x68] sm:$0x1]
      %v3538 = vsel %vm3512, 0, %v3537
      %3539 = vst [vmem:[#allocation2 + $0x68] sm:$0x1] %v3538
      %v3540 = vld [vmem:[#allocation2 + $0x74] sm:$0x1]
      %v3541 = vsel %vm3512, 0, %v3540
      %3542 = vst [vmem:[#allocation2 + $0x74] sm:$0x1] %v3541
      %v3543 = vld [vmem:[#allocation2 + $0x80] sm:$0x1]
      %v3544 = vsel %vm3512, 0, %v3543
      %3545 = vst [vmem:[#allocation2 + $0x80] sm:$0x1] %v3544
      %v3546 = vld [vmem:[#allocation2 + $0x8c] sm:$0x1]
      %v3547 = vsel %vm3512, 0, %v3546
      %3548 = vst [vmem:[#allocation2 + $0x8c] sm:$0x1] %v3547
      %v3549 = vld [vmem:[#allocation2 + $0x98] sm:$0x1]
      %v3550 = vsel %vm3512, 0, %v3549
      %3551 = vst [vmem:[#allocation2 + $0x98] sm:$0x1] %v3550
      %v3552 = vld [vmem:[#allocation2 + $0xa4] sm:$0x1]
      %v3553 = vsel %vm3512, 0, %v3552
      %3554 = vst [vmem:[#allocation2 + $0xa4] sm:$0x1] %v3553
      %v3555 = vld [vmem:[#allocation2 + $0xb0] sm:$0x1]
      %v3556 = vsel %vm3512, 0, %v3555
      %3557 = vst [vmem:[#allocation2 + $0xb0] sm:$0x1] %v3556
      %v3558 = vld [vmem:[#allocation2 + $0xbc] sm:$0x1]
      %v3559 = vsel %vm3512, 0, %v3558
      %3560 = vst [vmem:[#allocation2 + $0xbc] sm:$0x1] %v3559
      %v3561 = vld [vmem:[#allocation2 + $0xc8] sm:$0x1]
      %v3562 = vsel %vm3512, 0, %v3561
      %3563 = vst [vmem:[#allocation2 + $0xc8] sm:$0x1] %v3562
      %v3564 = vld [vmem:[#allocation2 + $0xd4] sm:$0x1]
      %v3565 = vsel %vm3512, 0, %v3564
      %3566 = vst [vmem:[#allocation2 + $0xd4] sm:$0x1] %v3565
      %v3567 = vld [vmem:[#allocation2] sm:$0xf]
      %v3568 = vld [vmem:[#allocation2 + $0x4] sm:$0xf]
      %v3569 = vld [vmem:[#allocation2 + $0x8] sm:$0x1]
      %v3570 = vld [vmem:[#allocation2 + $0xc] sm:$0xf]
      %v3571 = vld [vmem:[#allocation2 + $0x10] sm:$0xf]
      %v3572 = vld [vmem:[#allocation2 + $0x14] sm:$0x1]
      %v3573 = vld [vmem:[#allocation2 + $0x18] sm:$0xf]
      %v3574 = vld [vmem:[#allocation2 + $0x1c] sm:$0xf]
      %v3575 = vld [vmem:[#allocation2 + $0x20] sm:$0x1]
      %v3576 = vld [vmem:[#allocation2 + $0x24] sm:$0xf]
      %v3577 = vld [vmem:[#allocation2 + $0x28] sm:$0xf]
      %v3578 = vld [vmem:[#allocation2 + $0x2c] sm:$0x1]
      %v3579 = vld [vmem:[#allocation2 + $0x30] sm:$0xf]
      %v3580 = vld [vmem:[#allocation2 + $0x34] sm:$0xf]
      %v3581 = vld [vmem:[#allocation2 + $0x38] sm:$0x1]
      %v3582 = vld [vmem:[#allocation2 + $0x3c] sm:$0xf]
      %v3583 = vld [vmem:[#allocation2 + $0x40] sm:$0xf]
      %v3584 = vld [vmem:[#allocation2 + $0x44] sm:$0x1]
      %v3585 = vld [vmem:[#allocation2 + $0x48] sm:$0xf]
      %v3586 = vld [vmem:[#allocation2 + $0x4c] sm:$0xf]
      %v3587 = vld [vmem:[#allocation2 + $0x50] sm:$0x1]
      %v3588 = vld [vmem:[#allocation2 + $0x54] sm:$0xf]
      %v3589 = vld [vmem:[#allocation2 + $0x58] sm:$0xf]
      %v3590 = vld [vmem:[#allocation2 + $0x5c] sm:$0x1]
      %v3591 = vld [vmem:[#allocation2 + $0x60] sm:$0xf]
      %v3592 = vld [vmem:[#allocation2 + $0x64] sm:$0xf]
      %v3593 = vld [vmem:[#allocation2 + $0x68] sm:$0x1]
      %v3594 = vld [vmem:[#allocation2 + $0x6c] sm:$0xf]
      %v3595 = vld [vmem:[#allocation2 + $0x70] sm:$0xf]
      %v3596 = vld [vmem:[#allocation2 + $0x74] sm:$0x1]
      %v3597 = vld [vmem:[#allocation2 + $0x78] sm:$0xf]
      %v3598 = vld [vmem:[#allocation2 + $0x7c] sm:$0xf]
      %v3599 = vld [vmem:[#allocation2 + $0x80] sm:$0x1]
      %v3600 = vld [vmem:[#allocation2 + $0x84] sm:$0xf]
      %v3601 = vld [vmem:[#allocation2 + $0x88] sm:$0xf]
      %v3602 = vld [vmem:[#allocation2 + $0x8c] sm:$0x1]
      %v3603 = vld [vmem:[#allocation2 + $0x90] sm:$0xf]
      %v3604 = vld [vmem:[#allocation2 + $0x94] sm:$0xf]
      %v3605 = vld [vmem:[#allocation2 + $0x98] sm:$0x1]
      %v3606 = vld [vmem:[#allocation2 + $0x9c] sm:$0xf]
      %v3607 = vld [vmem:[#allocation2 + $0xa0] sm:$0xf]
      %v3608 = vld [vmem:[#allocation2 + $0xa4] sm:$0x1]
      %v3609 = vld [vmem:[#allocation2 + $0xa8] sm:$0xf]
      %v3610 = vld [vmem:[#allocation2 + $0xac] sm:$0xf]
      %v3611 = vld [vmem:[#allocation2 + $0xb0] sm:$0x1]
      %v3612 = vld [vmem:[#allocation2 + $0xb4] sm:$0xf]
      %v3613 = vld [vmem:[#allocation2 + $0xb8] sm:$0xf]
      %v3614 = vld [vmem:[#allocation2 + $0xbc] sm:$0x1]
      %v3615 = vld [vmem:[#allocation2 + $0xc0] sm:$0xf]
      %v3616 = vld [vmem:[#allocation2 + $0xc4] sm:$0xf]
      %v3617 = vld [vmem:[#allocation2 + $0xc8] sm:$0x1]
      %v3618 = vld [vmem:[#allocation2 + $0xcc] sm:$0xf]
      %v3619 = vld [vmem:[#allocation2 + $0xd0] sm:$0xf]
      %v3620 = vld [vmem:[#allocation2 + $0xd4] sm:$0x1]
      %v3621 = vld [vmem:[%s3] sm:$0xf]
      %v3622 = vld [vmem:[%s3 + $0x4] sm:$0xf]
      %v3623 = vld [vmem:[%s3 + $0x8] sm:$0xf]
      %v3624 = vld [vmem:[%s3 + $0xc] sm:$0xf]
      %v3625 = vld [vmem:[%s3 + $0x10] sm:$0xf]
      %v3626 = vld [vmem:[%s3 + $0x14] sm:$0xf]
      %v3627 = vld [vmem:[%s3 + $0x18] sm:$0xf]
      %v3628 = vld [vmem:[%s3 + $0x1c] sm:$0xf]
      %v3629 = vld [vmem:[%s3 + $0x20] sm:$0xf]
      %v3630 = vld [vmem:[%s3 + $0x24] sm:$0xf]
      %v3631 = vld [vmem:[%s3 + $0x28] sm:$0xf]
      %v3632 = vld [vmem:[%s3 + $0x2c] sm:$0xf]
      %v3633 = vld [vmem:[%s3 + $0x30] sm:$0xf]
      %v3634 = vld [vmem:[%s3 + $0x34] sm:$0xf]
      %v3635 = vld [vmem:[%s3 + $0x38] sm:$0xf]
      %v3636 = vld [vmem:[%s3 + $0x3c] sm:$0xf]
      %v3637 = vld [vmem:[%s3 + $0x40] sm:$0xf]
      %v3638 = vld [vmem:[%s3 + $0x44] sm:$0xf]
      %v3639 = vld [vmem:[%s3 + $0x48] sm:$0xf]
      %v3640 = vld [vmem:[%s3 + $0x4c] sm:$0xf]
      %v3641 = vld [vmem:[%s3 + $0x50] sm:$0xf]
      %v3642 = vld [vmem:[%s3 + $0x54] sm:$0xf]
      %v3643 = vld [vmem:[%s3 + $0x58] sm:$0xf]
      %v3644 = vld [vmem:[%s3 + $0x5c] sm:$0xf]
      %v3645 = vld [vmem:[%s3 + $0x60] sm:$0xf]
      %v3646 = vld [vmem:[%s3 + $0x64] sm:$0xf]
      %v3647 = vld [vmem:[%s3 + $0x68] sm:$0xf]
      %v3648 = vld [vmem:[%s3 + $0x6c] sm:$0xf]
      %v3649 = vld [vmem:[%s3 + $0x70] sm:$0xf]
      %v3650 = vld [vmem:[%s3 + $0x74] sm:$0xf]
      %v3651 = vld [vmem:[%s3 + $0x78] sm:$0xf]
      %v3652 = vld [vmem:[%s3 + $0x7c] sm:$0xf]
      %v3653 = vld [vmem:[%s3 + $0x80] sm:$0xf]
      %v3654 = vld [vmem:[%s3 + $0x84] sm:$0xf]
      %v3655 = vld [vmem:[%s3 + $0x88] sm:$0xf]
      %v3656 = vld [vmem:[%s3 + $0x8c] sm:$0xf]
      %v3657 = vld [vmem:[%s3 + $0x90] sm:$0xf]
      %v3658 = vld [vmem:[%s3 + $0x94] sm:$0xf]
      %v3659 = vld [vmem:[%s3 + $0x98] sm:$0xf]
      %v3660 = vld [vmem:[%s3 + $0x9c] sm:$0xf]
      %v3661 = vld [vmem:[%s3 + $0xa0] sm:$0xf]
      %v3662 = vld [vmem:[%s3 + $0xa4] sm:$0xf]
      %v3663 = vld [vmem:[%s3 + $0xa8] sm:$0xf]
      %v3664 = vld [vmem:[%s3 + $0xac] sm:$0xf]
      %v3665 = vld [vmem:[%s3 + $0xb0] sm:$0xf]
      %v3666 = vld [vmem:[%s3 + $0xb4] sm:$0xf]
      %v3667 = vld [vmem:[%s3 + $0xb8] sm:$0xf]
      %v3668 = vld [vmem:[%s3 + $0xbc] sm:$0xf]
      %v3669 = vld [vmem:[%s3 + $0xc0] sm:$0xf]
      %v3670 = vld [vmem:[%s3 + $0xc4] sm:$0xf]
      %v3671 = vld [vmem:[%s3 + $0xc8] sm:$0xf]
      %v3672 = vld [vmem:[%s3 + $0xcc] sm:$0xf]
      %v3673 = vld [vmem:[%s3 + $0xd0] sm:$0xf]
      %v3674 = vld [vmem:[%s3 + $0xd4] sm:$0xf]
      %v3675 = vld [vmem:[%s3 + $0xd8] sm:$0xf]
      %v3676 = vld [vmem:[%s3 + $0xdc] sm:$0xf]
      %v3677 = vld [vmem:[%s3 + $0xe0] sm:$0xf]
      %v3678 = vld [vmem:[%s3 + $0xe4] sm:$0xf]
      %v3679 = vld [vmem:[%s3 + $0xe8] sm:$0xf]
      %v3680 = vld [vmem:[%s3 + $0xec] sm:$0xf]
      %v3681 = vld [vmem:[%s3 + $0xf0] sm:$0xf]
      %v3682 = vld [vmem:[%s3 + $0xf4] sm:$0xf]
      %v3683 = vld [vmem:[%s3 + $0xf8] sm:$0xf]
      %v3684 = vld [vmem:[%s3 + $0xfc] sm:$0xf]
      %v3685 = vld [vmem:[%s3 + $0x100] sm:$0xf]
      %v3686 = vld [vmem:[%s3 + $0x104] sm:$0xf]
      %v3687 = vld [vmem:[%s3 + $0x108] sm:$0xf]
      %v3688 = vld [vmem:[%s3 + $0x10c] sm:$0xf]
      %v3689 = vld [vmem:[%s3 + $0x110] sm:$0xf]
      %v3690 = vld [vmem:[%s3 + $0x114] sm:$0xf]
      %v3691 = vld [vmem:[%s3 + $0x118] sm:$0xf]
      %v3692 = vld [vmem:[%s3 + $0x11c] sm:$0xf]
      %v3693 = vld [vmem:[%s3 + $0x120] sm:$0xf]
      %v3694 = vld [vmem:[%s3 + $0x124] sm:$0xf]
      %v3695 = vld [vmem:[%s3 + $0x128] sm:$0xf]
      %v3696 = vld [vmem:[%s3 + $0x12c] sm:$0xf]
      %v3697 = vld [vmem:[%s3 + $0x130] sm:$0xf]
      %v3698 = vld [vmem:[%s3 + $0x134] sm:$0xf]
      %v3699 = vld [vmem:[%s3 + $0x138] sm:$0xf]
      %v3700 = vld [vmem:[%s3 + $0x13c] sm:$0xf]
      %v3701 = vld [vmem:[%s3 + $0x140] sm:$0xf]
      %v3702 = vld [vmem:[%s3 + $0x144] sm:$0xf]
      %v3703 = vld [vmem:[%s3 + $0x148] sm:$0xf]
      %v3704 = vld [vmem:[%s3 + $0x14c] sm:$0xf]
      %v3705 = vld [vmem:[%s3 + $0x150] sm:$0xf]
      %v3706 = vld [vmem:[%s3 + $0x154] sm:$0xf]
      %v3707 = vld [vmem:[%s3 + $0x158] sm:$0xf]
      %v3708 = vld [vmem:[%s3 + $0x15c] sm:$0xf]
      %v3709 = vld [vmem:[%s3 + $0x160] sm:$0xf]
      %v3710 = vld [vmem:[%s3 + $0x164] sm:$0xf]
      %v3711 = vld [vmem:[%s3 + $0x168] sm:$0xf]
      %v3712 = vld [vmem:[%s3 + $0x16c] sm:$0xf]
      %v3713 = vld [vmem:[%s3 + $0x170] sm:$0xf]
      %v3714 = vld [vmem:[%s3 + $0x174] sm:$0xf]
      %v3715 = vld [vmem:[%s3 + $0x178] sm:$0xf]
      %v3716 = vld [vmem:[%s3 + $0x17c] sm:$0xf]
      %v3717 = vld [vmem:[%s3 + $0x180] sm:$0xf]
      %v3718 = vld [vmem:[%s3 + $0x184] sm:$0xf]
      %v3719 = vld [vmem:[%s3 + $0x188] sm:$0xf]
      %v3720 = vld [vmem:[%s3 + $0x18c] sm:$0xf]
      %v3721 = vld [vmem:[%s3 + $0x190] sm:$0xf]
      %v3722 = vld [vmem:[%s3 + $0x194] sm:$0xf]
      %v3723 = vld [vmem:[%s3 + $0x198] sm:$0xf]
      %v3724 = vld [vmem:[%s3 + $0x19c] sm:$0xf]
      %v3725 = vld [vmem:[%s3 + $0x1a0] sm:$0xf]
      %v3726 = vld [vmem:[%s3 + $0x1a4] sm:$0xf]
      %v3727 = vld [vmem:[%s3 + $0x1a8] sm:$0xf]
      %v3728 = vld [vmem:[%s3 + $0x1ac] sm:$0xf]
      %v3729 = vld [vmem:[%s3 + $0x1b0] sm:$0xf]
      %v3730 = vld [vmem:[%s3 + $0x1b4] sm:$0xf]
      %v3731 = vld [vmem:[%s3 + $0x1b8] sm:$0xf]
      %v3732 = vld [vmem:[%s3 + $0x1bc] sm:$0xf]
      %v3733 = vld [vmem:[%s3 + $0x1c0] sm:$0xf]
      %v3734 = vld [vmem:[%s3 + $0x1c4] sm:$0xf]
      %v3735 = vld [vmem:[%s3 + $0x1c8] sm:$0xf]
      %v3736 = vld [vmem:[%s3 + $0x1cc] sm:$0xf]
      %v3737 = vld [vmem:[%s3 + $0x1d0] sm:$0xf]
      %v3738 = vld [vmem:[%s3 + $0x1d4] sm:$0xf]
      %v3739 = vld [vmem:[%s3 + $0x1d8] sm:$0xf]
      %v3740 = vld [vmem:[%s3 + $0x1dc] sm:$0xf]
      %v3741 = vld [vmem:[%s3 + $0x1e0] sm:$0xf]
      %v3742 = vld [vmem:[%s3 + $0x1e4] sm:$0xf]
      %v3743 = vld [vmem:[%s3 + $0x1e8] sm:$0xf]
      %v3744 = vld [vmem:[%s3 + $0x1ec] sm:$0xf]
      %v3745 = vld [vmem:[%s3 + $0x1f0] sm:$0xf]
      %v3746 = vld [vmem:[%s3 + $0x1f4] sm:$0xf]
      %v3747 = vld [vmem:[%s3 + $0x1f8] sm:$0xf]
      %v3748 = vld [vmem:[%s3 + $0x1fc] sm:$0xf]
      %v3749 = vld [vmem:[%s3 + $0x200] sm:$0xf]
      %v3750 = vld [vmem:[%s3 + $0x204] sm:$0xf]
      %v3751 = vld [vmem:[%s3 + $0x208] sm:$0xf]
      %v3752 = vld [vmem:[%s3 + $0x20c] sm:$0xf]
      %v3753 = vld [vmem:[%s3 + $0x210] sm:$0xf]
      %v3754 = vld [vmem:[%s3 + $0x214] sm:$0xf]
      %v3755 = vld [vmem:[%s3 + $0x218] sm:$0xf]
      %v3756 = vld [vmem:[%s3 + $0x21c] sm:$0xf]
      %v3757 = vld [vmem:[%s3 + $0x220] sm:$0xf]
      %v3758 = vld [vmem:[%s3 + $0x224] sm:$0xf]
      %v3759 = vld [vmem:[%s3 + $0x228] sm:$0xf]
      %v3760 = vld [vmem:[%s3 + $0x22c] sm:$0xf]
      %v3761 = vld [vmem:[%s3 + $0x230] sm:$0xf]
      %v3762 = vld [vmem:[%s3 + $0x234] sm:$0xf]
      %v3763 = vld [vmem:[%s3 + $0x238] sm:$0xf]
      %v3764 = vld [vmem:[%s3 + $0x23c] sm:$0xf]
      %v3813 = vunpack.c.l.b16 %v3567
      %v3814 = vunpack.c.l.b16 %v3568
      %v3815 = vunpack.c.l.b16 %v3569
      %v3816 = vunpack.c.l.b16 %v3570
      %v3817 = vunpack.c.l.b16 %v3571
      %v3818 = vunpack.c.l.b16 %v3572
      %v3819 = vunpack.c.l.b16 %v3573
      %v3820 = vunpack.c.l.b16 %v3574
      %v3821 = vunpack.c.l.b16 %v3575
      %v3822 = vunpack.c.l.b16 %v3576
      %v3823 = vunpack.c.l.b16 %v3577
      %v3824 = vunpack.c.l.b16 %v3578
      %v3825 = vunpack.c.l.b16 %v3579
      %v3826 = vunpack.c.l.b16 %v3580
      %v3827 = vunpack.c.l.b16 %v3581
      %v3828 = vunpack.c.l.b16 %v3582
      %v3829 = vunpack.c.l.b16 %v3583
      %v3830 = vunpack.c.l.b16 %v3584
      %v3831 = vunpack.c.l.b16 %v3585
      %v3832 = vunpack.c.l.b16 %v3586
      %v3833 = vunpack.c.l.b16 %v3587
      %v3834 = vunpack.c.l.b16 %v3588
      %v3835 = vunpack.c.l.b16 %v3589
      %v3836 = vunpack.c.l.b16 %v3590
      %v3837 = vunpack.c.l.b16 %v3591
      %v3838 = vunpack.c.l.b16 %v3592
      %v3839 = vunpack.c.l.b16 %v3593
      %v3840 = vunpack.c.l.b16 %v3594
      %v3841 = vunpack.c.l.b16 %v3595
      %v3842 = vunpack.c.l.b16 %v3596
      %v3843 = vunpack.c.l.b16 %v3597
      %v3844 = vunpack.c.l.b16 %v3598
      %v3845 = vunpack.c.l.b16 %v3599
      %v3846 = vunpack.c.l.b16 %v3600
      %v3847 = vunpack.c.l.b16 %v3601
      %v3848 = vunpack.c.l.b16 %v3602
      %v3849 = vunpack.c.l.b16 %v3603
      %v3850 = vunpack.c.l.b16 %v3604
      %v3851 = vunpack.c.l.b16 %v3605
      %v3852 = vunpack.c.l.b16 %v3606
      %v3853 = vunpack.c.l.b16 %v3607
      %v3854 = vunpack.c.l.b16 %v3608
      %v3855 = vunpack.c.l.b16 %v3609
      %v3856 = vunpack.c.l.b16 %v3610
      %v3857 = vunpack.c.l.b16 %v3611
      %v3858 = vunpack.c.l.b16 %v3612
      %v3859 = vunpack.c.l.b16 %v3613
      %v3860 = vunpack.c.l.b16 %v3614
      %v3861 = vpack.c.b16 %v3814, %v3813
      %v3862 = vpack.c.b16 %v3815, %v3815
      %v3863 = vpack.c.b16 %v3817, %v3816
      %v3864 = vpack.c.b16 %v3818, %v3818
      %v3865 = vpack.c.b16 %v3820, %v3819
      %v3866 = vpack.c.b16 %v3821, %v3821
      %v3867 = vpack.c.b16 %v3823, %v3822
      %v3868 = vpack.c.b16 %v3824, %v3824
      %v3869 = vpack.c.b16 %v3826, %v3825
      %v3870 = vpack.c.b16 %v3827, %v3827
      %v3871 = vpack.c.b16 %v3829, %v3828
      %v3872 = vpack.c.b16 %v3830, %v3830
      %v3873 = vpack.c.b16 %v3832, %v3831
      %v3874 = vpack.c.b16 %v3833, %v3833
      %v3875 = vpack.c.b16 %v3835, %v3834
      %v3876 = vpack.c.b16 %v3836, %v3836
      %v3877 = vpack.c.b16 %v3838, %v3837
      %v3878 = vpack.c.b16 %v3839, %v3839
      %v3879 = vpack.c.b16 %v3841, %v3840
      %v3880 = vpack.c.b16 %v3842, %v3842
      %v3881 = vpack.c.b16 %v3844, %v3843
      %v3882 = vpack.c.b16 %v3845, %v3845
      %v3883 = vpack.c.b16 %v3847, %v3846
      %v3884 = vpack.c.b16 %v3848, %v3848
      %v3885 = vpack.c.b16 %v3850, %v3849
      %v3886 = vpack.c.b16 %v3851, %v3851
      %v3887 = vpack.c.b16 %v3853, %v3852
      %v3888 = vpack.c.b16 %v3854, %v3854
      %v3889 = vpack.c.b16 %v3856, %v3855
      %v3890 = vpack.c.b16 %v3857, %v3857
      %v3891 = vpack.c.b16 %v3859, %v3858
      %v3892 = vpack.c.b16 %v3860, %v3860
      %v3912 = vunpack.c.l.b16 %v3615
      %v3913 = vunpack.c.l.b16 %v3616
      %v3914 = vunpack.c.l.b16 %v3617
      %v3915 = vpack.c.b16 %v3913, %v3912
      %v3916 = vpack.c.b16 %v3914, %v3914
      %v3921 = vunpack.c.l.b16 %v3618
      %v3922 = vunpack.c.l.b16 %v3619
      %v3923 = vunpack.c.l.b16 %v3620
      %v3924 = vpack.c.b16 %v3922, %v3921
      %v3925 = vpack.c.b16 %v3923, %v3923
      %v3928 = vshrl.u32 %v3861, 16
      %v3930 = vshll.u32 %v3861, 16
      %v3932 = vrot.slane %v3930, 1
      %v3933 = vor.u32 %v3928, %v3932
      %v3935 = vshll.u32 %v3862, 16
      %v3937 = vrot.slane %v3935, 1
      %v3938 = vsel %vm759, %v3933, %v3937
      %v3940 = vshrl.u32 %v3863, 16
      %v3942 = vshll.u32 %v3863, 16
      %v3944 = vrot.slane %v3942, 1
      %v3945 = vor.u32 %v3940, %v3944
      %v3947 = vshll.u32 %v3864, 16
      %v3949 = vrot.slane %v3947, 1
      %v3950 = vsel %vm759, %v3945, %v3949
      %v3952 = vshrl.u32 %v3865, 16
      %v3954 = vshll.u32 %v3865, 16
      %v3956 = vrot.slane %v3954, 1
      %v3957 = vor.u32 %v3952, %v3956
      %v3959 = vshll.u32 %v3866, 16
      %v3961 = vrot.slane %v3959, 1
      %v3962 = vsel %vm759, %v3957, %v3961
      %v3964 = vshrl.u32 %v3867, 16
      %v3966 = vshll.u32 %v3867, 16
      %v3968 = vrot.slane %v3966, 1
      %v3969 = vor.u32 %v3964, %v3968
      %v3971 = vshll.u32 %v3868, 16
      %v3973 = vrot.slane %v3971, 1
      %v3974 = vsel %vm759, %v3969, %v3973
      %v3976 = vshrl.u32 %v3869, 16
      %v3978 = vshll.u32 %v3869, 16
      %v3980 = vrot.slane %v3978, 1
      %v3981 = vor.u32 %v3976, %v3980
      %v3983 = vshll.u32 %v3870, 16
      %v3985 = vrot.slane %v3983, 1
      %v3986 = vsel %vm759, %v3981, %v3985
      %v3988 = vshrl.u32 %v3871, 16
      %v3990 = vshll.u32 %v3871, 16
      %v3992 = vrot.slane %v3990, 1
      %v3993 = vor.u32 %v3988, %v3992
      %v3995 = vshll.u32 %v3872, 16
      %v3997 = vrot.slane %v3995, 1
      %v3998 = vsel %vm759, %v3993, %v3997
      %v4000 = vshrl.u32 %v3873, 16
      %v4002 = vshll.u32 %v3873, 16
      %v4004 = vrot.slane %v4002, 1
      %v4005 = vor.u32 %v4000, %v4004
      %v4007 = vshll.u32 %v3874, 16
      %v4009 = vrot.slane %v4007, 1
      %v4010 = vsel %vm759, %v4005, %v4009
      %v4012 = vshrl.u32 %v3875, 16
      %v4014 = vshll.u32 %v3875, 16
      %v4016 = vrot.slane %v4014, 1
      %v4017 = vor.u32 %v4012, %v4016
      %v4019 = vshll.u32 %v3876, 16
      %v4021 = vrot.slane %v4019, 1
      %v4022 = vsel %vm759, %v4017, %v4021
      %v4024 = vshrl.u32 %v3877, 16
      %v4026 = vshll.u32 %v3877, 16
      %v4028 = vrot.slane %v4026, 1
      %v4029 = vor.u32 %v4024, %v4028
      %v4031 = vshll.u32 %v3878, 16
      %v4033 = vrot.slane %v4031, 1
      %v4034 = vsel %vm759, %v4029, %v4033
      %v4036 = vshrl.u32 %v3879, 16
      %v4038 = vshll.u32 %v3879, 16
      %v4040 = vrot.slane %v4038, 1
      %v4041 = vor.u32 %v4036, %v4040
      %v4043 = vshll.u32 %v3880, 16
      %v4045 = vrot.slane %v4043, 1
      %v4046 = vsel %vm759, %v4041, %v4045
      %v4048 = vshrl.u32 %v3881, 16
      %v4050 = vshll.u32 %v3881, 16
      %v4052 = vrot.slane %v4050, 1
      %v4053 = vor.u32 %v4048, %v4052
      %v4055 = vshll.u32 %v3882, 16
      %v4057 = vrot.slane %v4055, 1
      %v4058 = vsel %vm759, %v4053, %v4057
      %v4060 = vshrl.u32 %v3883, 16
      %v4062 = vshll.u32 %v3883, 16
      %v4064 = vrot.slane %v4062, 1
      %v4065 = vor.u32 %v4060, %v4064
      %v4067 = vshll.u32 %v3884, 16
      %v4069 = vrot.slane %v4067, 1
      %v4070 = vsel %vm759, %v4065, %v4069
      %v4072 = vshrl.u32 %v3885, 16
      %v4074 = vshll.u32 %v3885, 16
      %v4076 = vrot.slane %v4074, 1
      %v4077 = vor.u32 %v4072, %v4076
      %v4079 = vshll.u32 %v3886, 16
      %v4081 = vrot.slane %v4079, 1
      %v4082 = vsel %vm759, %v4077, %v4081
      %v4084 = vshrl.u32 %v3887, 16
      %v4086 = vshll.u32 %v3887, 16
      %v4088 = vrot.slane %v4086, 1
      %v4089 = vor.u32 %v4084, %v4088
      %v4091 = vshll.u32 %v3888, 16
      %v4093 = vrot.slane %v4091, 1
      %v4094 = vsel %vm759, %v4089, %v4093
      %v4096 = vshrl.u32 %v3889, 16
      %v4098 = vshll.u32 %v3889, 16
      %v4100 = vrot.slane %v4098, 1
      %v4101 = vor.u32 %v4096, %v4100
      %v4103 = vshll.u32 %v3890, 16
      %v4105 = vrot.slane %v4103, 1
      %v4106 = vsel %vm759, %v4101, %v4105
      %v4108 = vshrl.u32 %v3891, 16
      %v4110 = vshll.u32 %v3891, 16
      %v4112 = vrot.slane %v4110, 1
      %v4113 = vor.u32 %v4108, %v4112
      %v4115 = vshll.u32 %v3892, 16
      %v4117 = vrot.slane %v4115, 1
      %v4118 = vsel %vm759, %v4113, %v4117
      %v4120 = vshrl.u32 %v3915, 16
      %v4122 = vshll.u32 %v3915, 16
      %v4124 = vrot.slane %v4122, 1
      %v4125 = vor.u32 %v4120, %v4124
      %v4127 = vshll.u32 %v3916, 16
      %v4129 = vrot.slane %v4127, 1
      %v4130 = vsel %vm759, %v4125, %v4129
      %v4132 = vshrl.u32 %v3924, 16
      %v4134 = vshll.u32 %v3924, 16
      %v4136 = vrot.slane %v4134, 1
      %v4137 = vor.u32 %v4132, %v4136
      %v4139 = vshll.u32 %v3925, 16
      %v4141 = vrot.slane %v4139, 1
      %v4142 = vsel %vm759, %v4137, %v4141
      %v4209 = vunpack.c.l.b16 %v3669
      %v4210 = vunpack.c.l.b16 %v3670
      %v4211 = vunpack.c.l.b16 %v3671
      %v4212 = vunpack.c.l.b16 %v3672
      %v4213 = vunpack.c.l.b16 %v3673
      %v4214 = vunpack.c.l.b16 %v3674
      %v4215 = vunpack.c.l.b16 %v3675
      %v4216 = vunpack.c.l.b16 %v3676
      %v4217 = vunpack.c.l.b16 %v3677
      %v4218 = vunpack.c.l.b16 %v3678
      %v4219 = vunpack.c.l.b16 %v3679
      %v4220 = vunpack.c.l.b16 %v3680
      %v4221 = vunpack.c.l.b16 %v3681
      %v4222 = vunpack.c.l.b16 %v3682
      %v4223 = vunpack.c.l.b16 %v3683
      %v4224 = vunpack.c.l.b16 %v3684
      %v4225 = vunpack.c.l.b16 %v3685
      %v4226 = vunpack.c.l.b16 %v3686
      %v4227 = vunpack.c.l.b16 %v3687
      %v4228 = vunpack.c.l.b16 %v3688
      %v4229 = vunpack.c.l.b16 %v3689
      %v4230 = vunpack.c.l.b16 %v3690
      %v4231 = vunpack.c.l.b16 %v3691
      %v4232 = vunpack.c.l.b16 %v3692
      %v4233 = vunpack.c.l.b16 %v3693
      %v4234 = vunpack.c.l.b16 %v3694
      %v4235 = vunpack.c.l.b16 %v3695
      %v4236 = vunpack.c.l.b16 %v3696
      %v4237 = vunpack.c.l.b16 %v3697
      %v4238 = vunpack.c.l.b16 %v3698
      %v4239 = vunpack.c.l.b16 %v3699
      %v4240 = vunpack.c.l.b16 %v3700
      %v4241 = vunpack.c.l.b16 %v3701
      %v4242 = vunpack.c.l.b16 %v3702
      %v4243 = vunpack.c.l.b16 %v3703
      %v4244 = vunpack.c.l.b16 %v3704
      %v4245 = vunpack.c.l.b16 %v3705
      %v4246 = vunpack.c.l.b16 %v3706
      %v4247 = vunpack.c.l.b16 %v3707
      %v4248 = vunpack.c.l.b16 %v3708
      %v4249 = vunpack.c.l.b16 %v3709
      %v4250 = vunpack.c.l.b16 %v3710
      %v4251 = vunpack.c.l.b16 %v3711
      %v4252 = vunpack.c.l.b16 %v3712
      %v4253 = vunpack.c.l.b16 %v3713
      %v4254 = vunpack.c.l.b16 %v3714
      %v4255 = vunpack.c.l.b16 %v3715
      %v4256 = vunpack.c.l.b16 %v3716
      %v4257 = vpack.c.b16 %v4210, %v4209
      %v4258 = vpack.c.b16 %v4212, %v4211
      %v4259 = vpack.c.b16 %v4214, %v4213
      %v4260 = vpack.c.b16 %v4216, %v4215
      %v4261 = vpack.c.b16 %v4218, %v4217
      %v4262 = vpack.c.b16 %v4220, %v4219
      %v4263 = vpack.c.b16 %v4222, %v4221
      %v4264 = vpack.c.b16 %v4224, %v4223
      %v4265 = vpack.c.b16 %v4226, %v4225
      %v4266 = vpack.c.b16 %v4228, %v4227
      %v4267 = vpack.c.b16 %v4230, %v4229
      %v4268 = vpack.c.b16 %v4232, %v4231
      %v4269 = vpack.c.b16 %v4234, %v4233
      %v4270 = vpack.c.b16 %v4236, %v4235
      %v4271 = vpack.c.b16 %v4238, %v4237
      %v4272 = vpack.c.b16 %v4240, %v4239
      %v4273 = vpack.c.b16 %v4242, %v4241
      %v4274 = vpack.c.b16 %v4244, %v4243
      %v4275 = vpack.c.b16 %v4246, %v4245
      %v4276 = vpack.c.b16 %v4248, %v4247
      %v4277 = vpack.c.b16 %v4250, %v4249
      %v4278 = vpack.c.b16 %v4252, %v4251
      %v4279 = vpack.c.b16 %v4254, %v4253
      %v4280 = vpack.c.b16 %v4256, %v4255
      %4305 = vmatprep.subr.bf16.mxu0 0
      %4306 = vmatpush1.bf16.msra.mxu0 %v4257
      %4307 = vmatprep.subr.bf16.mxu0 0
      %4308 = vmatpush1.bf16.msra.mxu0 %v4258
      %4309 = vmatprep.subr.bf16.mxu0 0
      %4310 = vmatpush1.bf16.msra.mxu0 %v4259
      %4311 = vmatprep.subr.bf16.mxu0 0
      %4312 = vmatpush1.bf16.msra.mxu0 %v4260
      %4313 = vmatprep.subr.bf16.mxu0 0
      %4314 = vmatpush1.bf16.msra.mxu0 %v4261
      %4315 = vmatprep.subr.bf16.mxu0 0
      %4316 = vmatpush1.bf16.msra.mxu0 %v4262
      %4317 = vmatprep.subr.bf16.mxu0 0
      %4318 = vmatpush1.bf16.msra.mxu0 %v4263
      %4319 = vmatprep.subr.bf16.mxu0 0
      %4320 = vmatpush1.bf16.msra.mxu0 %v4264
      %4321 = vmatprep.subr.bf16.mxu0 0
      %4322 = vmatpush1.bf16.msra.mxu0 %v4265
      %4323 = vmatprep.subr.bf16.mxu0 0
      %4324 = vmatpush1.bf16.msra.mxu0 %v4266
      %4325 = vmatprep.subr.bf16.mxu0 0
      %4326 = vmatpush1.bf16.msra.mxu0 %v4267
      %4327 = vmatprep.subr.bf16.mxu0 0
      %4328 = vmatpush1.bf16.msra.mxu0 %v4268
      %4329 = vmatprep.subr.bf16.mxu0 0
      %4330 = vmatpush1.bf16.msra.mxu0 %v4269
      %4331 = vmatprep.subr.bf16.mxu0 0
      %4332 = vmatpush1.bf16.msra.mxu0 %v4270
      %4333 = vmatprep.subr.bf16.mxu0 0
      %4334 = vmatpush1.bf16.msra.mxu0 %v4271
      %4335 = vmatprep.subr.bf16.mxu0 0
      %4336 = vmatpush1.bf16.msra.mxu0 %v4272
      %4337 = vmatprep.mubr.bf16.mxu0 %v3950
      %4338 = vmatmul.mubr.bf16.gmra.mrb[0].mxu0 %v3938
      %v4339 = vpop.f32.mrb[0].mxu0
      %v4340 = vadd.f32 0.0, %v4339
      %v4341 = vpop.f32.mrb[0].mxu0
      %v4342 = vpop.f32.mrb[0].mxu0
      %v4343 = vadd.f32 0.0, %v4342
      %v4344 = vpop.f32.mrb[0].mxu0
      %4345 = vmatprep.mubr.bf16.mxu0 %v3962
      %4346 = vmatmul.mubr.bf16.gmra.mrb[0].mxu0 %v3950
      %v4347 = vpop.f32.mrb[0].mxu0
      %v4348 = vadd.f32 0.0, %v4347
      %v4349 = vpop.f32.mrb[0].mxu0
      %v4350 = vpop.f32.mrb[0].mxu0
      %v4351 = vadd.f32 0.0, %v4350
      %v4352 = vpop.f32.mrb[0].mxu0
      %4353 = vmatprep.mubr.bf16.mxu0 %v3974
      %4354 = vmatmul.mubr.bf16.gmra.mrb[0].mxu0 %v3962
      %v4355 = vpop.f32.mrb[0].mxu0
      %v4356 = vadd.f32 0.0, %v4355
      %v4357 = vpop.f32.mrb[0].mxu0
      %v4358 = vpop.f32.mrb[0].mxu0
      %v4359 = vadd.f32 0.0, %v4358
      %v4360 = vpop.f32.mrb[0].mxu0
      %4361 = vmatprep.mubr.bf16.mxu0 %v3986
      %4362 = vmatmul.mubr.bf16.gmra.mrb[0].mxu0 %v3974
      %v4363 = vpop.f32.mrb[0].mxu0
      %v4364 = vadd.f32 0.0, %v4363
      %v4365 = vpop.f32.mrb[0].mxu0
      %v4366 = vpop.f32.mrb[0].mxu0
      %v4367 = vadd.f32 0.0, %v4366
      %v4368 = vpop.f32.mrb[0].mxu0
      %4369 = vmatprep.mubr.bf16.mxu0 %v3998
      %4370 = vmatmul.mubr.bf16.gmra.mrb[0].mxu0 %v3986
      %v4371 = vpop.f32.mrb[0].mxu0
      %v4372 = vadd.f32 0.0, %v4371
      %v4373 = vpop.f32.mrb[0].mxu0
      %v4374 = vpop.f32.mrb[0].mxu0
      %v4375 = vadd.f32 0.0, %v4374
      %v4376 = vpop.f32.mrb[0].mxu0
      %4377 = vmatprep.mubr.bf16.mxu0 %v4010
      %4378 = vmatmul.mubr.bf16.gmra.mrb[0].mxu0 %v3998
      %v4379 = vpop.f32.mrb[0].mxu0
      %v4380 = vadd.f32 0.0, %v4379
      %v4381 = vpop.f32.mrb[0].mxu0
      %v4382 = vpop.f32.mrb[0].mxu0
      %v4383 = vadd.f32 0.0, %v4382
      %v4384 = vpop.f32.mrb[0].mxu0
      %4385 = vmatprep.mubr.bf16.mxu0 %v4022
      %4386 = vmatmul.mubr.bf16.gmra.mrb[0].mxu0 %v4010
      %v4387 = vpop.f32.mrb[0].mxu0
      %v4388 = vadd.f32 0.0, %v4387
      %v4389 = vpop.f32.mrb[0].mxu0
      %v4390 = vpop.f32.mrb[0].mxu0
      %v4391 = vadd.f32 0.0, %v4390
      %v4392 = vpop.f32.mrb[0].mxu0
      %4393 = vmatprep.mubr.bf16.mxu0 %v4034
      %4394 = vmatmul.mubr.bf16.gmra.mrb[0].mxu0 %v4022
      %v4395 = vpop.f32.mrb[0].mxu0
      %v4396 = vadd.f32 0.0, %v4395
      %v4397 = vpop.f32.mrb[0].mxu0
      %v4398 = vpop.f32.mrb[0].mxu0
      %v4399 = vadd.f32 0.0, %v4398
      %v4400 = vpop.f32.mrb[0].mxu0
      %4401 = vmatprep.mubr.bf16.mxu0 %v4046
      %4402 = vmatmul.mubr.bf16.gmra.mrb[0].mxu0 %v4034
      %v4403 = vpop.f32.mrb[0].mxu0
      %v4404 = vadd.f32 0.0, %v4403
      %v4405 = vpop.f32.mrb[0].mxu0
      %v4406 = vpop.f32.mrb[0].mxu0
      %v4407 = vadd.f32 0.0, %v4406
      %v4408 = vpop.f32.mrb[0].mxu0
      %4409 = vmatprep.mubr.bf16.mxu0 %v4058
      %4410 = vmatmul.mubr.bf16.gmra.mrb[0].mxu0 %v4046
      %v4411 = vpop.f32.mrb[0].mxu0
      %v4412 = vadd.f32 0.0, %v4411
      %v4413 = vpop.f32.mrb[0].mxu0
      %v4414 = vpop.f32.mrb[0].mxu0
      %v4415 = vadd.f32 0.0, %v4414
      %v4416 = vpop.f32.mrb[0].mxu0
      %4417 = vmatprep.mubr.bf16.mxu0 %v4070
      %4418 = vmatmul.mubr.bf16.gmra.mrb[0].mxu0 %v4058
      %v4419 = vpop.f32.mrb[0].mxu0
      %v4420 = vadd.f32 0.0, %v4419
      %v4421 = vpop.f32.mrb[0].mxu0
      %v4422 = vpop.f32.mrb[0].mxu0
      %v4423 = vadd.f32 0.0, %v4422
      %v4424 = vpop.f32.mrb[0].mxu0
      %4425 = vmatprep.mubr.bf16.mxu0 %v4082
      %4426 = vmatmul.mubr.bf16.gmra.mrb[0].mxu0 %v4070
      %v4427 = vpop.f32.mrb[0].mxu0
      %v4428 = vadd.f32 0.0, %v4427
      %v4429 = vpop.f32.mrb[0].mxu0
      %v4430 = vpop.f32.mrb[0].mxu0
      %v4431 = vadd.f32 0.0, %v4430
      %v4432 = vpop.f32.mrb[0].mxu0
      %4433 = vmatprep.mubr.bf16.mxu0 %v4094
      %4434 = vmatmul.mubr.bf16.gmra.mrb[0].mxu0 %v4082
      %v4435 = vpop.f32.mrb[0].mxu0
      %v4436 = vadd.f32 0.0, %v4435
      %v4437 = vpop.f32.mrb[0].mxu0
      %v4438 = vpop.f32.mrb[0].mxu0
      %v4439 = vadd.f32 0.0, %v4438
      %v4440 = vpop.f32.mrb[0].mxu0
      %4441 = vmatprep.mubr.bf16.mxu0 %v4106
      %4442 = vmatmul.mubr.bf16.gmra.mrb[0].mxu0 %v4094
      %v4443 = vpop.f32.mrb[0].mxu0
      %v4444 = vadd.f32 0.0, %v4443
      %v4445 = vpop.f32.mrb[0].mxu0
      %v4446 = vpop.f32.mrb[0].mxu0
      %v4447 = vadd.f32 0.0, %v4446
      %v4448 = vpop.f32.mrb[0].mxu0
      %4449 = vmatprep.mubr.bf16.mxu0 %v4118
      %4450 = vmatmul.mubr.bf16.gmra.mrb[0].mxu0 %v4106
      %v4451 = vpop.f32.mrb[0].mxu0
      %v4452 = vadd.f32 0.0, %v4451
      %v4453 = vpop.f32.mrb[0].mxu0
      %v4454 = vpop.f32.mrb[0].mxu0
      %v4455 = vadd.f32 0.0, %v4454
      %v4456 = vpop.f32.mrb[0].mxu0
      %4457 = vmatprep.mubr.bf16.mxu0 %v4130
      %4458 = vmatmul.mubr.bf16.gmra.mrb[0].mxu0 %v4118
      %v4459 = vpop.f32.mrb[0].mxu0
      %v4460 = vadd.f32 0.0, %v4459
      %v4461 = vpop.f32.mrb[0].mxu0
      %v4462 = vpop.f32.mrb[0].mxu0
      %v4463 = vadd.f32 0.0, %v4462
      %v4464 = vpop.f32.mrb[0].mxu0
      %4465 = vdwg.mxu0
      %4466 = vmatprep.subr.bf16.mxu0 0
      %4467 = vmatpush1.bf16.msra.mxu0 %v4273
      %4468 = vmatprep.subr.bf16.mxu0 0
      %4469 = vmatpush1.bf16.msra.mxu0 %v4274
      %4470 = vmatprep.subr.bf16.mxu0 0
      %4471 = vmatpush1.bf16.msra.mxu0 %v4275
      %4472 = vmatprep.subr.bf16.mxu0 0
      %4473 = vmatpush1.bf16.msra.mxu0 %v4276
      %4474 = vmatprep.subr.bf16.mxu0 0
      %4475 = vmatpush1.bf16.msra.mxu0 %v4277
      %4476 = vmatprep.subr.bf16.mxu0 0
      %4477 = vmatpush1.bf16.msra.mxu0 %v4278
      %4478 = vmatprep.subr.bf16.mxu0 0
      %4479 = vmatpush1.bf16.msra.mxu0 %v4279
      %4480 = vmatprep.subr.bf16.mxu0 0
      %4481 = vmatpush1.bf16.msra.mxu0 %v4280
      %4482 = vmatprep.subr.bf16.mxu0 0
      %4483 = vmatpush1.bf16.msra.mxu0 0
      %4484 = vmatprep.subr.bf16.mxu0 0
      %4485 = vmatpush1.bf16.msra.mxu0 0
      %4486 = vmatprep.subr.bf16.mxu0 0
      %4487 = vmatpush1.bf16.msra.mxu0 0
      %4488 = vmatprep.subr.bf16.mxu0 0
      %4489 = vmatpush1.bf16.msra.mxu0 0
      %4490 = vmatprep.subr.bf16.mxu0 0
      %4491 = vmatpush1.bf16.msra.mxu0 0
      %4492 = vmatprep.subr.bf16.mxu0 0
      %4493 = vmatpush1.bf16.msra.mxu0 0
      %4494 = vmatprep.subr.bf16.mxu0 0
      %4495 = vmatpush1.bf16.msra.mxu0 0
      %4496 = vmatprep.subr.bf16.mxu0 0
      %4497 = vmatpush1.bf16.msra.mxu0 0
      %4498 = vmatprep.mubr.bf16.mxu0 0
      %4499 = vmatmul.mubr.bf16.gmra.mrb[0].mxu0 %v3962
      %v4500 = vpop.f32.mrb[0].mxu0
      %v4501 = vadd.f32 %v4340, %v4500
      %v4502 = vpop.f32.mrb[0].mxu0
      %v4503 = vpop.f32.mrb[0].mxu0
      %v4504 = vadd.f32 %v4343, %v4503
      %v4505 = vpop.f32.mrb[0].mxu0
      %4506 = vmatprep.mubr.bf16.mxu0 0
      %4507 = vmatmul.mubr.bf16.gmra.mrb[0].mxu0 %v3974
      %v4508 = vpop.f32.mrb[0].mxu0
      %v4509 = vadd.f32 %v4348, %v4508
      %v4510 = vpop.f32.mrb[0].mxu0
      %v4511 = vpop.f32.mrb[0].mxu0
      %v4512 = vadd.f32 %v4351, %v4511
      %v4513 = vpop.f32.mrb[0].mxu0
      %4514 = vmatprep.mubr.bf16.mxu0 0
      %4515 = vmatmul.mubr.bf16.gmra.mrb[0].mxu0 %v3986
      %v4516 = vpop.f32.mrb[0].mxu0
      %v4517 = vadd.f32 %v4356, %v4516
      %v4518 = vpop.f32.mrb[0].mxu0
      %v4519 = vpop.f32.mrb[0].mxu0
      %v4520 = vadd.f32 %v4359, %v4519
      %v4521 = vpop.f32.mrb[0].mxu0
      %4522 = vmatprep.mubr.bf16.mxu0 0
      %4523 = vmatmul.mubr.bf16.gmra.mrb[0].mxu0 %v3998
      %v4524 = vpop.f32.mrb[0].mxu0
      %v4525 = vadd.f32 %v4364, %v4524
      %v4526 = vpop.f32.mrb[0].mxu0
      %v4527 = vpop.f32.mrb[0].mxu0
      %v4528 = vadd.f32 %v4367, %v4527
      %v4529 = vpop.f32.mrb[0].mxu0
      %4530 = vmatprep.mubr.bf16.mxu0 0
      %4531 = vmatmul.mubr.bf16.gmra.mrb[0].mxu0 %v4010
      %v4532 = vpop.f32.mrb[0].mxu0
      %v4533 = vadd.f32 %v4372, %v4532
      %v4534 = vpop.f32.mrb[0].mxu0
      %v4535 = vpop.f32.mrb[0].mxu0
      %v4536 = vadd.f32 %v4375, %v4535
      %v4537 = vpop.f32.mrb[0].mxu0
      %4538 = vmatprep.mubr.bf16.mxu0 0
      %4539 = vmatmul.mubr.bf16.gmra.mrb[0].mxu0 %v4022
      %v4540 = vpop.f32.mrb[0].mxu0
      %v4541 = vadd.f32 %v4380, %v4540
      %v4542 = vpop.f32.mrb[0].mxu0
      %v4543 = vpop.f32.mrb[0].mxu0
      %v4544 = vadd.f32 %v4383, %v4543
      %v4545 = vpop.f32.mrb[0].mxu0
      %4546 = vmatprep.mubr.bf16.mxu0 0
      %4547 = vmatmul.mubr.bf16.gmra.mrb[0].mxu0 %v4034
      %v4548 = vpop.f32.mrb[0].mxu0
      %v4549 = vadd.f32 %v4388, %v4548
      %v4550 = vpop.f32.mrb[0].mxu0
      %v4551 = vpop.f32.mrb[0].mxu0
      %v4552 = vadd.f32 %v4391, %v4551
      %v4553 = vpop.f32.mrb[0].mxu0
      %4554 = vmatprep.mubr.bf16.mxu0 0
      %4555 = vmatmul.mubr.bf16.gmra.mrb[0].mxu0 %v4046
      %v4556 = vpop.f32.mrb[0].mxu0
      %v4557 = vadd.f32 %v4396, %v4556
      %v4558 = vpop.f32.mrb[0].mxu0
      %v4559 = vpop.f32.mrb[0].mxu0
      %v4560 = vadd.f32 %v4399, %v4559
      %v4561 = vpop.f32.mrb[0].mxu0
      %4562 = vmatprep.mubr.bf16.mxu0 0
      %4563 = vmatmul.mubr.bf16.gmra.mrb[0].mxu0 %v4058
      %v4564 = vpop.f32.mrb[0].mxu0
      %v4565 = vadd.f32 %v4404, %v4564
      %v4566 = vpop.f32.mrb[0].mxu0
      %v4567 = vpop.f32.mrb[0].mxu0
      %v4568 = vadd.f32 %v4407, %v4567
      %v4569 = vpop.f32.mrb[0].mxu0
      %4570 = vmatprep.mubr.bf16.mxu0 0
      %4571 = vmatmul.mubr.bf16.gmra.mrb[0].mxu0 %v4070
      %v4572 = vpop.f32.mrb[0].mxu0
      %v4573 = vadd.f32 %v4412, %v4572
      %v4574 = vpop.f32.mrb[0].mxu0
      %v4575 = vpop.f32.mrb[0].mxu0
      %v4576 = vadd.f32 %v4415, %v4575
      %v4577 = vpop.f32.mrb[0].mxu0
      %4578 = vmatprep.mubr.bf16.mxu0 0
      %4579 = vmatmul.mubr.bf16.gmra.mrb[0].mxu0 %v4082
      %v4580 = vpop.f32.mrb[0].mxu0
      %v4581 = vadd.f32 %v4420, %v4580
      %v4582 = vpop.f32.mrb[0].mxu0
      %v4583 = vpop.f32.mrb[0].mxu0
      %v4584 = vadd.f32 %v4423, %v4583
      %v4585 = vpop.f32.mrb[0].mxu0
      %4586 = vmatprep.mubr.bf16.mxu0 0
      %4587 = vmatmul.mubr.bf16.gmra.mrb[0].mxu0 %v4094
      %v4588 = vpop.f32.mrb[0].mxu0
      %v4589 = vadd.f32 %v4428, %v4588
      %v4590 = vpop.f32.mrb[0].mxu0
      %v4591 = vpop.f32.mrb[0].mxu0
      %v4592 = vadd.f32 %v4431, %v4591
      %v4593 = vpop.f32.mrb[0].mxu0
      %4594 = vmatprep.mubr.bf16.mxu0 0
      %4595 = vmatmul.mubr.bf16.gmra.mrb[0].mxu0 %v4106
      %v4596 = vpop.f32.mrb[0].mxu0
      %v4597 = vadd.f32 %v4436, %v4596
      %v4598 = vpop.f32.mrb[0].mxu0
      %v4599 = vpop.f32.mrb[0].mxu0
      %v4600 = vadd.f32 %v4439, %v4599
      %v4601 = vpop.f32.mrb[0].mxu0
      %4602 = vmatprep.mubr.bf16.mxu0 0
      %4603 = vmatmul.mubr.bf16.gmra.mrb[0].mxu0 %v4118
      %v4604 = vpop.f32.mrb[0].mxu0
      %v4605 = vadd.f32 %v4444, %v4604
      %v4606 = vpop.f32.mrb[0].mxu0
      %v4607 = vpop.f32.mrb[0].mxu0
      %v4608 = vadd.f32 %v4447, %v4607
      %v4609 = vpop.f32.mrb[0].mxu0
      %4610 = vmatprep.mubr.bf16.mxu0 0
      %4611 = vmatmul.mubr.bf16.gmra.mrb[0].mxu0 %v4130
      %v4612 = vpop.f32.mrb[0].mxu0
      %v4613 = vadd.f32 %v4452, %v4612
      %v4614 = vpop.f32.mrb[0].mxu0
      %v4615 = vpop.f32.mrb[0].mxu0
      %v4616 = vadd.f32 %v4455, %v4615
      %v4617 = vpop.f32.mrb[0].mxu0
      %4618 = vmatprep.mubr.bf16.mxu0 0
      %4619 = vmatmul.mubr.bf16.gmra.mrb[0].mxu0 %v4142
      %v4620 = vpop.f32.mrb[0].mxu0
      %v4621 = vadd.f32 %v4460, %v4620
      %v4622 = vpop.f32.mrb[0].mxu0
      %v4623 = vpop.f32.mrb[0].mxu0
      %v4624 = vadd.f32 %v4463, %v4623
      %v4625 = vpop.f32.mrb[0].mxu0
      %4626 = vdwg.mxu0
      %v4675 = vunpack.c.l.b16 %v3621
      %v4676 = vunpack.c.l.b16 %v3622
      %v4677 = vunpack.c.l.b16 %v3623
      %v4678 = vunpack.c.l.b16 %v3624
      %v4679 = vunpack.c.l.b16 %v3625
      %v4680 = vunpack.c.l.b16 %v3626
      %v4681 = vunpack.c.l.b16 %v3627
      %v4682 = vunpack.c.l.b16 %v3628
      %v4683 = vunpack.c.l.b16 %v3629
      %v4684 = vunpack.c.l.b16 %v3630
      %v4685 = vunpack.c.l.b16 %v3631
      %v4686 = vunpack.c.l.b16 %v3632
      %v4687 = vunpack.c.l.b16 %v3633
      %v4688 = vunpack.c.l.b16 %v3634
      %v4689 = vunpack.c.l.b16 %v3635
      %v4690 = vunpack.c.l.b16 %v3636
      %v4691 = vunpack.c.l.b16 %v3637
      %v4692 = vunpack.c.l.b16 %v3638
      %v4693 = vunpack.c.l.b16 %v3639
      %v4694 = vunpack.c.l.b16 %v3640
      %v4695 = vunpack.c.l.b16 %v3641
      %v4696 = vunpack.c.l.b16 %v3642
      %v4697 = vunpack.c.l.b16 %v3643
      %v4698 = vunpack.c.l.b16 %v3644
      %v4699 = vunpack.c.l.b16 %v3645
      %v4700 = vunpack.c.l.b16 %v3646
      %v4701 = vunpack.c.l.b16 %v3647
      %v4702 = vunpack.c.l.b16 %v3648
      %v4703 = vunpack.c.l.b16 %v3649
      %v4704 = vunpack.c.l.b16 %v3650
      %v4705 = vunpack.c.l.b16 %v3651
      %v4706 = vunpack.c.l.b16 %v3652
      %v4707 = vunpack.c.l.b16 %v3653
      %v4708 = vunpack.c.l.b16 %v3654
      %v4709 = vunpack.c.l.b16 %v3655
      %v4710 = vunpack.c.l.b16 %v3656
      %v4711 = vunpack.c.l.b16 %v3657
      %v4712 = vunpack.c.l.b16 %v3658
      %v4713 = vunpack.c.l.b16 %v3659
      %v4714 = vunpack.c.l.b16 %v3660
      %v4715 = vunpack.c.l.b16 %v3661
      %v4716 = vunpack.c.l.b16 %v3662
      %v4717 = vunpack.c.l.b16 %v3663
      %v4718 = vunpack.c.l.b16 %v3664
      %v4719 = vunpack.c.l.b16 %v3665
      %v4720 = vunpack.c.l.b16 %v3666
      %v4721 = vunpack.c.l.b16 %v3667
      %v4722 = vunpack.c.l.b16 %v3668
      %v4723 = vpack.c.b16 %v4676, %v4675
      %v4724 = vpack.c.b16 %v4678, %v4677
      %v4725 = vpack.c.b16 %v4680, %v4679
      %v4726 = vpack.c.b16 %v4682, %v4681
      %v4727 = vpack.c.b16 %v4684, %v4683
      %v4728 = vpack.c.b16 %v4686, %v4685
      %v4729 = vpack.c.b16 %v4688, %v4687
      %v4730 = vpack.c.b16 %v4690, %v4689
      %v4731 = vpack.c.b16 %v4692, %v4691
      %v4732 = vpack.c.b16 %v4694, %v4693
      %v4733 = vpack.c.b16 %v4696, %v4695
      %v4734 = vpack.c.b16 %v4698, %v4697
      %v4735 = vpack.c.b16 %v4700, %v4699
      %v4736 = vpack.c.b16 %v4702, %v4701
      %v4737 = vpack.c.b16 %v4704, %v4703
      %v4738 = vpack.c.b16 %v4706, %v4705
      %v4739 = vpack.c.b16 %v4708, %v4707
      %v4740 = vpack.c.b16 %v4710, %v4709
      %v4741 = vpack.c.b16 %v4712, %v4711
      %v4742 = vpack.c.b16 %v4714, %v4713
      %v4743 = vpack.c.b16 %v4716, %v4715
      %v4744 = vpack.c.b16 %v4718, %v4717
      %v4745 = vpack.c.b16 %v4720, %v4719
      %v4746 = vpack.c.b16 %v4722, %v4721
      %4771 = vmatprep.subr.bf16.mxu0 0
      %4772 = vmatpush1.bf16.msra.mxu0 %v4723
      %4773 = vmatprep.subr.bf16.mxu0 0
      %4774 = vmatpush1.bf16.msra.mxu0 %v4724
      %4775 = vmatprep.subr.bf16.mxu0 0
      %4776 = vmatpush1.bf16.msra.mxu0 %v4725
      %4777 = vmatprep.subr.bf16.mxu0 0
      %4778 = vmatpush1.bf16.msra.mxu0 %v4726
      %4779 = vmatprep.subr.bf16.mxu0 0
      %4780 = vmatpush1.bf16.msra.mxu0 %v4727
      %4781 = vmatprep.subr.bf16.mxu0 0
      %4782 = vmatpush1.bf16.msra.mxu0 %v4728
      %4783 = vmatprep.subr.bf16.mxu0 0
      %4784 = vmatpush1.bf16.msra.mxu0 %v4729
      %4785 = vmatprep.subr.bf16.mxu0 0
      %4786 = vmatpush1.bf16.msra.mxu0 %v4730
      %4787 = vmatprep.subr.bf16.mxu0 0
      %4788 = vmatpush1.bf16.msra.mxu0 %v4731
      %4789 = vmatprep.subr.bf16.mxu0 0
      %4790 = vmatpush1.bf16.msra.mxu0 %v4732
      %4791 = vmatprep.subr.bf16.mxu0 0
      %4792 = vmatpush1.bf16.msra.mxu0 %v4733
      %4793 = vmatprep.subr.bf16.mxu0 0
      %4794 = vmatpush1.bf16.msra.mxu0 %v4734
      %4795 = vmatprep.subr.bf16.mxu0 0
      %4796 = vmatpush1.bf16.msra.mxu0 %v4735
      %4797 = vmatprep.subr.bf16.mxu0 0
      %4798 = vmatpush1.bf16.msra.mxu0 %v4736
      %4799 = vmatprep.subr.bf16.mxu0 0
      %4800 = vmatpush1.bf16.msra.mxu0 %v4737
      %4801 = vmatprep.subr.bf16.mxu0 0
      %4802 = vmatpush1.bf16.msra.mxu0 %v4738
      %4803 = vmatprep.mubr.bf16.mxu0 %v3863
      %4804 = vmatmul.mubr.bf16.gmra.mrb[0].mxu0 %v3861
      %v4805 = vpop.f32.mrb[0].mxu0
      %v4806 = vadd.f32 %v4501, %v4805
      %v4807 = vpop.f32.mrb[0].mxu0
      %v4808 = vpop.f32.mrb[0].mxu0
      %v4809 = vadd.f32 %v4504, %v4808
      %v4810 = vpop.f32.mrb[0].mxu0
      %4811 = vmatprep.mubr.bf16.mxu0 %v3865
      %4812 = vmatmul.mubr.bf16.gmra.mrb[0].mxu0 %v3863
      %v4813 = vpop.f32.mrb[0].mxu0
      %v4814 = vadd.f32 %v4509, %v4813
      %v4815 = vpop.f32.mrb[0].mxu0
      %v4816 = vpop.f32.mrb[0].mxu0
      %v4817 = vadd.f32 %v4512, %v4816
      %v4818 = vpop.f32.mrb[0].mxu0
      %4819 = vmatprep.mubr.bf16.mxu0 %v3867
      %4820 = vmatmul.mubr.bf16.gmra.mrb[0].mxu0 %v3865
      %v4821 = vpop.f32.mrb[0].mxu0
      %v4822 = vadd.f32 %v4517, %v4821
      %v4823 = vpop.f32.mrb[0].mxu0
      %v4824 = vpop.f32.mrb[0].mxu0
      %v4825 = vadd.f32 %v4520, %v4824
      %v4826 = vpop.f32.mrb[0].mxu0
      %4827 = vmatprep.mubr.bf16.mxu0 %v3869
      %4828 = vmatmul.mubr.bf16.gmra.mrb[0].mxu0 %v3867
      %v4829 = vpop.f32.mrb[0].mxu0
      %v4830 = vadd.f32 %v4525, %v4829
      %v4831 = vpop.f32.mrb[0].mxu0
      %v4832 = vpop.f32.mrb[0].mxu0
      %v4833 = vadd.f32 %v4528, %v4832
      %v4834 = vpop.f32.mrb[0].mxu0
      %4835 = vmatprep.mubr.bf16.mxu0 %v3871
      %4836 = vmatmul.mubr.bf16.gmra.mrb[0].mxu0 %v3869
      %v4837 = vpop.f32.mrb[0].mxu0
      %v4838 = vadd.f32 %v4533, %v4837
      %v4839 = vpop.f32.mrb[0].mxu0
      %v4840 = vpop.f32.mrb[0].mxu0
      %v4841 = vadd.f32 %v4536, %v4840
      %v4842 = vpop.f32.mrb[0].mxu0
      %4843 = vmatprep.mubr.bf16.mxu0 %v3873
      %4844 = vmatmul.mubr.bf16.gmra.mrb[0].mxu0 %v3871
      %v4845 = vpop.f32.mrb[0].mxu0
      %v4846 = vadd.f32 %v4541, %v4845
      %v4847 = vpop.f32.mrb[0].mxu0
      %v4848 = vpop.f32.mrb[0].mxu0
      %v4849 = vadd.f32 %v4544, %v4848
      %v4850 = vpop.f32.mrb[0].mxu0
      %4851 = vmatprep.mubr.bf16.mxu0 %v3875
      %4852 = vmatmul.mubr.bf16.gmra.mrb[0].mxu0 %v3873
      %v4853 = vpop.f32.mrb[0].mxu0
      %v4854 = vadd.f32 %v4549, %v4853
      %v4855 = vpop.f32.mrb[0].mxu0
      %v4856 = vpop.f32.mrb[0].mxu0
      %v4857 = vadd.f32 %v4552, %v4856
      %v4858 = vpop.f32.mrb[0].mxu0
      %4859 = vmatprep.mubr.bf16.mxu0 %v3877
      %4860 = vmatmul.mubr.bf16.gmra.mrb[0].mxu0 %v3875
      %v4861 = vpop.f32.mrb[0].mxu0
      %v4862 = vadd.f32 %v4557, %v4861
      %v4863 = vpop.f32.mrb[0].mxu0
      %v4864 = vpop.f32.mrb[0].mxu0
      %v4865 = vadd.f32 %v4560, %v4864
      %v4866 = vpop.f32.mrb[0].mxu0
      %4867 = vmatprep.mubr.bf16.mxu0 %v3879
      %4868 = vmatmul.mubr.bf16.gmra.mrb[0].mxu0 %v3877
      %v4869 = vpop.f32.mrb[0].mxu0
      %v4870 = vadd.f32 %v4565, %v4869
      %v4871 = vpop.f32.mrb[0].mxu0
      %v4872 = vpop.f32.mrb[0].mxu0
      %v4873 = vadd.f32 %v4568, %v4872
      %v4874 = vpop.f32.mrb[0].mxu0
      %4875 = vmatprep.mubr.bf16.mxu0 %v3881
      %4876 = vmatmul.mubr.bf16.gmra.mrb[0].mxu0 %v3879
      %v4877 = vpop.f32.mrb[0].mxu0
      %v4878 = vadd.f32 %v4573, %v4877
      %v4879 = vpop.f32.mrb[0].mxu0
      %v4880 = vpop.f32.mrb[0].mxu0
      %v4881 = vadd.f32 %v4576, %v4880
      %v4882 = vpop.f32.mrb[0].mxu0
      %4883 = vmatprep.mubr.bf16.mxu0 %v3883
      %4884 = vmatmul.mubr.bf16.gmra.mrb[0].mxu0 %v3881
      %v4885 = vpop.f32.mrb[0].mxu0
      %v4886 = vadd.f32 %v4581, %v4885
      %v4887 = vpop.f32.mrb[0].mxu0
      %v4888 = vpop.f32.mrb[0].mxu0
      %v4889 = vadd.f32 %v4584, %v4888
      %v4890 = vpop.f32.mrb[0].mxu0
      %4891 = vmatprep.mubr.bf16.mxu0 %v3885
      %4892 = vmatmul.mubr.bf16.gmra.mrb[0].mxu0 %v3883
      %v4893 = vpop.f32.mrb[0].mxu0
      %v4894 = vadd.f32 %v4589, %v4893
      %v4895 = vpop.f32.mrb[0].mxu0
      %v4896 = vpop.f32.mrb[0].mxu0
      %v4897 = vadd.f32 %v4592, %v4896
      %v4898 = vpop.f32.mrb[0].mxu0
      %4899 = vmatprep.mubr.bf16.mxu0 %v3887
      %4900 = vmatmul.mubr.bf16.gmra.mrb[0].mxu0 %v3885
      %v4901 = vpop.f32.mrb[0].mxu0
      %v4902 = vadd.f32 %v4597, %v4901
      %v4903 = vpop.f32.mrb[0].mxu0
      %v4904 = vpop.f32.mrb[0].mxu0
      %v4905 = vadd.f32 %v4600, %v4904
      %v4906 = vpop.f32.mrb[0].mxu0
      %4907 = vmatprep.mubr.bf16.mxu0 %v3889
      %4908 = vmatmul.mubr.bf16.gmra.mrb[0].mxu0 %v3887
      %v4909 = vpop.f32.mrb[0].mxu0
      %v4910 = vadd.f32 %v4605, %v4909
      %v4911 = vpop.f32.mrb[0].mxu0
      %v4912 = vpop.f32.mrb[0].mxu0
      %v4913 = vadd.f32 %v4608, %v4912
      %v4914 = vpop.f32.mrb[0].mxu0
      %4915 = vmatprep.mubr.bf16.mxu0 %v3891
      %4916 = vmatmul.mubr.bf16.gmra.mrb[0].mxu0 %v3889
      %v4917 = vpop.f32.mrb[0].mxu0
      %v4918 = vadd.f32 %v4613, %v4917
      %v4919 = vpop.f32.mrb[0].mxu0
      %v4920 = vpop.f32.mrb[0].mxu0
      %v4921 = vadd.f32 %v4616, %v4920
      %v4922 = vpop.f32.mrb[0].mxu0
      %4923 = vmatprep.mubr.bf16.mxu0 %v3915
      %4924 = vmatmul.mubr.bf16.gmra.mrb[0].mxu0 %v3891
      %v4925 = vpop.f32.mrb[0].mxu0
      %v4926 = vadd.f32 %v4621, %v4925
      %v4927 = vpop.f32.mrb[0].mxu0
      %v4928 = vpop.f32.mrb[0].mxu0
      %v4929 = vadd.f32 %v4624, %v4928
      %v4930 = vpop.f32.mrb[0].mxu0
      %4931 = vdwg.mxu0
      %4932 = vmatprep.subr.bf16.mxu0 0
      %4933 = vmatpush1.bf16.msra.mxu0 %v4739
      %4934 = vmatprep.subr.bf16.mxu0 0
      %4935 = vmatpush1.bf16.msra.mxu0 %v4740
      %4936 = vmatprep.subr.bf16.mxu0 0
      %4937 = vmatpush1.bf16.msra.mxu0 %v4741
      %4938 = vmatprep.subr.bf16.mxu0 0
      %4939 = vmatpush1.bf16.msra.mxu0 %v4742
      %4940 = vmatprep.subr.bf16.mxu0 0
      %4941 = vmatpush1.bf16.msra.mxu0 %v4743
      %4942 = vmatprep.subr.bf16.mxu0 0
      %4943 = vmatpush1.bf16.msra.mxu0 %v4744
      %4944 = vmatprep.subr.bf16.mxu0 0
      %4945 = vmatpush1.bf16.msra.mxu0 %v4745
      %4946 = vmatprep.subr.bf16.mxu0 0
      %4947 = vmatpush1.bf16.msra.mxu0 %v4746
      %4948 = vmatprep.subr.bf16.mxu0 0
      %4949 = vmatpush1.bf16.msra.mxu0 0
      %4950 = vmatprep.subr.bf16.mxu0 0
      %4951 = vmatpush1.bf16.msra.mxu0 0
      %4952 = vmatprep.subr.bf16.mxu0 0
      %4953 = vmatpush1.bf16.msra.mxu0 0
      %4954 = vmatprep.subr.bf16.mxu0 0
      %4955 = vmatpush1.bf16.msra.mxu0 0
      %4956 = vmatprep.subr.bf16.mxu0 0
      %4957 = vmatpush1.bf16.msra.mxu0 0
      %4958 = vmatprep.subr.bf16.mxu0 0
      %4959 = vmatpush1.bf16.msra.mxu0 0
      %4960 = vmatprep.subr.bf16.mxu0 0
      %4961 = vmatpush1.bf16.msra.mxu0 0
      %4962 = vmatprep.subr.bf16.mxu0 0
      %4963 = vmatpush1.bf16.msra.mxu0 0
      %4964 = vmatprep.mubr.bf16.mxu0 0
      %4965 = vmatmul.mubr.bf16.gmra.mrb[0].mxu0 %v3865
      %v4966 = vpop.f32.mrb[0].mxu0
      %v4967 = vadd.f32 %v4806, %v4966
      %v4968 = vpop.f32.mrb[0].mxu0
      %v4969 = vpop.f32.mrb[0].mxu0
      %v4970 = vadd.f32 %v4809, %v4969
      %v4971 = vpop.f32.mrb[0].mxu0
      %4972 = vmatprep.mubr.bf16.mxu0 0
      %4973 = vmatmul.mubr.bf16.gmra.mrb[0].mxu0 %v3867
      %v4974 = vpop.f32.mrb[0].mxu0
      %v4975 = vadd.f32 %v4814, %v4974
      %v4976 = vpop.f32.mrb[0].mxu0
      %v4977 = vpop.f32.mrb[0].mxu0
      %v4978 = vadd.f32 %v4817, %v4977
      %v4979 = vpop.f32.mrb[0].mxu0
      %4980 = vmatprep.mubr.bf16.mxu0 0
      %4981 = vmatmul.mubr.bf16.gmra.mrb[0].mxu0 %v3869
      %v4982 = vpop.f32.mrb[0].mxu0
      %v4983 = vadd.f32 %v4822, %v4982
      %v4984 = vpop.f32.mrb[0].mxu0
      %v4985 = vpop.f32.mrb[0].mxu0
      %v4986 = vadd.f32 %v4825, %v4985
      %v4987 = vpop.f32.mrb[0].mxu0
      %4988 = vmatprep.mubr.bf16.mxu0 0
      %4989 = vmatmul.mubr.bf16.gmra.mrb[0].mxu0 %v3871
      %v4990 = vpop.f32.mrb[0].mxu0
      %v4991 = vadd.f32 %v4830, %v4990
      %v4992 = vpop.f32.mrb[0].mxu0
      %v4993 = vpop.f32.mrb[0].mxu0
      %v4994 = vadd.f32 %v4833, %v4993
      %v4995 = vpop.f32.mrb[0].mxu0
      %4996 = vmatprep.mubr.bf16.mxu0 0
      %4997 = vmatmul.mubr.bf16.gmra.mrb[0].mxu0 %v3873
      %v4998 = vpop.f32.mrb[0].mxu0
      %v4999 = vadd.f32 %v4838, %v4998
      %v5000 = vpop.f32.mrb[0].mxu0
      %v5001 = vpop.f32.mrb[0].mxu0
      %v5002 = vadd.f32 %v4841, %v5001
      %v5003 = vpop.f32.mrb[0].mxu0
      %5004 = vmatprep.mubr.bf16.mxu0 0
      %5005 = vmatmul.mubr.bf16.gmra.mrb[0].mxu0 %v3875
      %v5006 = vpop.f32.mrb[0].mxu0
      %v5007 = vadd.f32 %v4846, %v5006
      %v5008 = vpop.f32.mrb[0].mxu0
      %v5009 = vpop.f32.mrb[0].mxu0
      %v5010 = vadd.f32 %v4849, %v5009
      %v5011 = vpop.f32.mrb[0].mxu0
      %5012 = vmatprep.mubr.bf16.mxu0 0
      %5013 = vmatmul.mubr.bf16.gmra.mrb[0].mxu0 %v3877
      %v5014 = vpop.f32.mrb[0].mxu0
      %v5015 = vadd.f32 %v4854, %v5014
      %v5016 = vpop.f32.mrb[0].mxu0
      %v5017 = vpop.f32.mrb[0].mxu0
      %v5018 = vadd.f32 %v4857, %v5017
      %v5019 = vpop.f32.mrb[0].mxu0
      %5020 = vmatprep.mubr.bf16.mxu0 0
      %5021 = vmatmul.mubr.bf16.gmra.mrb[0].mxu0 %v3879
      %v5022 = vpop.f32.mrb[0].mxu0
      %v5023 = vadd.f32 %v4862, %v5022
      %v5024 = vpop.f32.mrb[0].mxu0
      %v5025 = vpop.f32.mrb[0].mxu0
      %v5026 = vadd.f32 %v4865, %v5025
      %v5027 = vpop.f32.mrb[0].mxu0
      %5028 = vmatprep.mubr.bf16.mxu0 0
      %5029 = vmatmul.mubr.bf16.gmra.mrb[0].mxu0 %v3881
      %v5030 = vpop.f32.mrb[0].mxu0
      %v5031 = vadd.f32 %v4870, %v5030
      %v5032 = vpop.f32.mrb[0].mxu0
      %v5033 = vpop.f32.mrb[0].mxu0
      %v5034 = vadd.f32 %v4873, %v5033
      %v5035 = vpop.f32.mrb[0].mxu0
      %5036 = vmatprep.mubr.bf16.mxu0 0
      %5037 = vmatmul.mubr.bf16.gmra.mrb[0].mxu0 %v3883
      %v5038 = vpop.f32.mrb[0].mxu0
      %v5039 = vadd.f32 %v4878, %v5038
      %v5040 = vpop.f32.mrb[0].mxu0
      %v5041 = vpop.f32.mrb[0].mxu0
      %v5042 = vadd.f32 %v4881, %v5041
      %v5043 = vpop.f32.mrb[0].mxu0
      %5044 = vmatprep.mubr.bf16.mxu0 0
      %5045 = vmatmul.mubr.bf16.gmra.mrb[0].mxu0 %v3885
      %v5046 = vpop.f32.mrb[0].mxu0
      %v5047 = vadd.f32 %v4886, %v5046
      %v5048 = vpop.f32.mrb[0].mxu0
      %v5049 = vpop.f32.mrb[0].mxu0
      %v5050 = vadd.f32 %v4889, %v5049
      %v5051 = vpop.f32.mrb[0].mxu0
      %5052 = vmatprep.mubr.bf16.mxu0 0
      %5053 = vmatmul.mubr.bf16.gmra.mrb[0].mxu0 %v3887
      %v5054 = vpop.f32.mrb[0].mxu0
      %v5055 = vadd.f32 %v4894, %v5054
      %v5056 = vpop.f32.mrb[0].mxu0
      %v5057 = vpop.f32.mrb[0].mxu0
      %v5058 = vadd.f32 %v4897, %v5057
      %v5059 = vpop.f32.mrb[0].mxu0
      %5060 = vmatprep.mubr.bf16.mxu0 0
      %5061 = vmatmul.mubr.bf16.gmra.mrb[0].mxu0 %v3889
      %v5062 = vpop.f32.mrb[0].mxu0
      %v5063 = vadd.f32 %v4902, %v5062
      %v5064 = vpop.f32.mrb[0].mxu0
      %v5065 = vpop.f32.mrb[0].mxu0
      %v5066 = vadd.f32 %v4905, %v5065
      %v5067 = vpop.f32.mrb[0].mxu0
      %5068 = vmatprep.mubr.bf16.mxu0 0
      %5069 = vmatmul.mubr.bf16.gmra.mrb[0].mxu0 %v3891
      %v5070 = vpop.f32.mrb[0].mxu0
      %v5071 = vadd.f32 %v4910, %v5070
      %v5072 = vpop.f32.mrb[0].mxu0
      %v5073 = vpop.f32.mrb[0].mxu0
      %v5074 = vadd.f32 %v4913, %v5073
      %v5075 = vpop.f32.mrb[0].mxu0
      %5076 = vmatprep.mubr.bf16.mxu0 0
      %5077 = vmatmul.mubr.bf16.gmra.mrb[0].mxu0 %v3915
      %v5078 = vpop.f32.mrb[0].mxu0
      %v5079 = vadd.f32 %v4918, %v5078
      %v5080 = vpop.f32.mrb[0].mxu0
      %v5081 = vpop.f32.mrb[0].mxu0
      %v5082 = vadd.f32 %v4921, %v5081
      %v5083 = vpop.f32.mrb[0].mxu0
      %5084 = vmatprep.mubr.bf16.mxu0 0
      %5085 = vmatmul.mubr.bf16.gmra.mrb[0].mxu0 %v3924
      %v5086 = vpop.f32.mrb[0].mxu0
      %v5087 = vadd.f32 %v4926, %v5086
      %v5088 = vpop.f32.mrb[0].mxu0
      %v5089 = vpop.f32.mrb[0].mxu0
      %v5090 = vadd.f32 %v4929, %v5089
      %v5091 = vpop.f32.mrb[0].mxu0
      %5092 = vdwg.mxu0
      %v5093 = vrot.slane %v3861, 1
      %v5094 = vrot.slane %v3862, 1
      %v5095 = vsel %vm2016, %v5093, %v5094
      %v5096 = vrot.slane %v3863, 1
      %v5097 = vrot.slane %v3864, 1
      %v5098 = vsel %vm2016, %v5096, %v5097
      %v5099 = vrot.slane %v3865, 1
      %v5100 = vrot.slane %v3866, 1
      %v5101 = vsel %vm2016, %v5099, %v5100
      %v5102 = vrot.slane %v3867, 1
      %v5103 = vrot.slane %v3868, 1
      %v5104 = vsel %vm2016, %v5102, %v5103
      %v5105 = vrot.slane %v3869, 1
      %v5106 = vrot.slane %v3870, 1
      %v5107 = vsel %vm2016, %v5105, %v5106
      %v5108 = vrot.slane %v3871, 1
      %v5109 = vrot.slane %v3872, 1
      %v5110 = vsel %vm2016, %v5108, %v5109
      %v5111 = vrot.slane %v3873, 1
      %v5112 = vrot.slane %v3874, 1
      %v5113 = vsel %vm2016, %v5111, %v5112
      %v5114 = vrot.slane %v3875, 1
      %v5115 = vrot.slane %v3876, 1
      %v5116 = vsel %vm2016, %v5114, %v5115
      %v5117 = vrot.slane %v3877, 1
      %v5118 = vrot.slane %v3878, 1
      %v5119 = vsel %vm2016, %v5117, %v5118
      %v5120 = vrot.slane %v3879, 1
      %v5121 = vrot.slane %v3880, 1
      %v5122 = vsel %vm2016, %v5120, %v5121
      %v5123 = vrot.slane %v3881, 1
      %v5124 = vrot.slane %v3882, 1
      %v5125 = vsel %vm2016, %v5123, %v5124
      %v5126 = vrot.slane %v3883, 1
      %v5127 = vrot.slane %v3884, 1
      %v5128 = vsel %vm2016, %v5126, %v5127
      %v5129 = vrot.slane %v3885, 1
      %v5130 = vrot.slane %v3886, 1
      %v5131 = vsel %vm2016, %v5129, %v5130
      %v5132 = vrot.slane %v3887, 1
      %v5133 = vrot.slane %v3888, 1
      %v5134 = vsel %vm2016, %v5132, %v5133
      %v5135 = vrot.slane %v3889, 1
      %v5136 = vrot.slane %v3890, 1
      %v5137 = vsel %vm2016, %v5135, %v5136
      %v5138 = vrot.slane %v3891, 1
      %v5139 = vrot.slane %v3892, 1
      %v5140 = vsel %vm2016, %v5138, %v5139
      %v5141 = vrot.slane %v3915, 1
      %v5142 = vrot.slane %v3916, 1
      %v5143 = vsel %vm2016, %v5141, %v5142
      %v5144 = vrot.slane %v3924, 1
      %v5145 = vrot.slane %v3925, 1
      %v5146 = vsel %vm2016, %v5144, %v5145
      %v5213 = vunpack.c.l.b16 %v3717
      %v5214 = vunpack.c.l.b16 %v3718
      %v5215 = vunpack.c.l.b16 %v3719
      %v5216 = vunpack.c.l.b16 %v3720
      %v5217 = vunpack.c.l.b16 %v3721
      %v5218 = vunpack.c.l.b16 %v3722
      %v5219 = vunpack.c.l.b16 %v3723
      %v5220 = vunpack.c.l.b16 %v3724
      %v5221 = vunpack.c.l.b16 %v3725
      %v5222 = vunpack.c.l.b16 %v3726
      %v5223 = vunpack.c.l.b16 %v3727
      %v5224 = vunpack.c.l.b16 %v3728
      %v5225 = vunpack.c.l.b16 %v3729
      %v5226 = vunpack.c.l.b16 %v3730
      %v5227 = vunpack.c.l.b16 %v3731
      %v5228 = vunpack.c.l.b16 %v3732
      %v5229 = vunpack.c.l.b16 %v3733
      %v5230 = vunpack.c.l.b16 %v3734
      %v5231 = vunpack.c.l.b16 %v3735
      %v5232 = vunpack.c.l.b16 %v3736
      %v5233 = vunpack.c.l.b16 %v3737
      %v5234 = vunpack.c.l.b16 %v3738
      %v5235 = vunpack.c.l.b16 %v3739
      %v5236 = vunpack.c.l.b16 %v3740
      %v5237 = vunpack.c.l.b16 %v3741
      %v5238 = vunpack.c.l.b16 %v3742
      %v5239 = vunpack.c.l.b16 %v3743
      %v5240 = vunpack.c.l.b16 %v3744
      %v5241 = vunpack.c.l.b16 %v3745
      %v5242 = vunpack.c.l.b16 %v3746
      %v5243 = vunpack.c.l.b16 %v3747
      %v5244 = vunpack.c.l.b16 %v3748
      %v5245 = vunpack.c.l.b16 %v3749
      %v5246 = vunpack.c.l.b16 %v3750
      %v5247 = vunpack.c.l.b16 %v3751
      %v5248 = vunpack.c.l.b16 %v3752
      %v5249 = vunpack.c.l.b16 %v3753
      %v5250 = vunpack.c.l.b16 %v3754
      %v5251 = vunpack.c.l.b16 %v3755
      %v5252 = vunpack.c.l.b16 %v3756
      %v5253 = vunpack.c.l.b16 %v3757
      %v5254 = vunpack.c.l.b16 %v3758
      %v5255 = vunpack.c.l.b16 %v3759
      %v5256 = vunpack.c.l.b16 %v3760
      %v5257 = vunpack.c.l.b16 %v3761
      %v5258 = vunpack.c.l.b16 %v3762
      %v5259 = vunpack.c.l.b16 %v3763
      %v5260 = vunpack.c.l.b16 %v3764
      %v5261 = vpack.c.b16 %v5214, %v5213
      %v5262 = vpack.c.b16 %v5216, %v5215
      %v5263 = vpack.c.b16 %v5218, %v5217
      %v5264 = vpack.c.b16 %v5220, %v5219
      %v5265 = vpack.c.b16 %v5222, %v5221
      %v5266 = vpack.c.b16 %v5224, %v5223
      %v5267 = vpack.c.b16 %v5226, %v5225
      %v5268 = vpack.c.b16 %v5228, %v5227
      %v5269 = vpack.c.b16 %v5230, %v5229
      %v5270 = vpack.c.b16 %v5232, %v5231
      %v5271 = vpack.c.b16 %v5234, %v5233
      %v5272 = vpack.c.b16 %v5236, %v5235
      %v5273 = vpack.c.b16 %v5238, %v5237
      %v5274 = vpack.c.b16 %v5240, %v5239
      %v5275 = vpack.c.b16 %v5242, %v5241
      %v5276 = vpack.c.b16 %v5244, %v5243
      %v5277 = vpack.c.b16 %v5246, %v5245
      %v5278 = vpack.c.b16 %v5248, %v5247
      %v5279 = vpack.c.b16 %v5250, %v5249
      %v5280 = vpack.c.b16 %v5252, %v5251
      %v5281 = vpack.c.b16 %v5254, %v5253
      %v5282 = vpack.c.b16 %v5256, %v5255
      %v5283 = vpack.c.b16 %v5258, %v5257
      %v5284 = vpack.c.b16 %v5260, %v5259
      %5309 = vmatprep.subr.bf16.mxu0 0
      %5310 = vmatpush1.bf16.msra.mxu0 %v5261
      %5311 = vmatprep.subr.bf16.mxu0 0
      %5312 = vmatpush1.bf16.msra.mxu0 %v5262
      %5313 = vmatprep.subr.bf16.mxu0 0
      %5314 = vmatpush1.bf16.msra.mxu0 %v5263
      %5315 = vmatprep.subr.bf16.mxu0 0
      %5316 = vmatpush1.bf16.msra.mxu0 %v5264
      %5317 = vmatprep.subr.bf16.mxu0 0
      %5318 = vmatpush1.bf16.msra.mxu0 %v5265
      %5319 = vmatprep.subr.bf16.mxu0 0
      %5320 = vmatpush1.bf16.msra.mxu0 %v5266
      %5321 = vmatprep.subr.bf16.mxu0 0
      %5322 = vmatpush1.bf16.msra.mxu0 %v5267
      %5323 = vmatprep.subr.bf16.mxu0 0
      %5324 = vmatpush1.bf16.msra.mxu0 %v5268
      %5325 = vmatprep.subr.bf16.mxu0 0
      %5326 = vmatpush1.bf16.msra.mxu0 %v5269
      %5327 = vmatprep.subr.bf16.mxu0 0
      %5328 = vmatpush1.bf16.msra.mxu0 %v5270
      %5329 = vmatprep.subr.bf16.mxu0 0
      %5330 = vmatpush1.bf16.msra.mxu0 %v5271
      %5331 = vmatprep.subr.bf16.mxu0 0
      %5332 = vmatpush1.bf16.msra.mxu0 %v5272
      %5333 = vmatprep.subr.bf16.mxu0 0
      %5334 = vmatpush1.bf16.msra.mxu0 %v5273
      %5335 = vmatprep.subr.bf16.mxu0 0
      %5336 = vmatpush1.bf16.msra.mxu0 %v5274
      %5337 = vmatprep.subr.bf16.mxu0 0
      %5338 = vmatpush1.bf16.msra.mxu0 %v5275
      %5339 = vmatprep.subr.bf16.mxu0 0
      %5340 = vmatpush1.bf16.msra.mxu0 %v5276
      %5341 = vmatprep.mubr.bf16.mxu0 %v5098
      %5342 = vmatmul.mubr.bf16.gmra.mrb[0].mxu0 %v5095
      %v5343 = vpop.f32.mrb[0].mxu0
      %v5344 = vadd.f32 0.0, %v5343
      %v5345 = vpop.f32.mrb[0].mxu0
      %v5346 = vpop.f32.mrb[0].mxu0
      %v5347 = vadd.f32 0.0, %v5346
      %v5348 = vpop.f32.mrb[0].mxu0
      %5349 = vmatprep.mubr.bf16.mxu0 %v5101
      %5350 = vmatmul.mubr.bf16.gmra.mrb[0].mxu0 %v5098
      %v5351 = vpop.f32.mrb[0].mxu0
      %v5352 = vadd.f32 0.0, %v5351
      %v5353 = vpop.f32.mrb[0].mxu0
      %v5354 = vpop.f32.mrb[0].mxu0
      %v5355 = vadd.f32 0.0, %v5354
      %v5356 = vpop.f32.mrb[0].mxu0
      %5357 = vmatprep.mubr.bf16.mxu0 %v5104
      %5358 = vmatmul.mubr.bf16.gmra.mrb[0].mxu0 %v5101
      %v5359 = vpop.f32.mrb[0].mxu0
      %v5360 = vadd.f32 0.0, %v5359
      %v5361 = vpop.f32.mrb[0].mxu0
      %v5362 = vpop.f32.mrb[0].mxu0
      %v5363 = vadd.f32 0.0, %v5362
      %v5364 = vpop.f32.mrb[0].mxu0
      %5365 = vmatprep.mubr.bf16.mxu0 %v5107
      %5366 = vmatmul.mubr.bf16.gmra.mrb[0].mxu0 %v5104
      %v5367 = vpop.f32.mrb[0].mxu0
      %v5368 = vadd.f32 0.0, %v5367
      %v5369 = vpop.f32.mrb[0].mxu0
      %v5370 = vpop.f32.mrb[0].mxu0
      %v5371 = vadd.f32 0.0, %v5370
      %v5372 = vpop.f32.mrb[0].mxu0
      %5373 = vmatprep.mubr.bf16.mxu0 %v5110
      %5374 = vmatmul.mubr.bf16.gmra.mrb[0].mxu0 %v5107
      %v5375 = vpop.f32.mrb[0].mxu0
      %v5376 = vadd.f32 0.0, %v5375
      %v5377 = vpop.f32.mrb[0].mxu0
      %v5378 = vpop.f32.mrb[0].mxu0
      %v5379 = vadd.f32 0.0, %v5378
      %v5380 = vpop.f32.mrb[0].mxu0
      %5381 = vmatprep.mubr.bf16.mxu0 %v5113
      %5382 = vmatmul.mubr.bf16.gmra.mrb[0].mxu0 %v5110
      %v5383 = vpop.f32.mrb[0].mxu0
      %v5384 = vadd.f32 0.0, %v5383
      %v5385 = vpop.f32.mrb[0].mxu0
      %v5386 = vpop.f32.mrb[0].mxu0
      %v5387 = vadd.f32 0.0, %v5386
      %v5388 = vpop.f32.mrb[0].mxu0
      %5389 = vmatprep.mubr.bf16.mxu0 %v5116
      %5390 = vmatmul.mubr.bf16.gmra.mrb[0].mxu0 %v5113
      %v5391 = vpop.f32.mrb[0].mxu0
      %v5392 = vadd.f32 0.0, %v5391
      %v5393 = vpop.f32.mrb[0].mxu0
      %v5394 = vpop.f32.mrb[0].mxu0
      %v5395 = vadd.f32 0.0, %v5394
      %v5396 = vpop.f32.mrb[0].mxu0
      %5397 = vmatprep.mubr.bf16.mxu0 %v5119
      %5398 = vmatmul.mubr.bf16.gmra.mrb[0].mxu0 %v5116
      %v5399 = vpop.f32.mrb[0].mxu0
      %v5400 = vadd.f32 0.0, %v5399
      %v5401 = vpop.f32.mrb[0].mxu0
      %v5402 = vpop.f32.mrb[0].mxu0
      %v5403 = vadd.f32 0.0, %v5402
      %v5404 = vpop.f32.mrb[0].mxu0
      %5405 = vmatprep.mubr.bf16.mxu0 %v5122
      %5406 = vmatmul.mubr.bf16.gmra.mrb[0].mxu0 %v5119
      %v5407 = vpop.f32.mrb[0].mxu0
      %v5408 = vadd.f32 0.0, %v5407
      %v5409 = vpop.f32.mrb[0].mxu0
      %v5410 = vpop.f32.mrb[0].mxu0
      %v5411 = vadd.f32 0.0, %v5410
      %v5412 = vpop.f32.mrb[0].mxu0
      %5413 = vmatprep.mubr.bf16.mxu0 %v5125
      %5414 = vmatmul.mubr.bf16.gmra.mrb[0].mxu0 %v5122
      %v5415 = vpop.f32.mrb[0].mxu0
      %v5416 = vadd.f32 0.0, %v5415
      %v5417 = vpop.f32.mrb[0].mxu0
      %v5418 = vpop.f32.mrb[0].mxu0
      %v5419 = vadd.f32 0.0, %v5418
      %v5420 = vpop.f32.mrb[0].mxu0
      %5421 = vmatprep.mubr.bf16.mxu0 %v5128
      %5422 = vmatmul.mubr.bf16.gmra.mrb[0].mxu0 %v5125
      %v5423 = vpop.f32.mrb[0].mxu0
      %v5424 = vadd.f32 0.0, %v5423
      %v5425 = vpop.f32.mrb[0].mxu0
      %v5426 = vpop.f32.mrb[0].mxu0
      %v5427 = vadd.f32 0.0, %v5426
      %v5428 = vpop.f32.mrb[0].mxu0
      %5429 = vmatprep.mubr.bf16.mxu0 %v5131
      %5430 = vmatmul.mubr.bf16.gmra.mrb[0].mxu0 %v5128
      %v5431 = vpop.f32.mrb[0].mxu0
      %v5432 = vadd.f32 0.0, %v5431
      %v5433 = vpop.f32.mrb[0].mxu0
      %v5434 = vpop.f32.mrb[0].mxu0
      %v5435 = vadd.f32 0.0, %v5434
      %v5436 = vpop.f32.mrb[0].mxu0
      %5437 = vmatprep.mubr.bf16.mxu0 %v5134
      %5438 = vmatmul.mubr.bf16.gmra.mrb[0].mxu0 %v5131
      %v5439 = vpop.f32.mrb[0].mxu0
      %v5440 = vadd.f32 0.0, %v5439
      %v5441 = vpop.f32.mrb[0].mxu0
      %v5442 = vpop.f32.mrb[0].mxu0
      %v5443 = vadd.f32 0.0, %v5442
      %v5444 = vpop.f32.mrb[0].mxu0
      %5445 = vmatprep.mubr.bf16.mxu0 %v5137
      %5446 = vmatmul.mubr.bf16.gmra.mrb[0].mxu0 %v5134
      %v5447 = vpop.f32.mrb[0].mxu0
      %v5448 = vadd.f32 0.0, %v5447
      %v5449 = vpop.f32.mrb[0].mxu0
      %v5450 = vpop.f32.mrb[0].mxu0
      %v5451 = vadd.f32 0.0, %v5450
      %v5452 = vpop.f32.mrb[0].mxu0
      %5453 = vmatprep.mubr.bf16.mxu0 %v5140
      %5454 = vmatmul.mubr.bf16.gmra.mrb[0].mxu0 %v5137
      %v5455 = vpop.f32.mrb[0].mxu0
      %v5456 = vadd.f32 0.0, %v5455
      %v5457 = vpop.f32.mrb[0].mxu0
      %v5458 = vpop.f32.mrb[0].mxu0
      %v5459 = vadd.f32 0.0, %v5458
      %v5460 = vpop.f32.mrb[0].mxu0
      %5461 = vmatprep.mubr.bf16.mxu0 %v5143
      %5462 = vmatmul.mubr.bf16.gmra.mrb[0].mxu0 %v5140
      %v5463 = vpop.f32.mrb[0].mxu0
      %v5464 = vadd.f32 0.0, %v5463
      %v5465 = vpop.f32.mrb[0].mxu0
      %v5466 = vpop.f32.mrb[0].mxu0
      %v5467 = vadd.f32 0.0, %v5466
      %v5468 = vpop.f32.mrb[0].mxu0
      %5469 = vdwg.mxu0
      %5470 = vmatprep.subr.bf16.mxu0 0
      %5471 = vmatpush1.bf16.msra.mxu0 %v5277
      %5472 = vmatprep.subr.bf16.mxu0 0
      %5473 = vmatpush1.bf16.msra.mxu0 %v5278
      %5474 = vmatprep.subr.bf16.mxu0 0
      %5475 = vmatpush1.bf16.msra.mxu0 %v5279
      %5476 = vmatprep.subr.bf16.mxu0 0
      %5477 = vmatpush1.bf16.msra.mxu0 %v5280
      %5478 = vmatprep.subr.bf16.mxu0 0
      %5479 = vmatpush1.bf16.msra.mxu0 %v5281
      %5480 = vmatprep.subr.bf16.mxu0 0
      %5481 = vmatpush1.bf16.msra.mxu0 %v5282
      %5482 = vmatprep.subr.bf16.mxu0 0
      %5483 = vmatpush1.bf16.msra.mxu0 %v5283
      %5484 = vmatprep.subr.bf16.mxu0 0
      %5485 = vmatpush1.bf16.msra.mxu0 %v5284
      %5486 = vmatprep.subr.bf16.mxu0 0
      %5487 = vmatpush1.bf16.msra.mxu0 0
      %5488 = vmatprep.subr.bf16.mxu0 0
      %5489 = vmatpush1.bf16.msra.mxu0 0
      %5490 = vmatprep.subr.bf16.mxu0 0
      %5491 = vmatpush1.bf16.msra.mxu0 0
      %5492 = vmatprep.subr.bf16.mxu0 0
      %5493 = vmatpush1.bf16.msra.mxu0 0
      %5494 = vmatprep.subr.bf16.mxu0 0
      %5495 = vmatpush1.bf16.msra.mxu0 0
      %5496 = vmatprep.subr.bf16.mxu0 0
      %5497 = vmatpush1.bf16.msra.mxu0 0
      %5498 = vmatprep.subr.bf16.mxu0 0
      %5499 = vmatpush1.bf16.msra.mxu0 0
      %5500 = vmatprep.subr.bf16.mxu0 0
      %5501 = vmatpush1.bf16.msra.mxu0 0
      %5502 = vmatprep.mubr.bf16.mxu0 0
      %5503 = vmatmul.mubr.bf16.gmra.mrb[0].mxu0 %v5101
      %v5504 = vpop.f32.mrb[0].mxu0
      %v5505 = vadd.f32 %v5344, %v5504
      %v5506 = vpop.f32.mrb[0].mxu0
      %v5507 = vpop.f32.mrb[0].mxu0
      %v5508 = vadd.f32 %v5347, %v5507
      %v5509 = vpop.f32.mrb[0].mxu0
      %5510 = vmatprep.mubr.bf16.mxu0 0
      %5511 = vmatmul.mubr.bf16.gmra.mrb[0].mxu0 %v5104
      %v5512 = vpop.f32.mrb[0].mxu0
      %v5513 = vadd.f32 %v5352, %v5512
      %v5514 = vpop.f32.mrb[0].mxu0
      %v5515 = vpop.f32.mrb[0].mxu0
      %v5516 = vadd.f32 %v5355, %v5515
      %v5517 = vpop.f32.mrb[0].mxu0
      %5518 = vmatprep.mubr.bf16.mxu0 0
      %5519 = vmatmul.mubr.bf16.gmra.mrb[0].mxu0 %v5107
      %v5520 = vpop.f32.mrb[0].mxu0
      %v5521 = vadd.f32 %v5360, %v5520
      %v5522 = vpop.f32.mrb[0].mxu0
      %v5523 = vpop.f32.mrb[0].mxu0
      %v5524 = vadd.f32 %v5363, %v5523
      %v5525 = vpop.f32.mrb[0].mxu0
      %5526 = vmatprep.mubr.bf16.mxu0 0
      %5527 = vmatmul.mubr.bf16.gmra.mrb[0].mxu0 %v5110
      %v5528 = vpop.f32.mrb[0].mxu0
      %v5529 = vadd.f32 %v5368, %v5528
      %v5530 = vpop.f32.mrb[0].mxu0
      %v5531 = vpop.f32.mrb[0].mxu0
      %v5532 = vadd.f32 %v5371, %v5531
      %v5533 = vpop.f32.mrb[0].mxu0
      %5534 = vmatprep.mubr.bf16.mxu0 0
      %5535 = vmatmul.mubr.bf16.gmra.mrb[0].mxu0 %v5113
      %v5536 = vpop.f32.mrb[0].mxu0
      %v5537 = vadd.f32 %v5376, %v5536
      %v5538 = vpop.f32.mrb[0].mxu0
      %v5539 = vpop.f32.mrb[0].mxu0
      %v5540 = vadd.f32 %v5379, %v5539
      %v5541 = vpop.f32.mrb[0].mxu0
      %5542 = vmatprep.mubr.bf16.mxu0 0
      %5543 = vmatmul.mubr.bf16.gmra.mrb[0].mxu0 %v5116
      %v5544 = vpop.f32.mrb[0].mxu0
      %v5545 = vadd.f32 %v5384, %v5544
      %v5546 = vpop.f32.mrb[0].mxu0
      %v5547 = vpop.f32.mrb[0].mxu0
      %v5548 = vadd.f32 %v5387, %v5547
      %v5549 = vpop.f32.mrb[0].mxu0
      %5550 = vmatprep.mubr.bf16.mxu0 0
      %5551 = vmatmul.mubr.bf16.gmra.mrb[0].mxu0 %v5119
      %v5552 = vpop.f32.mrb[0].mxu0
      %v5553 = vadd.f32 %v5392, %v5552
      %v5554 = vpop.f32.mrb[0].mxu0
      %v5555 = vpop.f32.mrb[0].mxu0
      %v5556 = vadd.f32 %v5395, %v5555
      %v5557 = vpop.f32.mrb[0].mxu0
      %5558 = vmatprep.mubr.bf16.mxu0 0
      %5559 = vmatmul.mubr.bf16.gmra.mrb[0].mxu0 %v5122
      %v5560 = vpop.f32.mrb[0].mxu0
      %v5561 = vadd.f32 %v5400, %v5560
      %v5562 = vpop.f32.mrb[0].mxu0
      %v5563 = vpop.f32.mrb[0].mxu0
      %v5564 = vadd.f32 %v5403, %v5563
      %v5565 = vpop.f32.mrb[0].mxu0
      %5566 = vmatprep.mubr.bf16.mxu0 0
      %5567 = vmatmul.mubr.bf16.gmra.mrb[0].mxu0 %v5125
      %v5568 = vpop.f32.mrb[0].mxu0
      %v5569 = vadd.f32 %v5408, %v5568
      %v5570 = vpop.f32.mrb[0].mxu0
      %v5571 = vpop.f32.mrb[0].mxu0
      %v5572 = vadd.f32 %v5411, %v5571
      %v5573 = vpop.f32.mrb[0].mxu0
      %5574 = vmatprep.mubr.bf16.mxu0 0
      %5575 = vmatmul.mubr.bf16.gmra.mrb[0].mxu0 %v5128
      %v5576 = vpop.f32.mrb[0].mxu0
      %v5577 = vadd.f32 %v5416, %v5576
      %v5578 = vpop.f32.mrb[0].mxu0
      %v5579 = vpop.f32.mrb[0].mxu0
      %v5580 = vadd.f32 %v5419, %v5579
      %v5581 = vpop.f32.mrb[0].mxu0
      %5582 = vmatprep.mubr.bf16.mxu0 0
      %5583 = vmatmul.mubr.bf16.gmra.mrb[0].mxu0 %v5131
      %v5584 = vpop.f32.mrb[0].mxu0
      %v5585 = vadd.f32 %v5424, %v5584
      %v5586 = vpop.f32.mrb[0].mxu0
      %v5587 = vpop.f32.mrb[0].mxu0
      %v5588 = vadd.f32 %v5427, %v5587
      %v5589 = vpop.f32.mrb[0].mxu0
      %5590 = vmatprep.mubr.bf16.mxu0 0
      %5591 = vmatmul.mubr.bf16.gmra.mrb[0].mxu0 %v5134
      %v5592 = vpop.f32.mrb[0].mxu0
      %v5593 = vadd.f32 %v5432, %v5592
      %v5594 = vpop.f32.mrb[0].mxu0
      %v5595 = vpop.f32.mrb[0].mxu0
      %v5596 = vadd.f32 %v5435, %v5595
      %v5597 = vpop.f32.mrb[0].mxu0
      %5598 = vmatprep.mubr.bf16.mxu0 0
      %5599 = vmatmul.mubr.bf16.gmra.mrb[0].mxu0 %v5137
      %v5600 = vpop.f32.mrb[0].mxu0
      %v5601 = vadd.f32 %v5440, %v5600
      %v5602 = vpop.f32.mrb[0].mxu0
      %v5603 = vpop.f32.mrb[0].mxu0
      %v5604 = vadd.f32 %v5443, %v5603
      %v5605 = vpop.f32.mrb[0].mxu0
      %5606 = vmatprep.mubr.bf16.mxu0 0
      %5607 = vmatmul.mubr.bf16.gmra.mrb[0].mxu0 %v5140
      %v5608 = vpop.f32.mrb[0].mxu0
      %v5609 = vadd.f32 %v5448, %v5608
      %v5610 = vpop.f32.mrb[0].mxu0
      %v5611 = vpop.f32.mrb[0].mxu0
      %v5612 = vadd.f32 %v5451, %v5611
      %v5613 = vpop.f32.mrb[0].mxu0
      %5614 = vmatprep.mubr.bf16.mxu0 0
      %5615 = vmatmul.mubr.bf16.gmra.mrb[0].mxu0 %v5143
      %v5616 = vpop.f32.mrb[0].mxu0
      %v5617 = vadd.f32 %v5456, %v5616
      %v5618 = vpop.f32.mrb[0].mxu0
      %v5619 = vpop.f32.mrb[0].mxu0
      %v5620 = vadd.f32 %v5459, %v5619
      %v5621 = vpop.f32.mrb[0].mxu0
      %5622 = vmatprep.mubr.bf16.mxu0 0
      %5623 = vmatmul.mubr.bf16.gmra.mrb[0].mxu0 %v5146
      %v5624 = vpop.f32.mrb[0].mxu0
      %v5625 = vadd.f32 %v5464, %v5624
      %v5626 = vpop.f32.mrb[0].mxu0
      %v5627 = vpop.f32.mrb[0].mxu0
      %v5628 = vadd.f32 %v5467, %v5627
      %v5629 = vpop.f32.mrb[0].mxu0
      %5630 = vdwg.mxu0
      %v5631 = vadd.f32 %v4967, %v5505
      %v5632 = vadd.f32 %v4970, %v5508
      %v5633 = vadd.f32 %v4975, %v5513
      %v5634 = vadd.f32 %v4978, %v5516
      %v5635 = vadd.f32 %v4983, %v5521
      %v5636 = vadd.f32 %v4986, %v5524
      %v5637 = vadd.f32 %v4991, %v5529
      %v5638 = vadd.f32 %v4994, %v5532
      %v5639 = vadd.f32 %v4999, %v5537
      %v5640 = vadd.f32 %v5002, %v5540
      %v5641 = vadd.f32 %v5007, %v5545
      %v5642 = vadd.f32 %v5010, %v5548
      %v5643 = vadd.f32 %v5015, %v5553
      %v5644 = vadd.f32 %v5018, %v5556
      %v5645 = vadd.f32 %v5023, %v5561
      %v5646 = vadd.f32 %v5026, %v5564
      %v5647 = vadd.f32 %v5031, %v5569
      %v5648 = vadd.f32 %v5034, %v5572
      %v5649 = vadd.f32 %v5039, %v5577
      %v5650 = vadd.f32 %v5042, %v5580
      %v5651 = vadd.f32 %v5047, %v5585
      %v5652 = vadd.f32 %v5050, %v5588
      %v5653 = vadd.f32 %v5055, %v5593
      %v5654 = vadd.f32 %v5058, %v5596
      %v5655 = vadd.f32 %v5063, %v5601
      %v5656 = vadd.f32 %v5066, %v5604
      %v5657 = vadd.f32 %v5071, %v5609
      %v5658 = vadd.f32 %v5074, %v5612
      %v5659 = vadd.f32 %v5079, %v5617
      %v5660 = vadd.f32 %v5082, %v5620
      %v5661 = vadd.f32 %v5087, %v5625
      %v5662 = vadd.f32 %v5090, %v5628
      %v5663 = vld [vmem:[%s5] sm:$0x1]
      %v5665 = vlaneseq
      %v5666 = vshrl.u32 %v5665, 7
      %v5667 = vsub.s32 0, %v5666
      %v5668 = vrot.slane %v5663, %v5667
      %v5670 = vadd.f32 %v5631, %v5668
      %v5671 = vadd.f32 %v5632, %v5668
      %v5672 = vadd.f32 %v5633, %v5668
      %v5673 = vadd.f32 %v5634, %v5668
      %v5674 = vadd.f32 %v5635, %v5668
      %v5675 = vadd.f32 %v5636, %v5668
      %v5676 = vadd.f32 %v5637, %v5668
      %v5677 = vadd.f32 %v5638, %v5668
      %v5678 = vadd.f32 %v5639, %v5668
      %v5679 = vadd.f32 %v5640, %v5668
      %v5680 = vadd.f32 %v5641, %v5668
      %v5681 = vadd.f32 %v5642, %v5668
      %v5682 = vadd.f32 %v5643, %v5668
      %v5683 = vadd.f32 %v5644, %v5668
      %v5684 = vadd.f32 %v5645, %v5668
      %v5685 = vadd.f32 %v5646, %v5668
      %v5686 = vadd.f32 %v5647, %v5668
      %v5687 = vadd.f32 %v5648, %v5668
      %v5688 = vadd.f32 %v5649, %v5668
      %v5689 = vadd.f32 %v5650, %v5668
      %v5690 = vadd.f32 %v5651, %v5668
      %v5691 = vadd.f32 %v5652, %v5668
      %v5692 = vadd.f32 %v5653, %v5668
      %v5693 = vadd.f32 %v5654, %v5668
      %v5694 = vadd.f32 %v5655, %v5668
      %v5695 = vadd.f32 %v5656, %v5668
      %v5696 = vadd.f32 %v5657, %v5668
      %v5697 = vadd.f32 %v5658, %v5668
      %v5698 = vadd.f32 %v5659, %v5668
      %v5699 = vadd.f32 %v5660, %v5668
      %v5700 = vadd.f32 %v5661, %v5668
      %v5701 = vadd.f32 %v5662, %v5668
      %v5702 = vunpack.c.l.bf16 %v381
      %v5703 = vunpack.c.l.bf16 %v382
      %v5704 = vunpack.c.l.bf16 %v383
      %v5705 = vunpack.c.l.bf16 %v384
      %v5706 = vunpack.c.l.bf16 %v385
      %v5707 = vunpack.c.l.bf16 %v386
      %v5708 = vunpack.c.l.bf16 %v387
      %v5709 = vunpack.c.l.bf16 %v388
      %v5710 = vunpack.c.l.bf16 %v389
      %v5711 = vunpack.c.l.bf16 %v390
      %v5712 = vunpack.c.l.bf16 %v391
      %v5713 = vunpack.c.l.bf16 %v392
      %v5714 = vunpack.c.l.bf16 %v393
      %v5715 = vunpack.c.l.bf16 %v394
      %v5716 = vunpack.c.l.bf16 %v395
      %v5717 = vunpack.c.l.bf16 %v396
      %v5718 = vunpack.c.l.bf16 %v397
      %v5719 = vunpack.c.l.bf16 %v398
      %v5720 = vunpack.c.l.bf16 %v399
      %v5721 = vunpack.c.l.bf16 %v400
      %v5722 = vunpack.c.l.bf16 %v401
      %v5723 = vunpack.c.l.bf16 %v402
      %v5724 = vunpack.c.l.bf16 %v403
      %v5725 = vunpack.c.l.bf16 %v404
      %v5726 = vunpack.c.l.bf16 %v405
      %v5727 = vunpack.c.l.bf16 %v406
      %v5728 = vunpack.c.l.bf16 %v407
      %v5729 = vunpack.c.l.bf16 %v408
      %v5730 = vunpack.c.l.bf16 %v409
      %v5731 = vunpack.c.l.bf16 %v410
      %v5732 = vunpack.c.l.bf16 %v411
      %v5733 = vunpack.c.l.bf16 %v412
      %v5734 = vunpack.c.l.bf16 %v413
      %v5735 = vunpack.c.l.bf16 %v414
      %v5736 = vunpack.c.l.bf16 %v415
      %v5737 = vunpack.c.l.bf16 %v416
      %v5738 = vunpack.c.l.bf16 %v417
      %v5739 = vunpack.c.l.bf16 %v418
      %v5740 = vunpack.c.l.bf16 %v419
      %v5741 = vunpack.c.l.bf16 %v420
      %v5742 = vunpack.c.l.bf16 %v421
      %v5743 = vunpack.c.l.bf16 %v422
      %v5744 = vunpack.c.l.bf16 %v423
      %v5745 = vunpack.c.l.bf16 %v424
      %v5746 = vunpack.c.l.bf16 %v425
      %v5747 = vunpack.c.l.bf16 %v426
      %v5748 = vunpack.c.l.bf16 %v427
      %v5749 = vunpack.c.l.bf16 %v428
      %vm5798 = vcmask 1046528
      %v5799 = vrot.slane %v5702, 1
      %v5800 = vrot.slane %v5703, 1
      %v5801 = vsel %vm5798, %v5799, %v5800
      %v5802 = vrot.slane %v5704, 1
      %v5803 = vsel %vm5798, %v5800, %v5802
      %v5804 = vrot.slane %v5705, 1
      %v5805 = vrot.slane %v5706, 1
      %v5806 = vsel %vm5798, %v5804, %v5805
      %v5807 = vrot.slane %v5707, 1
      %v5808 = vsel %vm5798, %v5805, %v5807
      %v5809 = vrot.slane %v5708, 1
      %v5810 = vrot.slane %v5709, 1
      %v5811 = vsel %vm5798, %v5809, %v5810
      %v5812 = vrot.slane %v5710, 1
      %v5813 = vsel %vm5798, %v5810, %v5812
      %v5814 = vrot.slane %v5711, 1
      %v5815 = vrot.slane %v5712, 1
      %v5816 = vsel %vm5798, %v5814, %v5815
      %v5817 = vrot.slane %v5713, 1
      %v5818 = vsel %vm5798, %v5815, %v5817
      %v5819 = vrot.slane %v5714, 1
      %v5820 = vrot.slane %v5715, 1
      %v5821 = vsel %vm5798, %v5819, %v5820
      %v5822 = vrot.slane %v5716, 1
      %v5823 = vsel %vm5798, %v5820, %v5822
      %v5824 = vrot.slane %v5717, 1
      %v5825 = vrot.slane %v5718, 1
      %v5826 = vsel %vm5798, %v5824, %v5825
      %v5827 = vrot.slane %v5719, 1
      %v5828 = vsel %vm5798, %v5825, %v5827
      %v5829 = vrot.slane %v5720, 1
      %v5830 = vrot.slane %v5721, 1
      %v5831 = vsel %vm5798, %v5829, %v5830
      %v5832 = vrot.slane %v5722, 1
      %v5833 = vsel %vm5798, %v5830, %v5832
      %v5834 = vrot.slane %v5723, 1
      %v5835 = vrot.slane %v5724, 1
      %v5836 = vsel %vm5798, %v5834, %v5835
      %v5837 = vrot.slane %v5725, 1
      %v5838 = vsel %vm5798, %v5835, %v5837
      %v5839 = vrot.slane %v5726, 1
      %v5840 = vrot.slane %v5727, 1
      %v5841 = vsel %vm5798, %v5839, %v5840
      %v5842 = vrot.slane %v5728, 1
      %v5843 = vsel %vm5798, %v5840, %v5842
      %v5844 = vrot.slane %v5729, 1
      %v5845 = vrot.slane %v5730, 1
      %v5846 = vsel %vm5798, %v5844, %v5845
      %v5847 = vrot.slane %v5731, 1
      %v5848 = vsel %vm5798, %v5845, %v5847
      %v5849 = vrot.slane %v5732, 1
      %v5850 = vrot.slane %v5733, 1
      %v5851 = vsel %vm5798, %v5849, %v5850
      %v5852 = vrot.slane %v5734, 1
      %v5853 = vsel %vm5798, %v5850, %v5852
      %v5854 = vrot.slane %v5735, 1
      %v5855 = vrot.slane %v5736, 1
      %v5856 = vsel %vm5798, %v5854, %v5855
      %v5857 = vrot.slane %v5737, 1
      %v5858 = vsel %vm5798, %v5855, %v5857
      %v5859 = vrot.slane %v5738, 1
      %v5860 = vrot.slane %v5739, 1
      %v5861 = vsel %vm5798, %v5859, %v5860
      %v5862 = vrot.slane %v5740, 1
      %v5863 = vsel %vm5798, %v5860, %v5862
      %v5864 = vrot.slane %v5741, 1
      %v5865 = vrot.slane %v5742, 1
      %v5866 = vsel %vm5798, %v5864, %v5865
      %v5867 = vrot.slane %v5743, 1
      %v5868 = vsel %vm5798, %v5865, %v5867
      %v5869 = vrot.slane %v5744, 1
      %v5870 = vrot.slane %v5745, 1
      %v5871 = vsel %vm5798, %v5869, %v5870
      %v5872 = vrot.slane %v5746, 1
      %v5873 = vsel %vm5798, %v5870, %v5872
      %v5874 = vrot.slane %v5747, 1
      %v5875 = vrot.slane %v5748, 1
      %v5876 = vsel %vm5798, %v5874, %v5875
      %v5877 = vrot.slane %v5749, 1
      %v5878 = vsel %vm5798, %v5875, %v5877
      %v5911 = vadd.f32 %v5670, %v5801
      %v5912 = vadd.f32 %v5671, %v5803
      %v5913 = vadd.f32 %v5672, %v5806
      %v5914 = vadd.f32 %v5673, %v5808
      %v5915 = vadd.f32 %v5674, %v5811
      %v5916 = vadd.f32 %v5675, %v5813
      %v5917 = vadd.f32 %v5676, %v5816
      %v5918 = vadd.f32 %v5677, %v5818
      %v5919 = vadd.f32 %v5678, %v5821
      %v5920 = vadd.f32 %v5679, %v5823
      %v5921 = vadd.f32 %v5680, %v5826
      %v5922 = vadd.f32 %v5681, %v5828
      %v5923 = vadd.f32 %v5682, %v5831
      %v5924 = vadd.f32 %v5683, %v5833
      %v5925 = vadd.f32 %v5684, %v5836
      %v5926 = vadd.f32 %v5685, %v5838
      %v5927 = vadd.f32 %v5686, %v5841
      %v5928 = vadd.f32 %v5687, %v5843
      %v5929 = vadd.f32 %v5688, %v5846
      %v5930 = vadd.f32 %v5689, %v5848
      %v5931 = vadd.f32 %v5690, %v5851
      %v5932 = vadd.f32 %v5691, %v5853
      %v5933 = vadd.f32 %v5692, %v5856
      %v5934 = vadd.f32 %v5693, %v5858
      %v5935 = vadd.f32 %v5694, %v5861
      %v5936 = vadd.f32 %v5695, %v5863
      %v5937 = vadd.f32 %v5696, %v5866
      %v5938 = vadd.f32 %v5697, %v5868
      %v5939 = vadd.f32 %v5698, %v5871
      %v5940 = vadd.f32 %v5699, %v5873
      %v5941 = vadd.f32 %v5700, %v5876
      %v5942 = vadd.f32 %v5701, %v5878
      %v5943 = vmax.f32 %v5911, 0.0
      %v5944 = vmax.f32 %v5912, 0.0
      %v5945 = vmax.f32 %v5913, 0.0
      %v5946 = vmax.f32 %v5914, 0.0
      %v5947 = vmax.f32 %v5915, 0.0
      %v5948 = vmax.f32 %v5916, 0.0
      %v5949 = vmax.f32 %v5917, 0.0
      %v5950 = vmax.f32 %v5918, 0.0
      %v5951 = vmax.f32 %v5919, 0.0
      %v5952 = vmax.f32 %v5920, 0.0
      %v5953 = vmax.f32 %v5921, 0.0
      %v5954 = vmax.f32 %v5922, 0.0
      %v5955 = vmax.f32 %v5923, 0.0
      %v5956 = vmax.f32 %v5924, 0.0
      %v5957 = vmax.f32 %v5925, 0.0
      %v5958 = vmax.f32 %v5926, 0.0
      %v5959 = vmax.f32 %v5927, 0.0
      %v5960 = vmax.f32 %v5928, 0.0
      %v5961 = vmax.f32 %v5929, 0.0
      %v5962 = vmax.f32 %v5930, 0.0
      %v5963 = vmax.f32 %v5931, 0.0
      %v5964 = vmax.f32 %v5932, 0.0
      %v5965 = vmax.f32 %v5933, 0.0
      %v5966 = vmax.f32 %v5934, 0.0
      %v5967 = vmax.f32 %v5935, 0.0
      %v5968 = vmax.f32 %v5936, 0.0
      %v5969 = vmax.f32 %v5937, 0.0
      %v5970 = vmax.f32 %v5938, 0.0
      %v5971 = vmax.f32 %v5939, 0.0
      %v5972 = vmax.f32 %v5940, 0.0
      %v5973 = vmax.f32 %v5941, 0.0
      %v5974 = vmax.f32 %v5942, 0.0
      %5975 = vst [vmem:[%s372] sm:$0xff] %v5943
      %5976 = vst [vmem:[%s372 + $0x8] sm:$0xff] %v5944
      %5977 = vst [vmem:[%s372 + $0x10] sm:$0xff] %v5945
      %5978 = vst [vmem:[%s372 + $0x18] sm:$0xff] %v5946
      %5979 = vst [vmem:[%s372 + $0x20] sm:$0xff] %v5947
      %5980 = vst [vmem:[%s372 + $0x28] sm:$0xff] %v5948
      %5981 = vst [vmem:[%s372 + $0x30] sm:$0xff] %v5949
      %5982 = vst [vmem:[%s372 + $0x38] sm:$0xff] %v5950
      %5983 = vst [vmem:[%s372 + $0x40] sm:$0xff] %v5951
      %5984 = vst [vmem:[%s372 + $0x48] sm:$0xff] %v5952
      %5985 = vst [vmem:[%s372 + $0x50] sm:$0xff] %v5953
      %5986 = vst [vmem:[%s372 + $0x58] sm:$0xff] %v5954
      %5987 = vst [vmem:[%s372 + $0x60] sm:$0xff] %v5955
      %5988 = vst [vmem:[%s372 + $0x68] sm:$0xff] %v5956
      %5989 = vst [vmem:[%s372 + $0x70] sm:$0xff] %v5957
      %5990 = vst [vmem:[%s372 + $0x78] sm:$0xff] %v5958
      %5991 = vst [vmem:[%s372 + $0x80] sm:$0xff] %v5959
      %5992 = vst [vmem:[%s372 + $0x88] sm:$0xff] %v5960
      %5993 = vst [vmem:[%s372 + $0x90] sm:$0xff] %v5961
      %5994 = vst [vmem:[%s372 + $0x98] sm:$0xff] %v5962
      %5995 = vst [vmem:[%s372 + $0xa0] sm:$0xff] %v5963
      %5996 = vst [vmem:[%s372 + $0xa8] sm:$0xff] %v5964
      %5997 = vst [vmem:[%s372 + $0xb0] sm:$0xff] %v5965
      %5998 = vst [vmem:[%s372 + $0xb8] sm:$0xff] %v5966
      %5999 = vst [vmem:[%s372 + $0xc0] sm:$0xff] %v5967
      %6000 = vst [vmem:[%s372 + $0xc8] sm:$0xff] %v5968
      %6001 = vst [vmem:[%s372 + $0xd0] sm:$0xff] %v5969
      %6002 = vst [vmem:[%s372 + $0xd8] sm:$0xff] %v5970
      %6003 = vst [vmem:[%s372 + $0xe0] sm:$0xff] %v5971
      %6004 = vst [vmem:[%s372 + $0xe8] sm:$0xff] %v5972
      %6005 = vst [vmem:[%s372 + $0xf0] sm:$0xff] %v5973
      %6006 = vst [vmem:[%s372 + $0xf8] sm:$0xff] %v5974
      %s6007 = smul.u32 16, %s22
      %p6008 = scmp.lt.s32.totalorder %s21, 1
      %s6009 = scalar_select %p6008, %s21, 1
      %p6010 = scmp.lt.s32.totalorder %s6007, 15
      %s6011 = scalar_select %p6010, %s6007, 15
      %s6012 = smul.addr %s6011, 2
      %s6013 = smul.addr %s6009, 32
      %s6014 = sadd.s32 %s6012, %s6013
      %s6015 = smul.addr %s6014, 8
      %s6016 = scalar_lea.vmem %s6, %s6015
      // Predicated region
      $region45: #{resblock_forward.1} parent=43 // pred_check
        %p6017 = pneg %p193
      $region46: #{resblock_forward.1} parent=43 // pred_check_branch
        %6019 = sbr.rel (%p6017) target = $region48
      $region47: #{resblock_forward.1} parent=43 // pred_region
        %s6020 = smul.u32 16, %s22
      $region48: #{resblock_forward.1} parent=43 // pred_fallthru
        _
    $region44: #{resblock_forward.1} parent=5 // pred_fallthru
      _
    %p6021 = scmp.le.s32.totalorder 2, %s12
    // Predicated region
    $region49: #{resblock_forward.1} parent=5 // pred_check
      %p6022 = pneg %p6021
    $region50: #{resblock_forward.1} parent=5 // pred_check_branch
      %6024 = sbr.rel (%p6022) target = $region52
    $region51: #{resblock_forward.1} parent=5 // pred_region
      %s6025 = ssub.s32 %s12, 2
      // Predicated region
      $region53: #{resblock_forward.1} parent=51 // pred_check
        %p6026 = pneg %p199
      $region54: #{resblock_forward.1} parent=51 // pred_check_branch
        %6028 = sbr.rel (%p6026) target = $region56
      $region55: #{resblock_forward.1} parent=51 // pred_region
        %s6029 = smul.u32 16, %s24
        %p6030 = scmp.lt.s32.totalorder %s23, 1
        %s6031 = scalar_select %p6030, %s23, 1
        %p6032 = scmp.lt.s32.totalorder %s6029, 15
        %s6033 = scalar_select %p6032, %s6029, 15
        %s6034 = smul.addr %s6033, 2
        %s6035 = smul.addr %s6031, 32
        %s6036 = sadd.s32 %s6034, %s6035
        %s6037 = smul.addr %s6036, 8
        %s6038 = scalar_lea.vmem %s6, %s6037
      $region56: #{resblock_forward.1} parent=51 // pred_fallthru
        _
    $region52: #{resblock_forward.1} parent=5 // pred_fallthru
      _
  $region6: #{resblock_forward.1} parent=0 // loop_footer
    %s16 = sadd.s32 1, %s12
  $region7: #{resblock_forward.1} parent=0 // loop_footer_branch
    %11 = sbr.rel target = $region3
  $region8: #{resblock_forward.1} parent=0 // loop_exit
    _

</llo_original>
